<compile_context>
chip_gen: v5e
topology: v5e:2x2
jax: 0.10.0
libtpu: 0.0.40
codegen_flags: <defaults>
</compile_context>

<pallas_src>
import functools

import jax
import jax.numpy as jnp
from jax import lax
from jax.experimental import pallas as pl
from jax.experimental.pallas import tpu as pltpu

N_EMBD = 384
N_HEAD = 6
HIDDEN = 4 * N_EMBD
DROPOUT_P = 0.2
LN_EPS = 1e-5

DROP_THRESHOLD = int(DROPOUT_P * (1 << 32))          # uint32 threshold (integer-domain compare)
DROP_SCALE = 1.0 / (1.0 - DROPOUT_P)                 # inverted-dropout scaling

# Scoped-VMEM budget: double-buffered (T,C) block + bf16 weights + (T,T) score /
# (T,4C) hidden intermediates + dropout-bit blocks, with slack.  Below v7x's
# 64 MiB physical VMEM, above the 16/32 MiB defaults.
VMEM_LIMIT_BYTES = 48 * 1024 * 1024

_CPARAMS = pltpu.CompilerParams(
    dimension_semantics=("parallel",),               # batch axis is embarrassingly parallel
    vmem_limit_bytes=VMEM_LIMIT_BYTES,
)


def _layernorm(x, gamma, beta):
    mu = jnp.mean(x, axis=-1, keepdims=True)
    xc = x - mu
    var = jnp.mean(xc * xc, axis=-1, keepdims=True)
    return xc * lax.rsqrt(var + LN_EPS) * gamma + beta


def _dropout(y, bits):
    keep = bits >= jnp.uint32(DROP_THRESHOLD)        # integer compare, no int->float convert
    return jnp.where(keep, y * DROP_SCALE, 0.0)


# ----------------------------------------------------------------------------
# Fused Block kernel: one batch element per grid step.
# ----------------------------------------------------------------------------
def block_kernel(*refs, n_head, training, mxu_bf16):
    if training:
        (x_ref, g1_ref, b1_ref, wqkv_ref, wo_ref, bo_ref,
         g2_ref, b2_ref, w1_ref, bh_ref, w2_ref, bp_ref,
         abits_ref, pbits_ref, fbits_ref, o_ref) = refs
    else:
        (x_ref, g1_ref, b1_ref, wqkv_ref, wo_ref, bo_ref,
         g2_ref, b2_ref, w1_ref, bh_ref, w2_ref, bp_ref, o_ref) = refs
        abits_ref = pbits_ref = fbits_ref = None

    x = x_ref[0]                                     # (T, C) f32
    T, C = x.shape
    d = C // n_head
    cdt = jnp.bfloat16 if mxu_bf16 else jnp.float32  # MXU operand dtype (f32 accumulate)

    # ---- ln1 -> fused Q/K/V projection (single (T,C)x(C,3C) matmul) ----
    ln1 = _layernorm(x, g1_ref[...], b1_ref[...])
    qkv = jnp.dot(ln1.astype(cdt), wqkv_ref[...],
                  preferred_element_type=jnp.float32)          # (T, 3C) f32
    q, k, v = qkv[:, :C], qkv[:, C:2 * C], qkv[:, 2 * C:]

    scale = C ** (-0.5)                              # spec scales by n_embd**-0.5 (not head_size)
    row = lax.broadcasted_iota(jnp.int32, (T, T), 0)
    col = lax.broadcasted_iota(jnp.int32, (T, T), 1)
    causal = col <= row

    head_outs = []
    for h in range(n_head):                          # static, small head count
        sl = slice(h * d, (h + 1) * d)
        qh = q[:, sl].astype(cdt)
        kh = k[:, sl].astype(cdt)
        vh = v[:, sl].astype(cdt)
        s = lax.dot_general(qh, kh, (((1,), (1,)), ((), ())),
                            preferred_element_type=jnp.float32) * scale
        s = jnp.where(causal, s, -jnp.inf)
        m = jnp.max(s, axis=-1, keepdims=True)
        e = jnp.exp(s - m)
        den = jnp.sum(e, axis=-1, keepdims=True)
        if mxu_bf16:
            p = e * pl.reciprocal(den, approx=True)  # EUP slot — effectively free
        else:
            p = e / den                              # exact path for validation
        if training:
            p = _dropout(p, abits_ref[0, h])
        head_outs.append(jnp.dot(p.astype(cdt), vh,
                                 preferred_element_type=jnp.float32))

    att = jnp.concatenate(head_outs, axis=-1)        # (T, C)
    y = jnp.dot(att.astype(cdt), wo_ref[...],
                preferred_element_type=jnp.float32) + bo_ref[...]
    if training:
        y = _dropout(y, pbits_ref[0])
    x1 = x + y                                       # residual 1 (stays in VMEM/vregs)

    # ---- ln2 -> Linear -> ReLU -> Linear -> Dropout -> residual ----
    ln2 = _layernorm(x1, g2_ref[...], b2_ref[...])
    hdn = jnp.dot(ln2.astype(cdt), w1_ref[...],
                  preferred_element_type=jnp.float32) + bh_ref[...]
    hdn = jnp.maximum(hdn, 0.0)                      # ReLU in f32
    y2 = jnp.dot(hdn.astype(cdt), w2_ref[...],
                 preferred_element_type=jnp.float32) + bp_ref[...]
    if training:
        y2 = _dropout(y2, fbits_ref[0])

    o_ref[0] = (x1 + y2).astype(o_ref.dtype)         # residual 2


# ----------------------------------------------------------------------------
# Wrapper
# ----------------------------------------------------------------------------
@functools.partial(jax.jit, static_argnames=("training", "mxu_bf16"))
def block_forward(x, params, drop_key=None, *, training=False, mxu_bf16=True):
    """x: (B, T, C) f32.  Returns (B, T, C)."""
    B, T, C = x.shape
    nh = N_HEAD
    H4 = params["w1"].shape[1]
    assert C == N_EMBD and C % nh == 0

    f32 = jnp.float32
    wdt = jnp.bfloat16 if mxu_bf16 else jnp.float32  # matmul-operand weight dtype

    ln1_g = params["ln1_g"].reshape(1, C).astype(f32)
    ln1_b = params["ln1_b"].reshape(1, C).astype(f32)
    ln2_g = params["ln2_g"].reshape(1, C).astype(f32)
    ln2_b = params["ln2_b"].reshape(1, C).astype(f32)
    bo = params["bo"].reshape(1, C).astype(f32)
    b1 = params["b1"].reshape(1, H4).astype(f32)
    b2 = params["b2"].reshape(1, C).astype(f32)

    # Fused QKV weight: columns [0:C]=Q, [C:2C]=K, [2C:3C]=V (per-head column blocks inside).
    wqkv = jnp.concatenate([params["wq"], params["wk"], params["wv"]],
                           axis=1).astype(wdt)       # (C, 3C)
    wo = params["wo"].astype(wdt)
    w1 = params["w1"].astype(wdt)
    w2 = params["w2"].astype(wdt)

    const2 = lambda b: (0, 0)
    inputs = [x, ln1_g, ln1_b, wqkv, wo, bo, ln2_g, ln2_b, w1, b1, w2, b2]
    specs = [
        pl.BlockSpec((1, T, C), lambda b: (b, 0, 0)),
        pl.BlockSpec((1, C), const2), pl.BlockSpec((1, C), const2),
        pl.BlockSpec((C, 3 * C), const2),
        pl.BlockSpec((C, C), const2), pl.BlockSpec((1, C), const2),
        pl.BlockSpec((1, C), const2), pl.BlockSpec((1, C), const2),
        pl.BlockSpec((C, H4), const2), pl.BlockSpec((1, H4), const2),
        pl.BlockSpec((H4, C), const2), pl.BlockSpec((1, C), const2),
    ]

    # Dropout bits (precomputed with jax.random; grid-order independent).
    if training:
        ka, kp_, kf = jax.random.split(drop_key, 3)
        abits = jax.random.bits(ka, shape=(B, nh, T, T), dtype=jnp.uint32)
        pbits = jax.random.bits(kp_, shape=(B, T, C), dtype=jnp.uint32)
        fbits = jax.random.bits(kf, shape=(B, T, C), dtype=jnp.uint32)
        inputs += [abits, pbits, fbits]
        specs += [pl.BlockSpec((1, nh, T, T), lambda b: (b, 0, 0, 0)),
                  pl.BlockSpec((1, T, C), lambda b: (b, 0, 0)),
                  pl.BlockSpec((1, T, C), lambda b: (b, 0, 0))]

    w_bytes = sum(int(w.size) * w.dtype.itemsize for w in (wqkv, wo, w1, w2))
    cost = pl.CostEstimate(
        flops=int(B * (24 * T * C * C + 4 * T * T * C)),
        transcendentals=int(B * nh * T * T),
        bytes_accessed=int(2 * B * T * C * 4 + w_bytes
                           + (B * (nh * T * T + 2 * T * C) * 4 if training else 0)),
    )

    # TODO(synk): for sequences much longer than block_size, tile K/V flash-style
    # instead of holding the whole (T, T) score matrix per head in VMEM.
    return pl.pallas_call(
        functools.partial(block_kernel, n_head=nh, training=training,
                          mxu_bf16=mxu_bf16),
        out_shape=jax.ShapeDtypeStruct((B, T, C), x.dtype),
        grid=(B,),
        in_specs=specs,
        out_specs=pl.BlockSpec((1, T, C), lambda b: (b, 0, 0)),
        compiler_params=_CPARAMS,
        cost_estimate=cost,
    )(*inputs)


# ----------------------------------------------------------------------------
# Params (nn.Linear-style init: U(-1/sqrt(fan_in), 1/sqrt(fan_in)); LN = (1, 0))
# ----------------------------------------------------------------------------
def init_block_params(key, n_embd=N_EMBD):
    h4 = 4 * n_embd
    ks = jax.random.split(key, 9)
    bc = 1.0 / (n_embd ** 0.5)
    bh = 1.0 / (h4 ** 0.5)
    u = lambda k, shape, b: jax.random.uniform(k, shape, jnp.float32, -b, b)
    return dict(
        ln1_g=jnp.ones((n_embd,), jnp.float32), ln1_b=jnp.zeros((n_embd,), jnp.float32),
        # combined per-head Q/K/V projections (columns h*d:(h+1)*d == head h), no bias
        wq=u(ks[0], (n_embd, n_embd), bc), wk=u(ks[1], (n_embd, n_embd), bc),
        wv=u(ks[2], (n_embd, n_embd), bc),
        wo=u(ks[3], (n_embd, n_embd), bc), bo=u(ks[4], (n_embd,), bc),
        ln2_g=jnp.ones((n_embd,), jnp.float32), ln2_b=jnp.zeros((n_embd,), jnp.float32),
        w1=u(ks[5], (n_embd, h4), bc), b1=u(ks[6], (h4,), bc),
        w2=u(ks[7], (h4, n_embd), bh), b2=u(ks[8], (n_embd,), bh),
    )


# Pure-JAX reference (eval mode) for a sanity check of the kernel math.
def block_reference(x, params):
    B, T, C = x.shape
    nh, d = N_HEAD, C // N_HEAD

    def ln(z, g, b):
        mu = z.mean(-1, keepdims=True)
        var = ((z - mu) ** 2).mean(-1, keepdims=True)
        return (z - mu) / jnp.sqrt(var + LN_EPS) * g + b

    h1 = ln(x, params["ln1_g"], params["ln1_b"])
    q = (h1 @ params["wq"]).reshape(B, T, nh, d).transpose(0, 2, 1, 3)
    k = (h1 @ params["wk"]).reshape(B, T, nh, d).transpose(0, 2, 1, 3)
    v = (h1 @ params["wv"]).reshape(B, T, nh, d).transpose(0, 2, 1, 3)
    s = jnp.einsum("bhqd,bhkd->bhqk", q, k) * (C ** -0.5)
    s = jnp.where(jnp.tril(jnp.ones((T, T), bool)), s, -jnp.inf)
    p = jax.nn.softmax(s, axis=-1)
    att = jnp.einsum("bhqk,bhkd->bhqd", p, v).transpose(0, 2, 1, 3).reshape(B, T, C)
    x1 = x + att @ params["wo"] + params["bo"]
    h2 = ln(x1, params["ln2_g"], params["ln2_b"])
    y = jnp.maximum(h2 @ params["w1"] + params["b1"], 0.0) @ params["w2"] + params["b2"]
    return x1 + y


if __name__ == "__main__":
    key = jax.random.PRNGKey(0)
    kx, kp, kd = jax.random.split(key, 3)

    B, T = 2, 8
    x = jax.random.normal(kx, (B, T, N_EMBD), dtype=jnp.float32)
    params = init_block_params(kp)

    # 1) eval mode, f32 matmuls: validate against the pure-JAX reference.
    y_f32 = jax.block_until_ready(block_forward(x, params, training=False, mxu_bf16=False))
    y_ref = block_reference(x, params)
    assert y_f32.shape == (B, T, N_EMBD) and y_f32.dtype == jnp.float32
    assert bool(jnp.all(jnp.isfinite(y_f32)))
    assert bool(jnp.allclose(y_f32, y_ref, rtol=2e-2, atol=2e-2))

    # 2) eval mode, bf16 MXU operands (performance default).
    y_bf16 = jax.block_until_ready(block_forward(x, params, training=False, mxu_bf16=True))
    assert bool(jnp.all(jnp.isfinite(y_bf16)))

    # 3) training mode: dropout active (inverted scaling), bits from jax.random.
    y_trn = jax.block_until_ready(block_forward(x, params, kd, training=True, mxu_bf16=True))
    assert y_trn.shape == (B, T, N_EMBD)
    assert bool(jnp.all(jnp.isfinite(y_trn)))

    print("KERNEL_OK")
</pallas_src>

<mosaic_0001>
module attributes {stable_mosaic.version = 11 : i64} {
  func.func @block_kernel(%arg0: i32, %arg1: memref<1x8x384xf32, #tpu.memory_space<vmem>>, %arg2: memref<1x384xf32, #tpu.memory_space<vmem>>, %arg3: memref<1x384xf32, #tpu.memory_space<vmem>>, %arg4: memref<384x1152xf32, #tpu.memory_space<vmem>>, %arg5: memref<384x384xf32, #tpu.memory_space<vmem>>, %arg6: memref<1x384xf32, #tpu.memory_space<vmem>>, %arg7: memref<1x384xf32, #tpu.memory_space<vmem>>, %arg8: memref<1x384xf32, #tpu.memory_space<vmem>>, %arg9: memref<384x1536xf32, #tpu.memory_space<vmem>>, %arg10: memref<1x1536xf32, #tpu.memory_space<vmem>>, %arg11: memref<1536x384xf32, #tpu.memory_space<vmem>>, %arg12: memref<1x384xf32, #tpu.memory_space<vmem>>, %arg13: memref<1x8x384xf32, #tpu.memory_space<vmem>>) attributes {dimension_semantics = [#tpu.dimension_semantics<parallel>], iteration_bounds = array<i64: 2>, scalar_prefetch = 0 : i64, scratch_operands = 0 : i64, tpu.core_type = #tpu.core_type<tc>, window_params = [{transform_indices = @transform_0, window_bounds = array<i64: 1, 8, 384>}, {pipeline_mode = #tpu.pipeline_mode<synchronous>, transform_indices = @transform_1, window_bounds = array<i64: 1, 384>}, {pipeline_mode = #tpu.pipeline_mode<synchronous>, transform_indices = @transform_2, window_bounds = array<i64: 1, 384>}, {pipeline_mode = #tpu.pipeline_mode<synchronous>, transform_indices = @transform_3, window_bounds = array<i64: 384, 1152>}, {pipeline_mode = #tpu.pipeline_mode<synchronous>, transform_indices = @transform_4, window_bounds = array<i64: 384, 384>}, {pipeline_mode = #tpu.pipeline_mode<synchronous>, transform_indices = @transform_5, window_bounds = array<i64: 1, 384>}, {pipeline_mode = #tpu.pipeline_mode<synchronous>, transform_indices = @transform_6, window_bounds = array<i64: 1, 384>}, {pipeline_mode = #tpu.pipeline_mode<synchronous>, transform_indices = @transform_7, window_bounds = array<i64: 1, 384>}, {pipeline_mode = #tpu.pipeline_mode<synchronous>, transform_indices = @transform_8, window_bounds = array<i64: 384, 1536>}, {pipeline_mode = #tpu.pipeline_mode<synchronous>, transform_indices = @transform_9, window_bounds = array<i64: 1, 1536>}, {pipeline_mode = #tpu.pipeline_mode<synchronous>, transform_indices = @transform_10, window_bounds = array<i64: 1536, 384>}, {pipeline_mode = #tpu.pipeline_mode<synchronous>, transform_indices = @transform_11, window_bounds = array<i64: 1, 384>}, {transform_indices = @transform_12, window_bounds = array<i64: 1, 8, 384>}]} {
    %c0 = arith.constant 0 : index
    %c0_0 = arith.constant 0 : index
    %c0_1 = arith.constant 0 : index
    %0 = vector.load %arg1[%c0, %c0_0, %c0_1] : memref<1x8x384xf32, #tpu.memory_space<vmem>>, vector<1x8x384xf32>
    %1 = vector.shape_cast %0 : vector<1x8x384xf32> to vector<8x384xf32>
    %c0_2 = arith.constant 0 : index
    %c0_3 = arith.constant 0 : index
    %2 = vector.load %arg2[%c0_2, %c0_3] : memref<1x384xf32, #tpu.memory_space<vmem>>, vector<1x384xf32>
    %c0_4 = arith.constant 0 : index
    %c0_5 = arith.constant 0 : index
    %3 = vector.load %arg3[%c0_4, %c0_5] : memref<1x384xf32, #tpu.memory_space<vmem>>, vector<1x384xf32>
    %cst = arith.constant dense<0.000000e+00> : vector<8xf32>
    %4 = vector.multi_reduction <add>, %1, %cst [1] : vector<8x384xf32> to vector<8xf32>
    %5 = vector.shape_cast %4 : vector<8xf32> to vector<8x1xf32>
    %cst_6 = arith.constant 3.840000e+02 : f32
    %6 = vector.broadcast %cst_6 : f32 to vector<8x1xf32>
    %7 = arith.divf %5, %6 : vector<8x1xf32>
    %8 = vector.broadcast %7 : vector<8x1xf32> to vector<8x384xf32>
    %9 = arith.subf %1, %8 : vector<8x384xf32>
    %10 = arith.mulf %9, %9 : vector<8x384xf32>
    %cst_7 = arith.constant dense<0.000000e+00> : vector<8xf32>
    %11 = vector.multi_reduction <add>, %10, %cst_7 [1] : vector<8x384xf32> to vector<8xf32>
    %12 = vector.shape_cast %11 : vector<8xf32> to vector<8x1xf32>
    %cst_8 = arith.constant 3.840000e+02 : f32
    %13 = vector.broadcast %cst_8 : f32 to vector<8x1xf32>
    %14 = arith.divf %12, %13 : vector<8x1xf32>
    %cst_9 = arith.constant 9.99999974E-6 : f32
    %15 = vector.broadcast %cst_9 : f32 to vector<8x1xf32>
    %16 = arith.addf %14, %15 : vector<8x1xf32>
    %17 = math.rsqrt %16 : vector<8x1xf32>
    %18 = vector.broadcast %17 : vector<8x1xf32> to vector<8x384xf32>
    %19 = arith.mulf %9, %18 : vector<8x384xf32>
    %20 = vector.broadcast %2 : vector<1x384xf32> to vector<8x384xf32>
    %21 = arith.mulf %19, %20 : vector<8x384xf32>
    %22 = vector.broadcast %3 : vector<1x384xf32> to vector<8x384xf32>
    %23 = arith.addf %21, %22 : vector<8x384xf32>
    %c0_10 = arith.constant 0 : index
    %c0_11 = arith.constant 0 : index
    %24 = vector.load %arg4[%c0_10, %c0_11] : memref<384x1152xf32, #tpu.memory_space<vmem>>, vector<384x1152xf32>
    %cst_12 = arith.constant dense<0.000000e+00> : vector<8x1152xf32>
    %25 = tpu.matmul %23, %24, %cst_12 {dimension_numbers = #tpu.dot_dimension_numbers<[1], [0], [0], [1], [0, 0, 1, 1], [], []>} : vector<8x384xf32>, vector<384x1152xf32>, vector<8x1152xf32> -> vector<8x1152xf32>
    %26 = vector.extract_strided_slice %25 {offsets = [0, 0], sizes = [8, 384], strides = [1, 1]} : vector<8x1152xf32> to vector<8x384xf32>
    %27 = vector.extract_strided_slice %25 {offsets = [0, 384], sizes = [8, 384], strides = [1, 1]} : vector<8x1152xf32> to vector<8x384xf32>
    %28 = vector.extract_strided_slice %25 {offsets = [0, 768], sizes = [8, 384], strides = [1, 1]} : vector<8x1152xf32> to vector<8x384xf32>
    %29 = tpu.iota {dimensions = array<i32: 0>} : vector<8x8xi32>
    %30 = tpu.iota {dimensions = array<i32: 1>} : vector<8x8xi32>
    %31 = arith.cmpi sle, %30, %29 : vector<8x8xi32>
    %32 = vector.extract_strided_slice %26 {offsets = [0, 0], sizes = [8, 64], strides = [1, 1]} : vector<8x384xf32> to vector<8x64xf32>
    %33 = vector.extract_strided_slice %27 {offsets = [0, 0], sizes = [8, 64], strides = [1, 1]} : vector<8x384xf32> to vector<8x64xf32>
    %34 = vector.extract_strided_slice %28 {offsets = [0, 0], sizes = [8, 64], strides = [1, 1]} : vector<8x384xf32> to vector<8x64xf32>
    %cst_13 = arith.constant dense<0.000000e+00> : vector<8x8xf32>
    %35 = tpu.matmul %32, %33, %cst_13 {dimension_numbers = #tpu.dot_dimension_numbers<[1], [1], [0], [0], [0, 0, 1, 0], [], []>} : vector<8x64xf32>, vector<8x64xf32>, vector<8x8xf32> -> vector<8x8xf32>
    %cst_14 = arith.constant 0.0510310382 : f32
    %36 = vector.broadcast %cst_14 : f32 to vector<8x8xf32>
    %37 = arith.mulf %35, %36 : vector<8x8xf32>
    %cst_15 = arith.constant 0xFF800000 : f32
    %38 = vector.broadcast %cst_15 : f32 to vector<8x8xf32>
    %39 = arith.select %31, %37, %38 : vector<8x8xi1>, vector<8x8xf32>
    %cst_16 = arith.constant dense<0xFF800000> : vector<8xf32>
    %40 = vector.multi_reduction <maximumf>, %39, %cst_16 [1] : vector<8x8xf32> to vector<8xf32>
    %41 = vector.shape_cast %40 : vector<8xf32> to vector<8x1xf32>
    %42 = vector.broadcast %41 : vector<8x1xf32> to vector<8x8xf32>
    %43 = arith.subf %39, %42 : vector<8x8xf32>
    %44 = math.exp %43 : vector<8x8xf32>
    %cst_17 = arith.constant dense<0.000000e+00> : vector<8xf32>
    %45 = vector.multi_reduction <add>, %44, %cst_17 [1] : vector<8x8xf32> to vector<8xf32>
    %46 = vector.shape_cast %45 : vector<8xf32> to vector<8x1xf32>
    %47 = vector.broadcast %46 : vector<8x1xf32> to vector<8x8xf32>
    %48 = arith.divf %44, %47 : vector<8x8xf32>
    %cst_18 = arith.constant dense<0.000000e+00> : vector<8x64xf32>
    %49 = tpu.matmul %48, %34, %cst_18 {dimension_numbers = #tpu.dot_dimension_numbers<[1], [0], [0], [1], [0, 0, 1, 1], [], []>} : vector<8x8xf32>, vector<8x64xf32>, vector<8x64xf32> -> vector<8x64xf32>
    %50 = vector.extract_strided_slice %26 {offsets = [0, 64], sizes = [8, 64], strides = [1, 1]} : vector<8x384xf32> to vector<8x64xf32>
    %51 = vector.extract_strided_slice %27 {offsets = [0, 64], sizes = [8, 64], strides = [1, 1]} : vector<8x384xf32> to vector<8x64xf32>
    %52 = vector.extract_strided_slice %28 {offsets = [0, 64], sizes = [8, 64], strides = [1, 1]} : vector<8x384xf32> to vector<8x64xf32>
    %cst_19 = arith.constant dense<0.000000e+00> : vector<8x8xf32>
    %53 = tpu.matmul %50, %51, %cst_19 {dimension_numbers = #tpu.dot_dimension_numbers<[1], [1], [0], [0], [0, 0, 1, 0], [], []>} : vector<8x64xf32>, vector<8x64xf32>, vector<8x8xf32> -> vector<8x8xf32>
    %cst_20 = arith.constant 0.0510310382 : f32
    %54 = vector.broadcast %cst_20 : f32 to vector<8x8xf32>
    %55 = arith.mulf %53, %54 : vector<8x8xf32>
    %cst_21 = arith.constant 0xFF800000 : f32
    %56 = vector.broadcast %cst_21 : f32 to vector<8x8xf32>
    %57 = arith.select %31, %55, %56 : vector<8x8xi1>, vector<8x8xf32>
    %cst_22 = arith.constant dense<0xFF800000> : vector<8xf32>
    %58 = vector.multi_reduction <maximumf>, %57, %cst_22 [1] : vector<8x8xf32> to vector<8xf32>
    %59 = vector.shape_cast %58 : vector<8xf32> to vector<8x1xf32>
    %60 = vector.broadcast %59 : vector<8x1xf32> to vector<8x8xf32>
    %61 = arith.subf %57, %60 : vector<8x8xf32>
    %62 = math.exp %61 : vector<8x8xf32>
    %cst_23 = arith.constant dense<0.000000e+00> : vector<8xf32>
    %63 = vector.multi_reduction <add>, %62, %cst_23 [1] : vector<8x8xf32> to vector<8xf32>
    %64 = vector.shape_cast %63 : vector<8xf32> to vector<8x1xf32>
    %65 = vector.broadcast %64 : vector<8x1xf32> to vector<8x8xf32>
    %66 = arith.divf %62, %65 : vector<8x8xf32>
    %cst_24 = arith.constant dense<0.000000e+00> : vector<8x64xf32>
    %67 = tpu.matmul %66, %52, %cst_24 {dimension_numbers = #tpu.dot_dimension_numbers<[1], [0], [0], [1], [0, 0, 1, 1], [], []>} : vector<8x8xf32>, vector<8x64xf32>, vector<8x64xf32> -> vector<8x64xf32>
    %68 = vector.extract_strided_slice %26 {offsets = [0, 128], sizes = [8, 64], strides = [1, 1]} : vector<8x384xf32> to vector<8x64xf32>
    %69 = vector.extract_strided_slice %27 {offsets = [0, 128], sizes = [8, 64], strides = [1, 1]} : vector<8x384xf32> to vector<8x64xf32>
    %70 = vector.extract_strided_slice %28 {offsets = [0, 128], sizes = [8, 64], strides = [1, 1]} : vector<8x384xf32> to vector<8x64xf32>
    %cst_25 = arith.constant dense<0.000000e+00> : vector<8x8xf32>
    %71 = tpu.matmul %68, %69, %cst_25 {dimension_numbers = #tpu.dot_dimension_numbers<[1], [1], [0], [0], [0, 0, 1, 0], [], []>} : vector<8x64xf32>, vector<8x64xf32>, vector<8x8xf32> -> vector<8x8xf32>
    %cst_26 = arith.constant 0.0510310382 : f32
    %72 = vector.broadcast %cst_26 : f32 to vector<8x8xf32>
    %73 = arith.mulf %71, %72 : vector<8x8xf32>
    %cst_27 = arith.constant 0xFF800000 : f32
    %74 = vector.broadcast %cst_27 : f32 to vector<8x8xf32>
    %75 = arith.select %31, %73, %74 : vector<8x8xi1>, vector<8x8xf32>
    %cst_28 = arith.constant dense<0xFF800000> : vector<8xf32>
    %76 = vector.multi_reduction <maximumf>, %75, %cst_28 [1] : vector<8x8xf32> to vector<8xf32>
    %77 = vector.shape_cast %76 : vector<8xf32> to vector<8x1xf32>
    %78 = vector.broadcast %77 : vector<8x1xf32> to vector<8x8xf32>
    %79 = arith.subf %75, %78 : vector<8x8xf32>
    %80 = math.exp %79 : vector<8x8xf32>
    %cst_29 = arith.constant dense<0.000000e+00> : vector<8xf32>
    %81 = vector.multi_reduction <add>, %80, %cst_29 [1] : vector<8x8xf32> to vector<8xf32>
    %82 = vector.shape_cast %81 : vector<8xf32> to vector<8x1xf32>
    %83 = vector.broadcast %82 : vector<8x1xf32> to vector<8x8xf32>
    %84 = arith.divf %80, %83 : vector<8x8xf32>
    %cst_30 = arith.constant dense<0.000000e+00> : vector<8x64xf32>
    %85 = tpu.matmul %84, %70, %cst_30 {dimension_numbers = #tpu.dot_dimension_numbers<[1], [0], [0], [1], [0, 0, 1, 1], [], []>} : vector<8x8xf32>, vector<8x64xf32>, vector<8x64xf32> -> vector<8x64xf32>
    %86 = vector.extract_strided_slice %26 {offsets = [0, 192], sizes = [8, 64], strides = [1, 1]} : vector<8x384xf32> to vector<8x64xf32>
    %87 = vector.extract_strided_slice %27 {offsets = [0, 192], sizes = [8, 64], strides = [1, 1]} : vector<8x384xf32> to vector<8x64xf32>
    %88 = vector.extract_strided_slice %28 {offsets = [0, 192], sizes = [8, 64], strides = [1, 1]} : vector<8x384xf32> to vector<8x64xf32>
    %cst_31 = arith.constant dense<0.000000e+00> : vector<8x8xf32>
    %89 = tpu.matmul %86, %87, %cst_31 {dimension_numbers = #tpu.dot_dimension_numbers<[1], [1], [0], [0], [0, 0, 1, 0], [], []>} : vector<8x64xf32>, vector<8x64xf32>, vector<8x8xf32> -> vector<8x8xf32>
    %cst_32 = arith.constant 0.0510310382 : f32
    %90 = vector.broadcast %cst_32 : f32 to vector<8x8xf32>
    %91 = arith.mulf %89, %90 : vector<8x8xf32>
    %cst_33 = arith.constant 0xFF800000 : f32
    %92 = vector.broadcast %cst_33 : f32 to vector<8x8xf32>
    %93 = arith.select %31, %91, %92 : vector<8x8xi1>, vector<8x8xf32>
    %cst_34 = arith.constant dense<0xFF800000> : vector<8xf32>
    %94 = vector.multi_reduction <maximumf>, %93, %cst_34 [1] : vector<8x8xf32> to vector<8xf32>
    %95 = vector.shape_cast %94 : vector<8xf32> to vector<8x1xf32>
    %96 = vector.broadcast %95 : vector<8x1xf32> to vector<8x8xf32>
    %97 = arith.subf %93, %96 : vector<8x8xf32>
    %98 = math.exp %97 : vector<8x8xf32>
    %cst_35 = arith.constant dense<0.000000e+00> : vector<8xf32>
    %99 = vector.multi_reduction <add>, %98, %cst_35 [1] : vector<8x8xf32> to vector<8xf32>
    %100 = vector.shape_cast %99 : vector<8xf32> to vector<8x1xf32>
    %101 = vector.broadcast %100 : vector<8x1xf32> to vector<8x8xf32>
    %102 = arith.divf %98, %101 : vector<8x8xf32>
    %cst_36 = arith.constant dense<0.000000e+00> : vector<8x64xf32>
    %103 = tpu.matmul %102, %88, %cst_36 {dimension_numbers = #tpu.dot_dimension_numbers<[1], [0], [0], [1], [0, 0, 1, 1], [], []>} : vector<8x8xf32>, vector<8x64xf32>, vector<8x64xf32> -> vector<8x64xf32>
    %104 = vector.extract_strided_slice %26 {offsets = [0, 256], sizes = [8, 64], strides = [1, 1]} : vector<8x384xf32> to vector<8x64xf32>
    %105 = vector.extract_strided_slice %27 {offsets = [0, 256], sizes = [8, 64], strides = [1, 1]} : vector<8x384xf32> to vector<8x64xf32>
    %106 = vector.extract_strided_slice %28 {offsets = [0, 256], sizes = [8, 64], strides = [1, 1]} : vector<8x384xf32> to vector<8x64xf32>
    %cst_37 = arith.constant dense<0.000000e+00> : vector<8x8xf32>
    %107 = tpu.matmul %104, %105, %cst_37 {dimension_numbers = #tpu.dot_dimension_numbers<[1], [1], [0], [0], [0, 0, 1, 0], [], []>} : vector<8x64xf32>, vector<8x64xf32>, vector<8x8xf32> -> vector<8x8xf32>
    %cst_38 = arith.constant 0.0510310382 : f32
    %108 = vector.broadcast %cst_38 : f32 to vector<8x8xf32>
    %109 = arith.mulf %107, %108 : vector<8x8xf32>
    %cst_39 = arith.constant 0xFF800000 : f32
    %110 = vector.broadcast %cst_39 : f32 to vector<8x8xf32>
    %111 = arith.select %31, %109, %110 : vector<8x8xi1>, vector<8x8xf32>
    %cst_40 = arith.constant dense<0xFF800000> : vector<8xf32>
    %112 = vector.multi_reduction <maximumf>, %111, %cst_40 [1] : vector<8x8xf32> to vector<8xf32>
    %113 = vector.shape_cast %112 : vector<8xf32> to vector<8x1xf32>
    %114 = vector.broadcast %113 : vector<8x1xf32> to vector<8x8xf32>
    %115 = arith.subf %111, %114 : vector<8x8xf32>
    %116 = math.exp %115 : vector<8x8xf32>
    %cst_41 = arith.constant dense<0.000000e+00> : vector<8xf32>
    %117 = vector.multi_reduction <add>, %116, %cst_41 [1] : vector<8x8xf32> to vector<8xf32>
    %118 = vector.shape_cast %117 : vector<8xf32> to vector<8x1xf32>
    %119 = vector.broadcast %118 : vector<8x1xf32> to vector<8x8xf32>
    %120 = arith.divf %116, %119 : vector<8x8xf32>
    %cst_42 = arith.constant dense<0.000000e+00> : vector<8x64xf32>
    %121 = tpu.matmul %120, %106, %cst_42 {dimension_numbers = #tpu.dot_dimension_numbers<[1], [0], [0], [1], [0, 0, 1, 1], [], []>} : vector<8x8xf32>, vector<8x64xf32>, vector<8x64xf32> -> vector<8x64xf32>
    %122 = vector.extract_strided_slice %26 {offsets = [0, 320], sizes = [8, 64], strides = [1, 1]} : vector<8x384xf32> to vector<8x64xf32>
    %123 = vector.extract_strided_slice %27 {offsets = [0, 320], sizes = [8, 64], strides = [1, 1]} : vector<8x384xf32> to vector<8x64xf32>
    %124 = vector.extract_strided_slice %28 {offsets = [0, 320], sizes = [8, 64], strides = [1, 1]} : vector<8x384xf32> to vector<8x64xf32>
    %cst_43 = arith.constant dense<0.000000e+00> : vector<8x8xf32>
    %125 = tpu.matmul %122, %123, %cst_43 {dimension_numbers = #tpu.dot_dimension_numbers<[1], [1], [0], [0], [0, 0, 1, 0], [], []>} : vector<8x64xf32>, vector<8x64xf32>, vector<8x8xf32> -> vector<8x8xf32>
    %cst_44 = arith.constant 0.0510310382 : f32
    %126 = vector.broadcast %cst_44 : f32 to vector<8x8xf32>
    %127 = arith.mulf %125, %126 : vector<8x8xf32>
    %cst_45 = arith.constant 0xFF800000 : f32
    %128 = vector.broadcast %cst_45 : f32 to vector<8x8xf32>
    %129 = arith.select %31, %127, %128 : vector<8x8xi1>, vector<8x8xf32>
    %cst_46 = arith.constant dense<0xFF800000> : vector<8xf32>
    %130 = vector.multi_reduction <maximumf>, %129, %cst_46 [1] : vector<8x8xf32> to vector<8xf32>
    %131 = vector.shape_cast %130 : vector<8xf32> to vector<8x1xf32>
    %132 = vector.broadcast %131 : vector<8x1xf32> to vector<8x8xf32>
    %133 = arith.subf %129, %132 : vector<8x8xf32>
    %134 = math.exp %133 : vector<8x8xf32>
    %cst_47 = arith.constant dense<0.000000e+00> : vector<8xf32>
    %135 = vector.multi_reduction <add>, %134, %cst_47 [1] : vector<8x8xf32> to vector<8xf32>
    %136 = vector.shape_cast %135 : vector<8xf32> to vector<8x1xf32>
    %137 = vector.broadcast %136 : vector<8x1xf32> to vector<8x8xf32>
    %138 = arith.divf %134, %137 : vector<8x8xf32>
    %cst_48 = arith.constant dense<0.000000e+00> : vector<8x64xf32>
    %139 = tpu.matmul %138, %124, %cst_48 {dimension_numbers = #tpu.dot_dimension_numbers<[1], [0], [0], [1], [0, 0, 1, 1], [], []>} : vector<8x8xf32>, vector<8x64xf32>, vector<8x64xf32> -> vector<8x64xf32>
    %140 = tpu.concatenate %49, %67, %85, %103, %121, %139 in 1 : vector<8x64xf32>, vector<8x64xf32>, vector<8x64xf32>, vector<8x64xf32>, vector<8x64xf32>, vector<8x64xf32> -> vector<8x384xf32>
    %c0_49 = arith.constant 0 : index
    %c0_50 = arith.constant 0 : index
    %141 = vector.load %arg5[%c0_49, %c0_50] : memref<384x384xf32, #tpu.memory_space<vmem>>, vector<384x384xf32>
    %cst_51 = arith.constant dense<0.000000e+00> : vector<8x384xf32>
    %142 = tpu.matmul %140, %141, %cst_51 {dimension_numbers = #tpu.dot_dimension_numbers<[1], [0], [0], [1], [0, 0, 1, 1], [], []>} : vector<8x384xf32>, vector<384x384xf32>, vector<8x384xf32> -> vector<8x384xf32>
    %c0_52 = arith.constant 0 : index
    %c0_53 = arith.constant 0 : index
    %143 = vector.load %arg6[%c0_52, %c0_53] : memref<1x384xf32, #tpu.memory_space<vmem>>, vector<1x384xf32>
    %144 = vector.broadcast %143 : vector<1x384xf32> to vector<8x384xf32>
    %145 = arith.addf %142, %144 : vector<8x384xf32>
    %146 = arith.addf %1, %145 : vector<8x384xf32>
    %c0_54 = arith.constant 0 : index
    %c0_55 = arith.constant 0 : index
    %147 = vector.load %arg7[%c0_54, %c0_55] : memref<1x384xf32, #tpu.memory_space<vmem>>, vector<1x384xf32>
    %c0_56 = arith.constant 0 : index
    %c0_57 = arith.constant 0 : index
    %148 = vector.load %arg8[%c0_56, %c0_57] : memref<1x384xf32, #tpu.memory_space<vmem>>, vector<1x384xf32>
    %cst_58 = arith.constant dense<0.000000e+00> : vector<8xf32>
    %149 = vector.multi_reduction <add>, %146, %cst_58 [1] : vector<8x384xf32> to vector<8xf32>
    %150 = vector.shape_cast %149 : vector<8xf32> to vector<8x1xf32>
    %cst_59 = arith.constant 3.840000e+02 : f32
    %151 = vector.broadcast %cst_59 : f32 to vector<8x1xf32>
    %152 = arith.divf %150, %151 : vector<8x1xf32>
    %153 = vector.broadcast %152 : vector<8x1xf32> to vector<8x384xf32>
    %154 = arith.subf %146, %153 : vector<8x384xf32>
    %155 = arith.mulf %154, %154 : vector<8x384xf32>
    %cst_60 = arith.constant dense<0.000000e+00> : vector<8xf32>
    %156 = vector.multi_reduction <add>, %155, %cst_60 [1] : vector<8x384xf32> to vector<8xf32>
    %157 = vector.shape_cast %156 : vector<8xf32> to vector<8x1xf32>
    %cst_61 = arith.constant 3.840000e+02 : f32
    %158 = vector.broadcast %cst_61 : f32 to vector<8x1xf32>
    %159 = arith.divf %157, %158 : vector<8x1xf32>
    %cst_62 = arith.constant 9.99999974E-6 : f32
    %160 = vector.broadcast %cst_62 : f32 to vector<8x1xf32>
    %161 = arith.addf %159, %160 : vector<8x1xf32>
    %162 = math.rsqrt %161 : vector<8x1xf32>
    %163 = vector.broadcast %162 : vector<8x1xf32> to vector<8x384xf32>
    %164 = arith.mulf %154, %163 : vector<8x384xf32>
    %165 = vector.broadcast %147 : vector<1x384xf32> to vector<8x384xf32>
    %166 = arith.mulf %164, %165 : vector<8x384xf32>
    %167 = vector.broadcast %148 : vector<1x384xf32> to vector<8x384xf32>
    %168 = arith.addf %166, %167 : vector<8x384xf32>
    %c0_63 = arith.constant 0 : index
    %c0_64 = arith.constant 0 : index
    %169 = vector.load %arg9[%c0_63, %c0_64] : memref<384x1536xf32, #tpu.memory_space<vmem>>, vector<384x1536xf32>
    %cst_65 = arith.constant dense<0.000000e+00> : vector<8x1536xf32>
    %170 = tpu.matmul %168, %169, %cst_65 {dimension_numbers = #tpu.dot_dimension_numbers<[1], [0], [0], [1], [0, 0, 1, 1], [], []>} : vector<8x384xf32>, vector<384x1536xf32>, vector<8x1536xf32> -> vector<8x1536xf32>
    %c0_66 = arith.constant 0 : index
    %c0_67 = arith.constant 0 : index
    %171 = vector.load %arg10[%c0_66, %c0_67] : memref<1x1536xf32, #tpu.memory_space<vmem>>, vector<1x1536xf32>
    %172 = vector.broadcast %171 : vector<1x1536xf32> to vector<8x1536xf32>
    %173 = arith.addf %170, %172 : vector<8x1536xf32>
    %cst_68 = arith.constant 0.000000e+00 : f32
    %174 = vector.broadcast %cst_68 : f32 to vector<8x1536xf32>
    %175 = arith.maximumf %173, %174 : vector<8x1536xf32>
    %c0_69 = arith.constant 0 : index
    %c0_70 = arith.constant 0 : index
    %176 = vector.load %arg11[%c0_69, %c0_70] : memref<1536x384xf32, #tpu.memory_space<vmem>>, vector<1536x384xf32>
    %cst_71 = arith.constant dense<0.000000e+00> : vector<8x384xf32>
    %177 = tpu.matmul %175, %176, %cst_71 {dimension_numbers = #tpu.dot_dimension_numbers<[1], [0], [0], [1], [0, 0, 1, 1], [], []>} : vector<8x1536xf32>, vector<1536x384xf32>, vector<8x384xf32> -> vector<8x384xf32>
    %c0_72 = arith.constant 0 : index
    %c0_73 = arith.constant 0 : index
    %178 = vector.load %arg12[%c0_72, %c0_73] : memref<1x384xf32, #tpu.memory_space<vmem>>, vector<1x384xf32>
    %179 = vector.broadcast %178 : vector<1x384xf32> to vector<8x384xf32>
    %180 = arith.addf %177, %179 : vector<8x384xf32>
    %181 = arith.addf %146, %180 : vector<8x384xf32>
    %c0_74 = arith.constant 0 : index
    %c0_75 = arith.constant 0 : index
    %c0_76 = arith.constant 0 : index
    %182 = vector.load %arg13[%c0_74, %c0_75, %c0_76] : memref<1x8x384xf32, #tpu.memory_space<vmem>>, vector<1x8x384xf32>
    %183 = vector.shape_cast %182 : vector<1x8x384xf32> to vector<8x384xf32>
    %184 = vector.shape_cast %181 : vector<8x384xf32> to vector<1x8x384xf32>
    tpu.vector_store %arg13[%c0_74, %c0_75, %c0_76], %184 {strides = array<i32>} : memref<1x8x384xf32, #tpu.memory_space<vmem>>, vector<1x8x384xf32>,
    return
  }
  func.func @transform_0(%arg0: i32) -> (i32, i32, i32) {
    %c0_i32 = arith.constant 0 : i32
    %c0_i32_0 = arith.constant 0 : i32
    %c0_i32_1 = arith.constant 0 : i32
    return %arg0, %c0_i32, %c0_i32_0 : i32, i32, i32
  }
  func.func @transform_1(%arg0: i32) -> (i32, i32) {
    %c0_i32 = arith.constant 0 : i32
    %c0_i32_0 = arith.constant 0 : i32
    %c0_i32_1 = arith.constant 0 : i32
    return %c0_i32, %c0_i32_0 : i32, i32
  }
  func.func @transform_2(%arg0: i32) -> (i32, i32) {
    %c0_i32 = arith.constant 0 : i32
    %c0_i32_0 = arith.constant 0 : i32
    %c0_i32_1 = arith.constant 0 : i32
    return %c0_i32, %c0_i32_0 : i32, i32
  }
  func.func @transform_3(%arg0: i32) -> (i32, i32) {
    %c0_i32 = arith.constant 0 : i32
    %c0_i32_0 = arith.constant 0 : i32
    %c0_i32_1 = arith.constant 0 : i32
    return %c0_i32, %c0_i32_0 : i32, i32
  }
  func.func @transform_4(%arg0: i32) -> (i32, i32) {
    %c0_i32 = arith.constant 0 : i32
    %c0_i32_0 = arith.constant 0 : i32
    %c0_i32_1 = arith.constant 0 : i32
    return %c0_i32, %c0_i32_0 : i32, i32
  }
  func.func @transform_5(%arg0: i32) -> (i32, i32) {
    %c0_i32 = arith.constant 0 : i32
    %c0_i32_0 = arith.constant 0 : i32
    %c0_i32_1 = arith.constant 0 : i32
    return %c0_i32, %c0_i32_0 : i32, i32
  }
  func.func @transform_6(%arg0: i32) -> (i32, i32) {
    %c0_i32 = arith.constant 0 : i32
    %c0_i32_0 = arith.constant 0 : i32
    %c0_i32_1 = arith.constant 0 : i32
    return %c0_i32, %c0_i32_0 : i32, i32
  }
  func.func @transform_7(%arg0: i32) -> (i32, i32) {
    %c0_i32 = arith.constant 0 : i32
    %c0_i32_0 = arith.constant 0 : i32
    %c0_i32_1 = arith.constant 0 : i32
    return %c0_i32, %c0_i32_0 : i32, i32
  }
  func.func @transform_8(%arg0: i32) -> (i32, i32) {
    %c0_i32 = arith.constant 0 : i32
    %c0_i32_0 = arith.constant 0 : i32
    %c0_i32_1 = arith.constant 0 : i32
    return %c0_i32, %c0_i32_0 : i32, i32
  }
  func.func @transform_9(%arg0: i32) -> (i32, i32) {
    %c0_i32 = arith.constant 0 : i32
    %c0_i32_0 = arith.constant 0 : i32
    %c0_i32_1 = arith.constant 0 : i32
    return %c0_i32, %c0_i32_0 : i32, i32
  }
  func.func @transform_10(%arg0: i32) -> (i32, i32) {
    %c0_i32 = arith.constant 0 : i32
    %c0_i32_0 = arith.constant 0 : i32
    %c0_i32_1 = arith.constant 0 : i32
    return %c0_i32, %c0_i32_0 : i32, i32
  }
  func.func @transform_11(%arg0: i32) -> (i32, i32) {
    %c0_i32 = arith.constant 0 : i32
    %c0_i32_0 = arith.constant 0 : i32
    %c0_i32_1 = arith.constant 0 : i32
    return %c0_i32, %c0_i32_0 : i32, i32
  }
  func.func @transform_12(%arg0: i32) -> (i32, i32, i32) {
    %c0_i32 = arith.constant 0 : i32
    %c0_i32_0 = arith.constant 0 : i32
    %c0_i32_1 = arith.constant 0 : i32
    return %arg0, %c0_i32, %c0_i32_0 : i32, i32, i32
  }
}

</mosaic_0001>

<llo_original>
// kernel: block_forward.1
$region0: #{block_forward.1}
  #allocation0 [shape = 'u32[]', space=smem, size = 0x4, offset = 0x4, fixed_abs, tag = 'smem constant byte address 0x4 - core index']
  #allocation1 [shape = 'u32[72,128]{1,0:T(1,128)}', space=vmem, size = 0x9000, scoped, tag = 'internal scratch']
  %s0 = inlined_call_operand.vmem [shape: f32[2,8,384], index: 0, kind: input, shape index: {}]
  %s1 = inlined_call_operand.vmem [shape: f32[1,384], index: 1, kind: input, shape index: {}]
  %s2 = inlined_call_operand.vmem [shape: f32[1,384], index: 2, kind: input, shape index: {}]
  %s3 = inlined_call_operand.vmem [shape: f32[384,1152], index: 3, kind: input, shape index: {}]
  %s4 = inlined_call_operand.vmem [shape: f32[384,384], index: 4, kind: input, shape index: {}]
  %s5 = inlined_call_operand.vmem [shape: f32[1,384], index: 5, kind: input, shape index: {}]
  %s6 = inlined_call_operand.vmem [shape: f32[1,384], index: 6, kind: input, shape index: {}]
  %s7 = inlined_call_operand.vmem [shape: f32[1,384], index: 7, kind: input, shape index: {}]
  %s8 = inlined_call_operand.vmem [shape: f32[384,1536], index: 8, kind: input, shape index: {}]
  %s9 = inlined_call_operand.vmem [shape: f32[1,1536], index: 9, kind: input, shape index: {}]
  %s10 = inlined_call_operand.hbm [shape: f32[1536,384], index: 10, kind: input, shape index: {}]
  %s11 = inlined_call_operand.vmem [shape: f32[1,384], index: 11, kind: input, shape index: {}]
  %s12 = inlined_call_operand.hbm [shape: f32[2,8,384], index: 12, kind: output, shape index: {}]
  %s13 = sld [smem:[#allocation0]]
  $region85: #{block_forward.1} parent=0
    _
  %s15 = ssub.s32 1, %s13
  %s16 = scalar_select 0, %s15, %s13
  $region1: #{block_forward.1} parent=0
    #allocation2 [shape = 'u8[2359296]{0}', space=vmem, size = 0x240000, scoped, tag = 'input window, operand 10, single buffered']
    #allocation3 [shape = 's32[2]{0}', space=sflag, size = 0x8, scoped, tag = 'scoped memory for block_forward.1']
    #allocation4 [shape = 's32[2]{0}', space=sflag, size = 0x8, scoped, tag = 'scoped memory for block_forward.1']
    #allocation5 [shape = 'u8[24576]{0}', space=vmem, size = 0x6000, scoped, tag = 'output window, operand 0']
    %17 = vsyncpa [#allocation3], 0
    %18 = vsyncpa [#allocation4], 0
    %s19 = scalar_lea.sflag [#allocation4], 1
    %20 = vsyncpa %s19, 0
    loop: start=0, step=1, limit=4
    $region2: #{block_forward.1} parent=1 // loop_pre_header
      _
    $region3: #{block_forward.1} parent=1 // loop_header
      %s22 = sphi 0, %s26
      %p23 = scmp.ge.s32.totalorder %s22, 4
      %s32 = sphi 0, %s34
      %s35 = sphi 0, %s32
      %s36 = sphi 0, %s35
      %s52 = sphi 0, %s36
      %s56 = sphi 0, %s56
      %s58 = sphi 0, %s56
      %s59 = sphi 0, %s58
      %s73 = sphi 0, %s59
      %s77 = sphi 0, %s77
      %s79 = sphi 0, %s77
      %s80 = sphi 0, %s79
      %s94 = sphi 0, %s80
      %s98 = sphi 0, %s98
      %s100 = sphi 0, %s98
      %s101 = sphi 0, %s100
      %s115 = sphi 0, %s101
      %s119 = sphi 0, %s119
      %s121 = sphi 0, %s119
      %s122 = sphi 0, %s121
      %s136 = sphi 0, %s122
      %s140 = sphi 0, %s140
      %s142 = sphi 0, %s140
      %s143 = sphi 0, %s142
      %s157 = sphi 0, %s143
      %s161 = sphi 0, %s161
      %s163 = sphi 0, %s161
      %s164 = sphi 0, %s163
      %s178 = sphi 0, %s164
      %s182 = sphi 0, %s182
      %s184 = sphi 0, %s182
      %s185 = sphi 0, %s184
      %s199 = sphi 0, %s185
      %s203 = sphi 0, %s203
      %s205 = sphi 0, %s203
      %s206 = sphi 0, %s205
      %s220 = sphi 0, %s206
      %s224 = sphi 0, %s224
      %s226 = sphi 0, %s224
      %s227 = sphi 0, %s226
      %s241 = sphi 0, %s227
      %s245 = sphi 0, %s245
      %s247 = sphi 0, %s245
      %s248 = sphi 0, %s247
      %s262 = sphi 0, %s248
      %s266 = sphi 0, %s266
      %s268 = sphi 0, %s266
      %s269 = sphi 0, %s268
      %s283 = sphi 0, %s269
      %s289 = sphi 0, %s291
      %s292 = sphi 0, %s289
      %s293 = sphi 0, %s292
      %s309 = sphi 0, %s293
    $region4: #{block_forward.1} parent=1 // loop_header_branch
      %25 = sbr.rel (%p23) target = $region8
    $region5: #{block_forward.1} parent=1 // loop_body
      %s27 = ssub.s32 %s22, 1
      %s28 = ssub.s32 %s22, 2
      %s29 = sadd.s32 %s22, 1
      %s30 = ssub.s32 %s22, %s29
      %p31 = scmp.eq.s32.totalorder %s30, 0
      %s33 = sadd.s32 %s32, 1
      %s34 = scalar_select %p31, %s32, %s33
      %p37 = pneg %p31
      %p38 = scmp.eq.s32.totalorder %s22, 1
      %p39 = por %p37, %p38
      %p40 = scmp.ne.s32.totalorder %s32, %s35
      %p41 = scmp.eq.s32.totalorder %s22, 0
      %p42 = por %p40, %p41
      %p43 = scmp.ne.s32.totalorder %s32, %s35
      %p44 = scmp.eq.s32.totalorder %s27, 1
      %p45 = por %p43, %p44
      %p46 = scmp.ne.s32.totalorder %s35, %s36
      %p47 = scmp.eq.s32.totalorder %s27, 0
      %p48 = por %p46, %p47
      %p49 = scmp.ne.s32.totalorder %s35, %s36
      %p50 = scmp.eq.s32.totalorder %s28, 1
      %p51 = por %p49, %p50
      %p53 = scmp.ne.s32.totalorder %s36, %s52
      %p54 = scmp.eq.s32.totalorder %s28, 0
      %p55 = por %p53, %p54
      %s57 = sadd.s32 %s56, 1
      %p60 = scmp.eq.s32.totalorder %s22, 1
      %p61 = scmp.ne.s32.totalorder %s56, %s58
      %p62 = scmp.eq.s32.totalorder %s22, 0
      %p63 = por %p61, %p62
      %p64 = scmp.ne.s32.totalorder %s56, %s58
      %p65 = scmp.eq.s32.totalorder %s27, 1
      %p66 = por %p64, %p65
      %p67 = scmp.ne.s32.totalorder %s58, %s59
      %p68 = scmp.eq.s32.totalorder %s27, 0
      %p69 = por %p67, %p68
      %p70 = scmp.ne.s32.totalorder %s58, %s59
      %p71 = scmp.eq.s32.totalorder %s28, 1
      %p72 = por %p70, %p71
      %p74 = scmp.ne.s32.totalorder %s59, %s73
      %p75 = scmp.eq.s32.totalorder %s28, 0
      %p76 = por %p74, %p75
      %s78 = sadd.s32 %s77, 1
      %p81 = scmp.eq.s32.totalorder %s22, 1
      %p82 = scmp.ne.s32.totalorder %s77, %s79
      %p83 = scmp.eq.s32.totalorder %s22, 0
      %p84 = por %p82, %p83
      %p85 = scmp.ne.s32.totalorder %s77, %s79
      %p86 = scmp.eq.s32.totalorder %s27, 1
      %p87 = por %p85, %p86
      %p88 = scmp.ne.s32.totalorder %s79, %s80
      %p89 = scmp.eq.s32.totalorder %s27, 0
      %p90 = por %p88, %p89
      %p91 = scmp.ne.s32.totalorder %s79, %s80
      %p92 = scmp.eq.s32.totalorder %s28, 1
      %p93 = por %p91, %p92
      %p95 = scmp.ne.s32.totalorder %s80, %s94
      %p96 = scmp.eq.s32.totalorder %s28, 0
      %p97 = por %p95, %p96
      %s99 = sadd.s32 %s98, 1
      %p102 = scmp.eq.s32.totalorder %s22, 1
      %p103 = scmp.ne.s32.totalorder %s98, %s100
      %p104 = scmp.eq.s32.totalorder %s22, 0
      %p105 = por %p103, %p104
      %p106 = scmp.ne.s32.totalorder %s98, %s100
      %p107 = scmp.eq.s32.totalorder %s27, 1
      %p108 = por %p106, %p107
      %p109 = scmp.ne.s32.totalorder %s100, %s101
      %p110 = scmp.eq.s32.totalorder %s27, 0
      %p111 = por %p109, %p110
      %p112 = scmp.ne.s32.totalorder %s100, %s101
      %p113 = scmp.eq.s32.totalorder %s28, 1
      %p114 = por %p112, %p113
      %p116 = scmp.ne.s32.totalorder %s101, %s115
      %p117 = scmp.eq.s32.totalorder %s28, 0
      %p118 = por %p116, %p117
      %s120 = sadd.s32 %s119, 1
      %p123 = scmp.eq.s32.totalorder %s22, 1
      %p124 = scmp.ne.s32.totalorder %s119, %s121
      %p125 = scmp.eq.s32.totalorder %s22, 0
      %p126 = por %p124, %p125
      %p127 = scmp.ne.s32.totalorder %s119, %s121
      %p128 = scmp.eq.s32.totalorder %s27, 1
      %p129 = por %p127, %p128
      %p130 = scmp.ne.s32.totalorder %s121, %s122
      %p131 = scmp.eq.s32.totalorder %s27, 0
      %p132 = por %p130, %p131
      %p133 = scmp.ne.s32.totalorder %s121, %s122
      %p134 = scmp.eq.s32.totalorder %s28, 1
      %p135 = por %p133, %p134
      %p137 = scmp.ne.s32.totalorder %s122, %s136
      %p138 = scmp.eq.s32.totalorder %s28, 0
      %p139 = por %p137, %p138
      %s141 = sadd.s32 %s140, 1
      %p144 = scmp.eq.s32.totalorder %s22, 1
      %p145 = scmp.ne.s32.totalorder %s140, %s142
      %p146 = scmp.eq.s32.totalorder %s22, 0
      %p147 = por %p145, %p146
      %p148 = scmp.ne.s32.totalorder %s140, %s142
      %p149 = scmp.eq.s32.totalorder %s27, 1
      %p150 = por %p148, %p149
      %p151 = scmp.ne.s32.totalorder %s142, %s143
      %p152 = scmp.eq.s32.totalorder %s27, 0
      %p153 = por %p151, %p152
      %p154 = scmp.ne.s32.totalorder %s142, %s143
      %p155 = scmp.eq.s32.totalorder %s28, 1
      %p156 = por %p154, %p155
      %p158 = scmp.ne.s32.totalorder %s143, %s157
      %p159 = scmp.eq.s32.totalorder %s28, 0
      %p160 = por %p158, %p159
      %s162 = sadd.s32 %s161, 1
      %p165 = scmp.eq.s32.totalorder %s22, 1
      %p166 = scmp.ne.s32.totalorder %s161, %s163
      %p167 = scmp.eq.s32.totalorder %s22, 0
      %p168 = por %p166, %p167
      %p169 = scmp.ne.s32.totalorder %s161, %s163
      %p170 = scmp.eq.s32.totalorder %s27, 1
      %p171 = por %p169, %p170
      %p172 = scmp.ne.s32.totalorder %s163, %s164
      %p173 = scmp.eq.s32.totalorder %s27, 0
      %p174 = por %p172, %p173
      %p175 = scmp.ne.s32.totalorder %s163, %s164
      %p176 = scmp.eq.s32.totalorder %s28, 1
      %p177 = por %p175, %p176
      %p179 = scmp.ne.s32.totalorder %s164, %s178
      %p180 = scmp.eq.s32.totalorder %s28, 0
      %p181 = por %p179, %p180
      %s183 = sadd.s32 %s182, 1
      %p186 = scmp.eq.s32.totalorder %s22, 1
      %p187 = scmp.ne.s32.totalorder %s182, %s184
      %p188 = scmp.eq.s32.totalorder %s22, 0
      %p189 = por %p187, %p188
      %p190 = scmp.ne.s32.totalorder %s182, %s184
      %p191 = scmp.eq.s32.totalorder %s27, 1
      %p192 = por %p190, %p191
      %p193 = scmp.ne.s32.totalorder %s184, %s185
      %p194 = scmp.eq.s32.totalorder %s27, 0
      %p195 = por %p193, %p194
      %p196 = scmp.ne.s32.totalorder %s184, %s185
      %p197 = scmp.eq.s32.totalorder %s28, 1
      %p198 = por %p196, %p197
      %p200 = scmp.ne.s32.totalorder %s185, %s199
      %p201 = scmp.eq.s32.totalorder %s28, 0
      %p202 = por %p200, %p201
      %s204 = sadd.s32 %s203, 1
      %p207 = scmp.eq.s32.totalorder %s22, 1
      %p208 = scmp.ne.s32.totalorder %s203, %s205
      %p209 = scmp.eq.s32.totalorder %s22, 0
      %p210 = por %p208, %p209
      %p211 = scmp.ne.s32.totalorder %s203, %s205
      %p212 = scmp.eq.s32.totalorder %s27, 1
      %p213 = por %p211, %p212
      %p214 = scmp.ne.s32.totalorder %s205, %s206
      %p215 = scmp.eq.s32.totalorder %s27, 0
      %p216 = por %p214, %p215
      %p217 = scmp.ne.s32.totalorder %s205, %s206
      %p218 = scmp.eq.s32.totalorder %s28, 1
      %p219 = por %p217, %p218
      %p221 = scmp.ne.s32.totalorder %s206, %s220
      %p222 = scmp.eq.s32.totalorder %s28, 0
      %p223 = por %p221, %p222
      %s225 = sadd.s32 %s224, 1
      %p228 = scmp.eq.s32.totalorder %s22, 1
      %p229 = scmp.ne.s32.totalorder %s224, %s226
      %p230 = scmp.eq.s32.totalorder %s22, 0
      %p231 = por %p229, %p230
      %p232 = scmp.ne.s32.totalorder %s224, %s226
      %p233 = scmp.eq.s32.totalorder %s27, 1
      %p234 = por %p232, %p233
      %p235 = scmp.ne.s32.totalorder %s226, %s227
      %p236 = scmp.eq.s32.totalorder %s27, 0
      %p237 = por %p235, %p236
      %p238 = scmp.ne.s32.totalorder %s226, %s227
      %p239 = scmp.eq.s32.totalorder %s28, 1
      %p240 = por %p238, %p239
      %p242 = scmp.ne.s32.totalorder %s227, %s241
      %p243 = scmp.eq.s32.totalorder %s28, 0
      %p244 = por %p242, %p243
      %s246 = sadd.s32 %s245, 1
      %p249 = scmp.eq.s32.totalorder %s22, 1
      %p250 = scmp.ne.s32.totalorder %s245, %s247
      %p251 = scmp.eq.s32.totalorder %s22, 0
      %p252 = por %p250, %p251
      %p253 = scmp.ne.s32.totalorder %s245, %s247
      %p254 = scmp.eq.s32.totalorder %s27, 1
      %p255 = por %p253, %p254
      %p256 = scmp.ne.s32.totalorder %s247, %s248
      %p257 = scmp.eq.s32.totalorder %s27, 0
      %p258 = por %p256, %p257
      %p259 = scmp.ne.s32.totalorder %s247, %s248
      %p260 = scmp.eq.s32.totalorder %s28, 1
      %p261 = por %p259, %p260
      %p263 = scmp.ne.s32.totalorder %s248, %s262
      %p264 = scmp.eq.s32.totalorder %s28, 0
      %p265 = por %p263, %p264
      %s267 = sadd.s32 %s266, 1
      %p270 = scmp.eq.s32.totalorder %s22, 1
      %p271 = scmp.ne.s32.totalorder %s266, %s268
      %p272 = scmp.eq.s32.totalorder %s22, 0
      %p273 = por %p271, %p272
      %p274 = scmp.ne.s32.totalorder %s266, %s268
      %p275 = scmp.eq.s32.totalorder %s27, 1
      %p276 = por %p274, %p275
      %p277 = scmp.ne.s32.totalorder %s268, %s269
      %p278 = scmp.eq.s32.totalorder %s27, 0
      %p279 = por %p277, %p278
      %p280 = scmp.ne.s32.totalorder %s268, %s269
      %p281 = scmp.eq.s32.totalorder %s28, 1
      %p282 = por %p280, %p281
      %p284 = scmp.ne.s32.totalorder %s269, %s283
      %p285 = scmp.eq.s32.totalorder %s28, 0
      %p286 = por %p284, %p285
      %s287 = ssub.s32 %s22, %s29
      %p288 = scmp.eq.s32.totalorder %s287, 0
      %s290 = sadd.s32 %s289, 1
      %s291 = scalar_select %p288, %s289, %s290
      %p294 = pneg %p288
      %p295 = scmp.eq.s32.totalorder %s22, 1
      %p296 = por %p294, %p295
      %p297 = scmp.ne.s32.totalorder %s289, %s292
      %p298 = scmp.eq.s32.totalorder %s22, 0
      %p299 = por %p297, %p298
      %p300 = scmp.ne.s32.totalorder %s289, %s292
      %p301 = scmp.eq.s32.totalorder %s27, 1
      %p302 = por %p300, %p301
      %p303 = scmp.ne.s32.totalorder %s292, %s293
      %p304 = scmp.eq.s32.totalorder %s27, 0
      %p305 = por %p303, %p304
      %p306 = scmp.ne.s32.totalorder %s292, %s293
      %p307 = scmp.eq.s32.totalorder %s28, 1
      %p308 = por %p306, %p307
      %p310 = scmp.ne.s32.totalorder %s293, %s309
      %p311 = scmp.eq.s32.totalorder %s28, 0
      %p312 = por %p310, %p311
      %p313 = scmp.le.s32.totalorder 1, %s22
      %p314 = scmp.lt.s32.totalorder %s22, 3
      %p315 = pnand %p313, %p314
      %p316 = pneg %p315
      // Predicated region
      $region9: #{block_forward.1} parent=5 // pred_check
        _
      $region10: #{block_forward.1} parent=5 // pred_check_branch
        %318 = sbr.rel (%p315) target = $region12
      $region11: #{block_forward.1} parent=5 // pred_region
        %s319 = ssub.s32 %s22, 1
        // Predicated region
        $region13: #{block_forward.1} parent=11 // pred_check
          %p320 = pneg %p69
        $region14: #{block_forward.1} parent=11 // pred_check_branch
          %322 = sbr.rel (%p320) target = $region16
        $region15: #{block_forward.1} parent=11 // pred_region
          _
        $region16: #{block_forward.1} parent=11 // pred_fallthru
          _
        // Predicated region
        $region17: #{block_forward.1} parent=11 // pred_check
          %p323 = pneg %p90
        $region18: #{block_forward.1} parent=11 // pred_check_branch
          %325 = sbr.rel (%p323) target = $region20
        $region19: #{block_forward.1} parent=11 // pred_region
          _
        $region20: #{block_forward.1} parent=11 // pred_fallthru
          _
        // Predicated region
        $region21: #{block_forward.1} parent=11 // pred_check
          %p326 = pneg %p111
        $region22: #{block_forward.1} parent=11 // pred_check_branch
          %328 = sbr.rel (%p326) target = $region24
        $region23: #{block_forward.1} parent=11 // pred_region
          _
        $region24: #{block_forward.1} parent=11 // pred_fallthru
          _
        // Predicated region
        $region25: #{block_forward.1} parent=11 // pred_check
          %p329 = pneg %p132
        $region26: #{block_forward.1} parent=11 // pred_check_branch
          %331 = sbr.rel (%p329) target = $region28
        $region27: #{block_forward.1} parent=11 // pred_region
          _
        $region28: #{block_forward.1} parent=11 // pred_fallthru
          _
        // Predicated region
        $region29: #{block_forward.1} parent=11 // pred_check
          %p332 = pneg %p153
        $region30: #{block_forward.1} parent=11 // pred_check_branch
          %334 = sbr.rel (%p332) target = $region32
        $region31: #{block_forward.1} parent=11 // pred_region
          _
        $region32: #{block_forward.1} parent=11 // pred_fallthru
          _
        // Predicated region
        $region33: #{block_forward.1} parent=11 // pred_check
          %p335 = pneg %p174
        $region34: #{block_forward.1} parent=11 // pred_check_branch
          %337 = sbr.rel (%p335) target = $region36
        $region35: #{block_forward.1} parent=11 // pred_region
          _
        $region36: #{block_forward.1} parent=11 // pred_fallthru
          _
        // Predicated region
        $region37: #{block_forward.1} parent=11 // pred_check
          %p338 = pneg %p195
        $region38: #{block_forward.1} parent=11 // pred_check_branch
          %340 = sbr.rel (%p338) target = $region40
        $region39: #{block_forward.1} parent=11 // pred_region
          _
        $region40: #{block_forward.1} parent=11 // pred_fallthru
          _
        // Predicated region
        $region41: #{block_forward.1} parent=11 // pred_check
          %p341 = pneg %p216
        $region42: #{block_forward.1} parent=11 // pred_check_branch
          %343 = sbr.rel (%p341) target = $region44
        $region43: #{block_forward.1} parent=11 // pred_region
          _
        $region44: #{block_forward.1} parent=11 // pred_fallthru
          _
        // Predicated region
        $region45: #{block_forward.1} parent=11 // pred_check
          %p344 = pneg %p237
        $region46: #{block_forward.1} parent=11 // pred_check_branch
          %346 = sbr.rel (%p344) target = $region48
        $region47: #{block_forward.1} parent=11 // pred_region
          _
        $region48: #{block_forward.1} parent=11 // pred_fallthru
          _
        // Predicated region
        $region49: #{block_forward.1} parent=11 // pred_check
          %p347 = pneg %p258
        $region50: #{block_forward.1} parent=11 // pred_check_branch
          %349 = sbr.rel (%p347) target = $region52
        $region51: #{block_forward.1} parent=11 // pred_region
          %351 = vsyncadd [#allocation3], 0
          %s352 = sshll.u32 %s10, 4
          %s353 = int_to_ptr.hbm [resolvable:$true] %s352
          %s354 = sshll.u32 [#allocation2], 4
          %s355 = int_to_ptr.vmem [resolvable:$true] %s354
          %360 = dma.hbm_to_vmem [thread:$0]  %s353, 73728, %s355, [#allocation3], 384, 384, 24
        $region52: #{block_forward.1} parent=11 // pred_fallthru
          _
        // Predicated region
        $region53: #{block_forward.1} parent=11 // pred_check
          %p361 = pneg %p279
        $region54: #{block_forward.1} parent=11 // pred_check_branch
          %363 = sbr.rel (%p361) target = $region56
        $region55: #{block_forward.1} parent=11 // pred_region
          _
        $region56: #{block_forward.1} parent=11 // pred_fallthru
          _
      $region12: #{block_forward.1} parent=5 // pred_fallthru
        _
      %p364 = scmp.lt.s32.totalorder %s22, 2
      // Predicated region
      $region57: #{block_forward.1} parent=5 // pred_check
        %p365 = pneg %p364
      $region58: #{block_forward.1} parent=5 // pred_check_branch
        %367 = sbr.rel (%p365) target = $region60
      $region59: #{block_forward.1} parent=5 // pred_region
        // Predicated region
        $region61: #{block_forward.1} parent=59 // pred_check
          %p368 = pneg %p42
        $region62: #{block_forward.1} parent=59 // pred_check_branch
          %370 = sbr.rel (%p368) target = $region64
        $region63: #{block_forward.1} parent=59 // pred_region
          %p371 = scmp.lt.s32.totalorder %s22, 1
          %s372 = scalar_select %p371, %s22, 1
          %s373 = smul.addr %s372, 3
          %s374 = smul.addr %s373, 8
          %s375 = scalar_lea.vmem %s0, %s374
        $region64: #{block_forward.1} parent=59 // pred_fallthru
          _
      $region60: #{block_forward.1} parent=5 // pred_fallthru
        _
      %p376 = scmp.le.s32.totalorder 1, %s22
      %p377 = scmp.lt.s32.totalorder %s22, 3
      %p378 = pnand %p376, %p377
      %p379 = pneg %p378
      // Predicated region
      $region65: #{block_forward.1} parent=5 // pred_check
        _
      $region66: #{block_forward.1} parent=5 // pred_check_branch
        %381 = sbr.rel (%p378) target = $region68
      $region67: #{block_forward.1} parent=5 // pred_region
        %s382 = ssub.s32 %s22, 1
        // Predicated region
        $region69: #{block_forward.1} parent=67 // pred_check
          %p383 = pneg %p258
        $region70: #{block_forward.1} parent=67 // pred_check_branch
          %385 = sbr.rel (%p383) target = $region72
        $region71: #{block_forward.1} parent=67 // pred_region
          %387 = dma.done [#allocation3], 73728
        $region72: #{block_forward.1} parent=67 // pred_fallthru
          _
        %p388 = scmp.lt.s32.totalorder %s27, 1
        %s389 = scalar_select %p388, %s27, 1
        %s390 = smul.addr %s389, 3
        %s391 = smul.addr %s390, 8
        %s392 = scalar_lea.vmem %s0, %s391
        %p393 = pneg %p48
        %p394 = pneg %p45
        %p395 = pneg %p69
        %p396 = pneg %p66
        %p397 = pneg %p90
        %p398 = pneg %p87
        %p399 = pneg %p111
        %p400 = pneg %p108
        %p401 = pneg %p132
        %p402 = pneg %p129
        %p403 = pneg %p153
        %p404 = pneg %p150
        %p405 = pneg %p174
        %p406 = pneg %p171
        %p407 = pneg %p195
        %p408 = pneg %p192
        %p409 = pneg %p216
        %p410 = pneg %p213
        %p411 = pneg %p237
        %p412 = pneg %p234
        %p413 = pneg %p258
        %p414 = pneg %p255
        %p415 = pneg %p279
        %p416 = pneg %p276
        %p417 = pneg %p305
        %p418 = pneg %p302
        %s419 = sand.u32 %s292, 1
        %s420 = scalar_lea.sflag [#allocation4], %s419
        %s421 = sand.u32 %s292, 1
        %s422 = smul.addr %s421, 24
        %s423 = scalar_lea.vmem [#allocation5], %s422
        %p424 = scmp.lt.s32.totalorder %s27, 1
        %s425 = scalar_select %p424, %s27, 1
        %s426 = smul.addr %s425, 3
        %s427 = smul.addr %s426, 8
        %s428 = scalar_lea.vmem %s0, %s427
        %v429 = vld [vmem:[%s428] sm:$0xff]
        %v430 = vld [vmem:[%s428 + $0x8] sm:$0xff]
        %v431 = vld [vmem:[%s428 + $0x10] sm:$0xff]
        %v432 = vld [vmem:[%s1] sm:$0x7]
        %v433 = vld [vmem:[%s2] sm:$0x7]
        %v434 = vadd.f32 %v429, %v430
        %v435 = vadd.f32 %v434, %v431
        %436 = vadd.xlane.f32.xlu0 %v435
        %v437 = vpop.xlane.xlu0 %436
        %v438 = vrcp.pop 384.0
        %v439 = vmul.f32 384.0, %v438
        %v440 = vsub.f32 1.0, %v439
        %v441 = vmul.f32 %v438, %v440
        %v442 = vadd.f32 %v438, %v441
        %vm443 = vweird.f32 %v438
        %v444 = vsel %vm443, %v438, %v442
        %v445 = vmul.f32 %v437, %v444
        %v446 = vsub.f32 %v429, %v445
        %v447 = vsub.f32 %v430, %v445
        %v448 = vsub.f32 %v431, %v445
        %v449 = vmul.f32 %v446, %v446
        %v450 = vmul.f32 %v447, %v447
        %v451 = vmul.f32 %v448, %v448
        %v452 = vadd.f32 %v449, %v450
        %v453 = vadd.f32 %v452, %v451
        %454 = vadd.xlane.f32.xlu0 %v453
        %v455 = vpop.xlane.xlu0 %454
        %v456 = vmul.f32 %v455, %v444
        %v457 = vadd.f32 %v456, 1e-05
        %v458 = vrsqrt.pop %v457
        %v459 = vmul.f32 %v458, %v457
        %v460 = vmul.f32 %v459, %v458
        %v461 = vmul.f32 0.5, %v460
        %v462 = vsub.f32 1.5, %v461
        %v463 = vmul.f32 %v458, %v462
        %vm464 = vweird.f32 %v457
        %vm465 = vweird.f32 %v458
        %vm466 = vmor %vm464, %vm465
        %v467 = vsel %vm466, %v458, %v463
        %v468 = vmul.f32 %v446, %v467
        %v469 = vmul.f32 %v447, %v467
        %v470 = vmul.f32 %v448, %v467
        %v472 = vperm.slane %v432, 0
        %v473 = vperm.slane %v432, 1
        %v474 = vperm.slane %v432, 2
        %v478 = vmul.f32 %v468, %v472
        %v479 = vmul.f32 %v469, %v473
        %v480 = vmul.f32 %v470, %v474
        %v482 = vperm.slane %v433, 0
        %v483 = vperm.slane %v433, 1
        %v484 = vperm.slane %v433, 2
        %v488 = vadd.f32 %v478, %v482
        %v489 = vadd.f32 %v479, %v483
        %v490 = vadd.f32 %v480, %v484
        %v491 = vld [vmem:[%s3] sm:$0xff]
        %v492 = vld [vmem:[%s3 + $0x8] sm:$0xff]
        %v493 = vld [vmem:[%s3 + $0x10] sm:$0xff]
        %v494 = vld [vmem:[%s3 + $0x18] sm:$0xff]
        %v495 = vld [vmem:[%s3 + $0x20] sm:$0xff]
        %v496 = vld [vmem:[%s3 + $0x28] sm:$0xff]
        %v497 = vld [vmem:[%s3 + $0x30] sm:$0xff]
        %v498 = vld [vmem:[%s3 + $0x38] sm:$0xff]
        %v499 = vld [vmem:[%s3 + $0x40] sm:$0xff]
        %v500 = vld [vmem:[%s3 + $0x48] sm:$0xff]
        %v501 = vld [vmem:[%s3 + $0x50] sm:$0xff]
        %v502 = vld [vmem:[%s3 + $0x58] sm:$0xff]
        %v503 = vld [vmem:[%s3 + $0x60] sm:$0xff]
        %v504 = vld [vmem:[%s3 + $0x68] sm:$0xff]
        %v505 = vld [vmem:[%s3 + $0x70] sm:$0xff]
        %v506 = vld [vmem:[%s3 + $0x78] sm:$0xff]
        %v507 = vld [vmem:[%s3 + $0x80] sm:$0xff]
        %v508 = vld [vmem:[%s3 + $0x88] sm:$0xff]
        %v509 = vld [vmem:[%s3 + $0x90] sm:$0xff]
        %v510 = vld [vmem:[%s3 + $0x98] sm:$0xff]
        %v511 = vld [vmem:[%s3 + $0xa0] sm:$0xff]
        %v512 = vld [vmem:[%s3 + $0xa8] sm:$0xff]
        %v513 = vld [vmem:[%s3 + $0xb0] sm:$0xff]
        %v514 = vld [vmem:[%s3 + $0xb8] sm:$0xff]
        %v515 = vld [vmem:[%s3 + $0xc0] sm:$0xff]
        %v516 = vld [vmem:[%s3 + $0xc8] sm:$0xff]
        %v517 = vld [vmem:[%s3 + $0xd0] sm:$0xff]
        %v518 = vld [vmem:[%s3 + $0xd8] sm:$0xff]
        %v519 = vld [vmem:[%s3 + $0xe0] sm:$0xff]
        %v520 = vld [vmem:[%s3 + $0xe8] sm:$0xff]
        %v521 = vld [vmem:[%s3 + $0xf0] sm:$0xff]
        %v522 = vld [vmem:[%s3 + $0xf8] sm:$0xff]
        %v523 = vld [vmem:[%s3 + $0x100] sm:$0xff]
        %v524 = vld [vmem:[%s3 + $0x108] sm:$0xff]
        %v525 = vld [vmem:[%s3 + $0x110] sm:$0xff]
        %v526 = vld [vmem:[%s3 + $0x118] sm:$0xff]
        %v527 = vld [vmem:[%s3 + $0x120] sm:$0xff]
        %v528 = vld [vmem:[%s3 + $0x128] sm:$0xff]
        %v529 = vld [vmem:[%s3 + $0x130] sm:$0xff]
        %v530 = vld [vmem:[%s3 + $0x138] sm:$0xff]
        %v531 = vld [vmem:[%s3 + $0x140] sm:$0xff]
        %v532 = vld [vmem:[%s3 + $0x148] sm:$0xff]
        %v533 = vld [vmem:[%s3 + $0x150] sm:$0xff]
        %v534 = vld [vmem:[%s3 + $0x158] sm:$0xff]
        %v535 = vld [vmem:[%s3 + $0x160] sm:$0xff]
        %v536 = vld [vmem:[%s3 + $0x168] sm:$0xff]
        %v537 = vld [vmem:[%s3 + $0x170] sm:$0xff]
        %v538 = vld [vmem:[%s3 + $0x178] sm:$0xff]
        %v539 = vld [vmem:[%s3 + $0x180] sm:$0xff]
        %v540 = vld [vmem:[%s3 + $0x188] sm:$0xff]
        %v541 = vld [vmem:[%s3 + $0x190] sm:$0xff]
        %v542 = vld [vmem:[%s3 + $0x198] sm:$0xff]
        %v543 = vld [vmem:[%s3 + $0x1a0] sm:$0xff]
        %v544 = vld [vmem:[%s3 + $0x1a8] sm:$0xff]
        %v545 = vld [vmem:[%s3 + $0x1b0] sm:$0xff]
        %v546 = vld [vmem:[%s3 + $0x1b8] sm:$0xff]
        %v547 = vld [vmem:[%s3 + $0x1c0] sm:$0xff]
        %v548 = vld [vmem:[%s3 + $0x1c8] sm:$0xff]
        %v549 = vld [vmem:[%s3 + $0x1d0] sm:$0xff]
        %v550 = vld [vmem:[%s3 + $0x1d8] sm:$0xff]
        %v551 = vld [vmem:[%s3 + $0x1e0] sm:$0xff]
        %v552 = vld [vmem:[%s3 + $0x1e8] sm:$0xff]
        %v553 = vld [vmem:[%s3 + $0x1f0] sm:$0xff]
        %v554 = vld [vmem:[%s3 + $0x1f8] sm:$0xff]
        %v555 = vld [vmem:[%s3 + $0x200] sm:$0xff]
        %v556 = vld [vmem:[%s3 + $0x208] sm:$0xff]
        %v557 = vld [vmem:[%s3 + $0x210] sm:$0xff]
        %v558 = vld [vmem:[%s3 + $0x218] sm:$0xff]
        %v559 = vld [vmem:[%s3 + $0x220] sm:$0xff]
        %v560 = vld [vmem:[%s3 + $0x228] sm:$0xff]
        %v561 = vld [vmem:[%s3 + $0x230] sm:$0xff]
        %v562 = vld [vmem:[%s3 + $0x238] sm:$0xff]
        %v563 = vld [vmem:[%s3 + $0x240] sm:$0xff]
        %v564 = vld [vmem:[%s3 + $0x248] sm:$0xff]
        %v565 = vld [vmem:[%s3 + $0x250] sm:$0xff]
        %v566 = vld [vmem:[%s3 + $0x258] sm:$0xff]
        %v567 = vld [vmem:[%s3 + $0x260] sm:$0xff]
        %v568 = vld [vmem:[%s3 + $0x268] sm:$0xff]
        %v569 = vld [vmem:[%s3 + $0x270] sm:$0xff]
        %v570 = vld [vmem:[%s3 + $0x278] sm:$0xff]
        %v571 = vld [vmem:[%s3 + $0x280] sm:$0xff]
        %v572 = vld [vmem:[%s3 + $0x288] sm:$0xff]
        %v573 = vld [vmem:[%s3 + $0x290] sm:$0xff]
        %v574 = vld [vmem:[%s3 + $0x298] sm:$0xff]
        %v575 = vld [vmem:[%s3 + $0x2a0] sm:$0xff]
        %v576 = vld [vmem:[%s3 + $0x2a8] sm:$0xff]
        %v577 = vld [vmem:[%s3 + $0x2b0] sm:$0xff]
        %v578 = vld [vmem:[%s3 + $0x2b8] sm:$0xff]
        %v579 = vld [vmem:[%s3 + $0x2c0] sm:$0xff]
        %v580 = vld [vmem:[%s3 + $0x2c8] sm:$0xff]
        %v581 = vld [vmem:[%s3 + $0x2d0] sm:$0xff]
        %v582 = vld [vmem:[%s3 + $0x2d8] sm:$0xff]
        %v583 = vld [vmem:[%s3 + $0x2e0] sm:$0xff]
        %v584 = vld [vmem:[%s3 + $0x2e8] sm:$0xff]
        %v585 = vld [vmem:[%s3 + $0x2f0] sm:$0xff]
        %v586 = vld [vmem:[%s3 + $0x2f8] sm:$0xff]
        %v587 = vld [vmem:[%s3 + $0x300] sm:$0xff]
        %v588 = vld [vmem:[%s3 + $0x308] sm:$0xff]
        %v589 = vld [vmem:[%s3 + $0x310] sm:$0xff]
        %v590 = vld [vmem:[%s3 + $0x318] sm:$0xff]
        %v591 = vld [vmem:[%s3 + $0x320] sm:$0xff]
        %v592 = vld [vmem:[%s3 + $0x328] sm:$0xff]
        %v593 = vld [vmem:[%s3 + $0x330] sm:$0xff]
        %v594 = vld [vmem:[%s3 + $0x338] sm:$0xff]
        %v595 = vld [vmem:[%s3 + $0x340] sm:$0xff]
        %v596 = vld [vmem:[%s3 + $0x348] sm:$0xff]
        %v597 = vld [vmem:[%s3 + $0x350] sm:$0xff]
        %v598 = vld [vmem:[%s3 + $0x358] sm:$0xff]
        %v599 = vld [vmem:[%s3 + $0x360] sm:$0xff]
        %v600 = vld [vmem:[%s3 + $0x368] sm:$0xff]
        %v601 = vld [vmem:[%s3 + $0x370] sm:$0xff]
        %v602 = vld [vmem:[%s3 + $0x378] sm:$0xff]
        %v603 = vld [vmem:[%s3 + $0x380] sm:$0xff]
        %v604 = vld [vmem:[%s3 + $0x388] sm:$0xff]
        %v605 = vld [vmem:[%s3 + $0x390] sm:$0xff]
        %v606 = vld [vmem:[%s3 + $0x398] sm:$0xff]
        %v607 = vld [vmem:[%s3 + $0x3a0] sm:$0xff]
        %v608 = vld [vmem:[%s3 + $0x3a8] sm:$0xff]
        %v609 = vld [vmem:[%s3 + $0x3b0] sm:$0xff]
        %v610 = vld [vmem:[%s3 + $0x3b8] sm:$0xff]
        %v611 = vld [vmem:[%s3 + $0x3c0] sm:$0xff]
        %v612 = vld [vmem:[%s3 + $0x3c8] sm:$0xff]
        %v613 = vld [vmem:[%s3 + $0x3d0] sm:$0xff]
        %v614 = vld [vmem:[%s3 + $0x3d8] sm:$0xff]
        %v615 = vld [vmem:[%s3 + $0x3e0] sm:$0xff]
        %v616 = vld [vmem:[%s3 + $0x3e8] sm:$0xff]
        %v617 = vld [vmem:[%s3 + $0x3f0] sm:$0xff]
        %v618 = vld [vmem:[%s3 + $0x3f8] sm:$0xff]
        %v619 = vld [vmem:[%s3 + $0x400] sm:$0xff]
        %v620 = vld [vmem:[%s3 + $0x408] sm:$0xff]
        %v621 = vld [vmem:[%s3 + $0x410] sm:$0xff]
        %v622 = vld [vmem:[%s3 + $0x418] sm:$0xff]
        %v623 = vld [vmem:[%s3 + $0x420] sm:$0xff]
        %v624 = vld [vmem:[%s3 + $0x428] sm:$0xff]
        %v625 = vld [vmem:[%s3 + $0x430] sm:$0xff]
        %v626 = vld [vmem:[%s3 + $0x438] sm:$0xff]
        %v627 = vld [vmem:[%s3 + $0x440] sm:$0xff]
        %v628 = vld [vmem:[%s3 + $0x448] sm:$0xff]
        %v629 = vld [vmem:[%s3 + $0x450] sm:$0xff]
        %v630 = vld [vmem:[%s3 + $0x458] sm:$0xff]
        %v631 = vld [vmem:[%s3 + $0x460] sm:$0xff]
        %v632 = vld [vmem:[%s3 + $0x468] sm:$0xff]
        %v633 = vld [vmem:[%s3 + $0x470] sm:$0xff]
        %v634 = vld [vmem:[%s3 + $0x478] sm:$0xff]
        %v635 = vld [vmem:[%s3 + $0x480] sm:$0xff]
        %v636 = vld [vmem:[%s3 + $0x488] sm:$0xff]
        %v637 = vld [vmem:[%s3 + $0x490] sm:$0xff]
        %v638 = vld [vmem:[%s3 + $0x498] sm:$0xff]
        %v639 = vld [vmem:[%s3 + $0x4a0] sm:$0xff]
        %v640 = vld [vmem:[%s3 + $0x4a8] sm:$0xff]
        %v641 = vld [vmem:[%s3 + $0x4b0] sm:$0xff]
        %v642 = vld [vmem:[%s3 + $0x4b8] sm:$0xff]
        %v643 = vld [vmem:[%s3 + $0x4c0] sm:$0xff]
        %v644 = vld [vmem:[%s3 + $0x4c8] sm:$0xff]
        %v645 = vld [vmem:[%s3 + $0x4d0] sm:$0xff]
        %v646 = vld [vmem:[%s3 + $0x4d8] sm:$0xff]
        %v647 = vld [vmem:[%s3 + $0x4e0] sm:$0xff]
        %v648 = vld [vmem:[%s3 + $0x4e8] sm:$0xff]
        %v649 = vld [vmem:[%s3 + $0x4f0] sm:$0xff]
        %v650 = vld [vmem:[%s3 + $0x4f8] sm:$0xff]
        %v651 = vld [vmem:[%s3 + $0x500] sm:$0xff]
        %v652 = vld [vmem:[%s3 + $0x508] sm:$0xff]
        %v653 = vld [vmem:[%s3 + $0x510] sm:$0xff]
        %v654 = vld [vmem:[%s3 + $0x518] sm:$0xff]
        %v655 = vld [vmem:[%s3 + $0x520] sm:$0xff]
        %v656 = vld [vmem:[%s3 + $0x528] sm:$0xff]
        %v657 = vld [vmem:[%s3 + $0x530] sm:$0xff]
        %v658 = vld [vmem:[%s3 + $0x538] sm:$0xff]
        %v659 = vld [vmem:[%s3 + $0x540] sm:$0xff]
        %v660 = vld [vmem:[%s3 + $0x548] sm:$0xff]
        %v661 = vld [vmem:[%s3 + $0x550] sm:$0xff]
        %v662 = vld [vmem:[%s3 + $0x558] sm:$0xff]
        %v663 = vld [vmem:[%s3 + $0x560] sm:$0xff]
        %v664 = vld [vmem:[%s3 + $0x568] sm:$0xff]
        %v665 = vld [vmem:[%s3 + $0x570] sm:$0xff]
        %v666 = vld [vmem:[%s3 + $0x578] sm:$0xff]
        %v667 = vld [vmem:[%s3 + $0x580] sm:$0xff]
        %v668 = vld [vmem:[%s3 + $0x588] sm:$0xff]
        %v669 = vld [vmem:[%s3 + $0x590] sm:$0xff]
        %v670 = vld [vmem:[%s3 + $0x598] sm:$0xff]
        %v671 = vld [vmem:[%s3 + $0x5a0] sm:$0xff]
        %v672 = vld [vmem:[%s3 + $0x5a8] sm:$0xff]
        %v673 = vld [vmem:[%s3 + $0x5b0] sm:$0xff]
        %v674 = vld [vmem:[%s3 + $0x5b8] sm:$0xff]
        %v675 = vld [vmem:[%s3 + $0x5c0] sm:$0xff]
        %v676 = vld [vmem:[%s3 + $0x5c8] sm:$0xff]
        %v677 = vld [vmem:[%s3 + $0x5d0] sm:$0xff]
        %v678 = vld [vmem:[%s3 + $0x5d8] sm:$0xff]
        %v679 = vld [vmem:[%s3 + $0x5e0] sm:$0xff]
        %v680 = vld [vmem:[%s3 + $0x5e8] sm:$0xff]
        %v681 = vld [vmem:[%s3 + $0x5f0] sm:$0xff]
        %v682 = vld [vmem:[%s3 + $0x5f8] sm:$0xff]
        %v683 = vld [vmem:[%s3 + $0x600] sm:$0xff]
        %v684 = vld [vmem:[%s3 + $0x608] sm:$0xff]
        %v685 = vld [vmem:[%s3 + $0x610] sm:$0xff]
        %v686 = vld [vmem:[%s3 + $0x618] sm:$0xff]
        %v687 = vld [vmem:[%s3 + $0x620] sm:$0xff]
        %v688 = vld [vmem:[%s3 + $0x628] sm:$0xff]
        %v689 = vld [vmem:[%s3 + $0x630] sm:$0xff]
        %v690 = vld [vmem:[%s3 + $0x638] sm:$0xff]
        %v691 = vld [vmem:[%s3 + $0x640] sm:$0xff]
        %v692 = vld [vmem:[%s3 + $0x648] sm:$0xff]
        %v693 = vld [vmem:[%s3 + $0x650] sm:$0xff]
        %v694 = vld [vmem:[%s3 + $0x658] sm:$0xff]
        %v695 = vld [vmem:[%s3 + $0x660] sm:$0xff]
        %v696 = vld [vmem:[%s3 + $0x668] sm:$0xff]
        %v697 = vld [vmem:[%s3 + $0x670] sm:$0xff]
        %v698 = vld [vmem:[%s3 + $0x678] sm:$0xff]
        %v699 = vld [vmem:[%s3 + $0x680] sm:$0xff]
        %v700 = vld [vmem:[%s3 + $0x688] sm:$0xff]
        %v701 = vld [vmem:[%s3 + $0x690] sm:$0xff]
        %v702 = vld [vmem:[%s3 + $0x698] sm:$0xff]
        %v703 = vld [vmem:[%s3 + $0x6a0] sm:$0xff]
        %v704 = vld [vmem:[%s3 + $0x6a8] sm:$0xff]
        %v705 = vld [vmem:[%s3 + $0x6b0] sm:$0xff]
        %v706 = vld [vmem:[%s3 + $0x6b8] sm:$0xff]
        %v707 = vld [vmem:[%s3 + $0x6c0] sm:$0xff]
        %v708 = vld [vmem:[%s3 + $0x6c8] sm:$0xff]
        %v709 = vld [vmem:[%s3 + $0x6d0] sm:$0xff]
        %v710 = vld [vmem:[%s3 + $0x6d8] sm:$0xff]
        %v711 = vld [vmem:[%s3 + $0x6e0] sm:$0xff]
        %v712 = vld [vmem:[%s3 + $0x6e8] sm:$0xff]
        %v713 = vld [vmem:[%s3 + $0x6f0] sm:$0xff]
        %v714 = vld [vmem:[%s3 + $0x6f8] sm:$0xff]
        %v715 = vld [vmem:[%s3 + $0x700] sm:$0xff]
        %v716 = vld [vmem:[%s3 + $0x708] sm:$0xff]
        %v717 = vld [vmem:[%s3 + $0x710] sm:$0xff]
        %v718 = vld [vmem:[%s3 + $0x718] sm:$0xff]
        %v719 = vld [vmem:[%s3 + $0x720] sm:$0xff]
        %v720 = vld [vmem:[%s3 + $0x728] sm:$0xff]
        %v721 = vld [vmem:[%s3 + $0x730] sm:$0xff]
        %v722 = vld [vmem:[%s3 + $0x738] sm:$0xff]
        %v723 = vld [vmem:[%s3 + $0x740] sm:$0xff]
        %v724 = vld [vmem:[%s3 + $0x748] sm:$0xff]
        %v725 = vld [vmem:[%s3 + $0x750] sm:$0xff]
        %v726 = vld [vmem:[%s3 + $0x758] sm:$0xff]
        %v727 = vld [vmem:[%s3 + $0x760] sm:$0xff]
        %v728 = vld [vmem:[%s3 + $0x768] sm:$0xff]
        %v729 = vld [vmem:[%s3 + $0x770] sm:$0xff]
        %v730 = vld [vmem:[%s3 + $0x778] sm:$0xff]
        %v731 = vld [vmem:[%s3 + $0x780] sm:$0xff]
        %v732 = vld [vmem:[%s3 + $0x788] sm:$0xff]
        %v733 = vld [vmem:[%s3 + $0x790] sm:$0xff]
        %v734 = vld [vmem:[%s3 + $0x798] sm:$0xff]
        %v735 = vld [vmem:[%s3 + $0x7a0] sm:$0xff]
        %v736 = vld [vmem:[%s3 + $0x7a8] sm:$0xff]
        %v737 = vld [vmem:[%s3 + $0x7b0] sm:$0xff]
        %v738 = vld [vmem:[%s3 + $0x7b8] sm:$0xff]
        %v739 = vld [vmem:[%s3 + $0x7c0] sm:$0xff]
        %v740 = vld [vmem:[%s3 + $0x7c8] sm:$0xff]
        %v741 = vld [vmem:[%s3 + $0x7d0] sm:$0xff]
        %v742 = vld [vmem:[%s3 + $0x7d8] sm:$0xff]
        %v743 = vld [vmem:[%s3 + $0x7e0] sm:$0xff]
        %v744 = vld [vmem:[%s3 + $0x7e8] sm:$0xff]
        %v745 = vld [vmem:[%s3 + $0x7f0] sm:$0xff]
        %v746 = vld [vmem:[%s3 + $0x7f8] sm:$0xff]
        %v747 = vld [vmem:[%s3 + $0x800] sm:$0xff]
        %v748 = vld [vmem:[%s3 + $0x808] sm:$0xff]
        %v749 = vld [vmem:[%s3 + $0x810] sm:$0xff]
        %v750 = vld [vmem:[%s3 + $0x818] sm:$0xff]
        %v751 = vld [vmem:[%s3 + $0x820] sm:$0xff]
        %v752 = vld [vmem:[%s3 + $0x828] sm:$0xff]
        %v753 = vld [vmem:[%s3 + $0x830] sm:$0xff]
        %v754 = vld [vmem:[%s3 + $0x838] sm:$0xff]
        %v755 = vld [vmem:[%s3 + $0x840] sm:$0xff]
        %v756 = vld [vmem:[%s3 + $0x848] sm:$0xff]
        %v757 = vld [vmem:[%s3 + $0x850] sm:$0xff]
        %v758 = vld [vmem:[%s3 + $0x858] sm:$0xff]
        %v759 = vld [vmem:[%s3 + $0x860] sm:$0xff]
        %v760 = vld [vmem:[%s3 + $0x868] sm:$0xff]
        %v761 = vld [vmem:[%s3 + $0x870] sm:$0xff]
        %v762 = vld [vmem:[%s3 + $0x878] sm:$0xff]
        %v763 = vld [vmem:[%s3 + $0x880] sm:$0xff]
        %v764 = vld [vmem:[%s3 + $0x888] sm:$0xff]
        %v765 = vld [vmem:[%s3 + $0x890] sm:$0xff]
        %v766 = vld [vmem:[%s3 + $0x898] sm:$0xff]
        %v767 = vld [vmem:[%s3 + $0x8a0] sm:$0xff]
        %v768 = vld [vmem:[%s3 + $0x8a8] sm:$0xff]
        %v769 = vld [vmem:[%s3 + $0x8b0] sm:$0xff]
        %v770 = vld [vmem:[%s3 + $0x8b8] sm:$0xff]
        %v771 = vld [vmem:[%s3 + $0x8c0] sm:$0xff]
        %v772 = vld [vmem:[%s3 + $0x8c8] sm:$0xff]
        %v773 = vld [vmem:[%s3 + $0x8d0] sm:$0xff]
        %v774 = vld [vmem:[%s3 + $0x8d8] sm:$0xff]
        %v775 = vld [vmem:[%s3 + $0x8e0] sm:$0xff]
        %v776 = vld [vmem:[%s3 + $0x8e8] sm:$0xff]
        %v777 = vld [vmem:[%s3 + $0x8f0] sm:$0xff]
        %v778 = vld [vmem:[%s3 + $0x8f8] sm:$0xff]
        %v779 = vld [vmem:[%s3 + $0x900] sm:$0xff]
        %v780 = vld [vmem:[%s3 + $0x908] sm:$0xff]
        %v781 = vld [vmem:[%s3 + $0x910] sm:$0xff]
        %v782 = vld [vmem:[%s3 + $0x918] sm:$0xff]
        %v783 = vld [vmem:[%s3 + $0x920] sm:$0xff]
        %v784 = vld [vmem:[%s3 + $0x928] sm:$0xff]
        %v785 = vld [vmem:[%s3 + $0x930] sm:$0xff]
        %v786 = vld [vmem:[%s3 + $0x938] sm:$0xff]
        %v787 = vld [vmem:[%s3 + $0x940] sm:$0xff]
        %v788 = vld [vmem:[%s3 + $0x948] sm:$0xff]
        %v789 = vld [vmem:[%s3 + $0x950] sm:$0xff]
        %v790 = vld [vmem:[%s3 + $0x958] sm:$0xff]
        %v791 = vld [vmem:[%s3 + $0x960] sm:$0xff]
        %v792 = vld [vmem:[%s3 + $0x968] sm:$0xff]
        %v793 = vld [vmem:[%s3 + $0x970] sm:$0xff]
        %v794 = vld [vmem:[%s3 + $0x978] sm:$0xff]
        %v795 = vld [vmem:[%s3 + $0x980] sm:$0xff]
        %v796 = vld [vmem:[%s3 + $0x988] sm:$0xff]
        %v797 = vld [vmem:[%s3 + $0x990] sm:$0xff]
        %v798 = vld [vmem:[%s3 + $0x998] sm:$0xff]
        %v799 = vld [vmem:[%s3 + $0x9a0] sm:$0xff]
        %v800 = vld [vmem:[%s3 + $0x9a8] sm:$0xff]
        %v801 = vld [vmem:[%s3 + $0x9b0] sm:$0xff]
        %v802 = vld [vmem:[%s3 + $0x9b8] sm:$0xff]
        %v803 = vld [vmem:[%s3 + $0x9c0] sm:$0xff]
        %v804 = vld [vmem:[%s3 + $0x9c8] sm:$0xff]
        %v805 = vld [vmem:[%s3 + $0x9d0] sm:$0xff]
        %v806 = vld [vmem:[%s3 + $0x9d8] sm:$0xff]
        %v807 = vld [vmem:[%s3 + $0x9e0] sm:$0xff]
        %v808 = vld [vmem:[%s3 + $0x9e8] sm:$0xff]
        %v809 = vld [vmem:[%s3 + $0x9f0] sm:$0xff]
        %v810 = vld [vmem:[%s3 + $0x9f8] sm:$0xff]
        %v811 = vld [vmem:[%s3 + $0xa00] sm:$0xff]
        %v812 = vld [vmem:[%s3 + $0xa08] sm:$0xff]
        %v813 = vld [vmem:[%s3 + $0xa10] sm:$0xff]
        %v814 = vld [vmem:[%s3 + $0xa18] sm:$0xff]
        %v815 = vld [vmem:[%s3 + $0xa20] sm:$0xff]
        %v816 = vld [vmem:[%s3 + $0xa28] sm:$0xff]
        %v817 = vld [vmem:[%s3 + $0xa30] sm:$0xff]
        %v818 = vld [vmem:[%s3 + $0xa38] sm:$0xff]
        %v819 = vld [vmem:[%s3 + $0xa40] sm:$0xff]
        %v820 = vld [vmem:[%s3 + $0xa48] sm:$0xff]
        %v821 = vld [vmem:[%s3 + $0xa50] sm:$0xff]
        %v822 = vld [vmem:[%s3 + $0xa58] sm:$0xff]
        %v823 = vld [vmem:[%s3 + $0xa60] sm:$0xff]
        %v824 = vld [vmem:[%s3 + $0xa68] sm:$0xff]
        %v825 = vld [vmem:[%s3 + $0xa70] sm:$0xff]
        %v826 = vld [vmem:[%s3 + $0xa78] sm:$0xff]
        %v827 = vld [vmem:[%s3 + $0xa80] sm:$0xff]
        %v828 = vld [vmem:[%s3 + $0xa88] sm:$0xff]
        %v829 = vld [vmem:[%s3 + $0xa90] sm:$0xff]
        %v830 = vld [vmem:[%s3 + $0xa98] sm:$0xff]
        %v831 = vld [vmem:[%s3 + $0xaa0] sm:$0xff]
        %v832 = vld [vmem:[%s3 + $0xaa8] sm:$0xff]
        %v833 = vld [vmem:[%s3 + $0xab0] sm:$0xff]
        %v834 = vld [vmem:[%s3 + $0xab8] sm:$0xff]
        %v835 = vld [vmem:[%s3 + $0xac0] sm:$0xff]
        %v836 = vld [vmem:[%s3 + $0xac8] sm:$0xff]
        %v837 = vld [vmem:[%s3 + $0xad0] sm:$0xff]
        %v838 = vld [vmem:[%s3 + $0xad8] sm:$0xff]
        %v839 = vld [vmem:[%s3 + $0xae0] sm:$0xff]
        %v840 = vld [vmem:[%s3 + $0xae8] sm:$0xff]
        %v841 = vld [vmem:[%s3 + $0xaf0] sm:$0xff]
        %v842 = vld [vmem:[%s3 + $0xaf8] sm:$0xff]
        %v843 = vld [vmem:[%s3 + $0xb00] sm:$0xff]
        %v844 = vld [vmem:[%s3 + $0xb08] sm:$0xff]
        %v845 = vld [vmem:[%s3 + $0xb10] sm:$0xff]
        %v846 = vld [vmem:[%s3 + $0xb18] sm:$0xff]
        %v847 = vld [vmem:[%s3 + $0xb20] sm:$0xff]
        %v848 = vld [vmem:[%s3 + $0xb28] sm:$0xff]
        %v849 = vld [vmem:[%s3 + $0xb30] sm:$0xff]
        %v850 = vld [vmem:[%s3 + $0xb38] sm:$0xff]
        %v851 = vld [vmem:[%s3 + $0xb40] sm:$0xff]
        %v852 = vld [vmem:[%s3 + $0xb48] sm:$0xff]
        %v853 = vld [vmem:[%s3 + $0xb50] sm:$0xff]
        %v854 = vld [vmem:[%s3 + $0xb58] sm:$0xff]
        %v855 = vld [vmem:[%s3 + $0xb60] sm:$0xff]
        %v856 = vld [vmem:[%s3 + $0xb68] sm:$0xff]
        %v857 = vld [vmem:[%s3 + $0xb70] sm:$0xff]
        %v858 = vld [vmem:[%s3 + $0xb78] sm:$0xff]
        %v859 = vld [vmem:[%s3 + $0xb80] sm:$0xff]
        %v860 = vld [vmem:[%s3 + $0xb88] sm:$0xff]
        %v861 = vld [vmem:[%s3 + $0xb90] sm:$0xff]
        %v862 = vld [vmem:[%s3 + $0xb98] sm:$0xff]
        %v863 = vld [vmem:[%s3 + $0xba0] sm:$0xff]
        %v864 = vld [vmem:[%s3 + $0xba8] sm:$0xff]
        %v865 = vld [vmem:[%s3 + $0xbb0] sm:$0xff]
        %v866 = vld [vmem:[%s3 + $0xbb8] sm:$0xff]
        %v867 = vld [vmem:[%s3 + $0xbc0] sm:$0xff]
        %v868 = vld [vmem:[%s3 + $0xbc8] sm:$0xff]
        %v869 = vld [vmem:[%s3 + $0xbd0] sm:$0xff]
        %v870 = vld [vmem:[%s3 + $0xbd8] sm:$0xff]
        %v871 = vld [vmem:[%s3 + $0xbe0] sm:$0xff]
        %v872 = vld [vmem:[%s3 + $0xbe8] sm:$0xff]
        %v873 = vld [vmem:[%s3 + $0xbf0] sm:$0xff]
        %v874 = vld [vmem:[%s3 + $0xbf8] sm:$0xff]
        %v875 = vld [vmem:[%s3 + $0xc00] sm:$0xff]
        %v876 = vld [vmem:[%s3 + $0xc08] sm:$0xff]
        %v877 = vld [vmem:[%s3 + $0xc10] sm:$0xff]
        %v878 = vld [vmem:[%s3 + $0xc18] sm:$0xff]
        %v879 = vld [vmem:[%s3 + $0xc20] sm:$0xff]
        %v880 = vld [vmem:[%s3 + $0xc28] sm:$0xff]
        %v881 = vld [vmem:[%s3 + $0xc30] sm:$0xff]
        %v882 = vld [vmem:[%s3 + $0xc38] sm:$0xff]
        %v883 = vld [vmem:[%s3 + $0xc40] sm:$0xff]
        %v884 = vld [vmem:[%s3 + $0xc48] sm:$0xff]
        %v885 = vld [vmem:[%s3 + $0xc50] sm:$0xff]
        %v886 = vld [vmem:[%s3 + $0xc58] sm:$0xff]
        %v887 = vld [vmem:[%s3 + $0xc60] sm:$0xff]
        %v888 = vld [vmem:[%s3 + $0xc68] sm:$0xff]
        %v889 = vld [vmem:[%s3 + $0xc70] sm:$0xff]
        %v890 = vld [vmem:[%s3 + $0xc78] sm:$0xff]
        %v891 = vld [vmem:[%s3 + $0xc80] sm:$0xff]
        %v892 = vld [vmem:[%s3 + $0xc88] sm:$0xff]
        %v893 = vld [vmem:[%s3 + $0xc90] sm:$0xff]
        %v894 = vld [vmem:[%s3 + $0xc98] sm:$0xff]
        %v895 = vld [vmem:[%s3 + $0xca0] sm:$0xff]
        %v896 = vld [vmem:[%s3 + $0xca8] sm:$0xff]
        %v897 = vld [vmem:[%s3 + $0xcb0] sm:$0xff]
        %v898 = vld [vmem:[%s3 + $0xcb8] sm:$0xff]
        %v899 = vld [vmem:[%s3 + $0xcc0] sm:$0xff]
        %v900 = vld [vmem:[%s3 + $0xcc8] sm:$0xff]
        %v901 = vld [vmem:[%s3 + $0xcd0] sm:$0xff]
        %v902 = vld [vmem:[%s3 + $0xcd8] sm:$0xff]
        %v903 = vld [vmem:[%s3 + $0xce0] sm:$0xff]
        %v904 = vld [vmem:[%s3 + $0xce8] sm:$0xff]
        %v905 = vld [vmem:[%s3 + $0xcf0] sm:$0xff]
        %v906 = vld [vmem:[%s3 + $0xcf8] sm:$0xff]
        %v907 = vld [vmem:[%s3 + $0xd00] sm:$0xff]
        %v908 = vld [vmem:[%s3 + $0xd08] sm:$0xff]
        %v909 = vld [vmem:[%s3 + $0xd10] sm:$0xff]
        %v910 = vld [vmem:[%s3 + $0xd18] sm:$0xff]
        %v911 = vld [vmem:[%s3 + $0xd20] sm:$0xff]
        %v912 = vld [vmem:[%s3 + $0xd28] sm:$0xff]
        %v913 = vld [vmem:[%s3 + $0xd30] sm:$0xff]
        %v914 = vld [vmem:[%s3 + $0xd38] sm:$0xff]
        %v915 = vld [vmem:[%s3 + $0xd40] sm:$0xff]
        %v916 = vld [vmem:[%s3 + $0xd48] sm:$0xff]
        %v917 = vld [vmem:[%s3 + $0xd50] sm:$0xff]
        %v918 = vld [vmem:[%s3 + $0xd58] sm:$0xff]
        %v919 = vld [vmem:[%s3 + $0xd60] sm:$0xff]
        %v920 = vld [vmem:[%s3 + $0xd68] sm:$0xff]
        %v921 = vld [vmem:[%s3 + $0xd70] sm:$0xff]
        %v922 = vld [vmem:[%s3 + $0xd78] sm:$0xff]
        %923 = vmatpush.msra.mxu0 %v626
        %924 = vmatpush.msra.mxu0 %v617
        %925 = vmatpush.msra.mxu0 %v608
        %926 = vmatpush.msra.mxu0 %v599
        %927 = vmatpush.msra.mxu0 %v590
        %928 = vmatpush.msra.mxu0 %v581
        %929 = vmatpush.msra.mxu0 %v572
        %930 = vmatpush.msra.mxu0 %v563
        %931 = vmatpush.msra.mxu0 %v554
        %932 = vmatpush.msra.mxu0 %v545
        %933 = vmatpush.msra.mxu0 %v536
        %934 = vmatpush.msra.mxu0 %v527
        %935 = vmatpush.msra.mxu0 %v518
        %936 = vmatpush.msra.mxu0 %v509
        %937 = vmatpush.msra.mxu0 %v500
        %938 = vmatpush.msra.mxu0 %v491
        %939 = vmatmul.f32.gmra.mxu0 %v488
        %v940 = vpop.f32.mrf.mxu0
        %v941 = vadd.f32 0.0, %v940
        %942 = vdwg.mxu0
        %943 = vmatpush.msra.mxu0 %v770
        %944 = vmatpush.msra.mxu0 %v761
        %945 = vmatpush.msra.mxu0 %v752
        %946 = vmatpush.msra.mxu0 %v743
        %947 = vmatpush.msra.mxu0 %v734
        %948 = vmatpush.msra.mxu0 %v725
        %949 = vmatpush.msra.mxu0 %v716
        %950 = vmatpush.msra.mxu0 %v707
        %951 = vmatpush.msra.mxu0 %v698
        %952 = vmatpush.msra.mxu0 %v689
        %953 = vmatpush.msra.mxu0 %v680
        %954 = vmatpush.msra.mxu0 %v671
        %955 = vmatpush.msra.mxu0 %v662
        %956 = vmatpush.msra.mxu0 %v653
        %957 = vmatpush.msra.mxu0 %v644
        %958 = vmatpush.msra.mxu0 %v635
        %959 = vmatmul.f32.gmra.mxu0 %v489
        %v960 = vpop.f32.mrf.mxu0
        %v961 = vadd.f32 %v941, %v960
        %962 = vdwg.mxu0
        %963 = vmatpush.msra.mxu0 %v914
        %964 = vmatpush.msra.mxu0 %v905
        %965 = vmatpush.msra.mxu0 %v896
        %966 = vmatpush.msra.mxu0 %v887
        %967 = vmatpush.msra.mxu0 %v878
        %968 = vmatpush.msra.mxu0 %v869
        %969 = vmatpush.msra.mxu0 %v860
        %970 = vmatpush.msra.mxu0 %v851
        %971 = vmatpush.msra.mxu0 %v842
        %972 = vmatpush.msra.mxu0 %v833
        %973 = vmatpush.msra.mxu0 %v824
        %974 = vmatpush.msra.mxu0 %v815
        %975 = vmatpush.msra.mxu0 %v806
        %976 = vmatpush.msra.mxu0 %v797
        %977 = vmatpush.msra.mxu0 %v788
        %978 = vmatpush.msra.mxu0 %v779
        %979 = vmatmul.f32.gmra.mxu0 %v490
        %v980 = vpop.f32.mrf.mxu0
        %v981 = vadd.f32 %v961, %v980
        %982 = vdwg.mxu0
        %983 = vmatpush.msra.mxu0 %v627
        %984 = vmatpush.msra.mxu0 %v618
        %985 = vmatpush.msra.mxu0 %v609
        %986 = vmatpush.msra.mxu0 %v600
        %987 = vmatpush.msra.mxu0 %v591
        %988 = vmatpush.msra.mxu0 %v582
        %989 = vmatpush.msra.mxu0 %v573
        %990 = vmatpush.msra.mxu0 %v564
        %991 = vmatpush.msra.mxu0 %v555
        %992 = vmatpush.msra.mxu0 %v546
        %993 = vmatpush.msra.mxu0 %v537
        %994 = vmatpush.msra.mxu0 %v528
        %995 = vmatpush.msra.mxu0 %v519
        %996 = vmatpush.msra.mxu0 %v510
        %997 = vmatpush.msra.mxu0 %v501
        %998 = vmatpush.msra.mxu0 %v492
        %999 = vmatmul.f32.gmra.mxu0 %v488
        %v1000 = vpop.f32.mrf.mxu0
        %v1001 = vadd.f32 0.0, %v1000
        %1002 = vdwg.mxu0
        %1003 = vmatpush.msra.mxu0 %v771
        %1004 = vmatpush.msra.mxu0 %v762
        %1005 = vmatpush.msra.mxu0 %v753
        %1006 = vmatpush.msra.mxu0 %v744
        %1007 = vmatpush.msra.mxu0 %v735
        %1008 = vmatpush.msra.mxu0 %v726
        %1009 = vmatpush.msra.mxu0 %v717
        %1010 = vmatpush.msra.mxu0 %v708
        %1011 = vmatpush.msra.mxu0 %v699
        %1012 = vmatpush.msra.mxu0 %v690
        %1013 = vmatpush.msra.mxu0 %v681
        %1014 = vmatpush.msra.mxu0 %v672
        %1015 = vmatpush.msra.mxu0 %v663
        %1016 = vmatpush.msra.mxu0 %v654
        %1017 = vmatpush.msra.mxu0 %v645
        %1018 = vmatpush.msra.mxu0 %v636
        %1019 = vmatmul.f32.gmra.mxu0 %v489
        %v1020 = vpop.f32.mrf.mxu0
        %v1021 = vadd.f32 %v1001, %v1020
        %1022 = vdwg.mxu0
        %1023 = vmatpush.msra.mxu0 %v915
        %1024 = vmatpush.msra.mxu0 %v906
        %1025 = vmatpush.msra.mxu0 %v897
        %1026 = vmatpush.msra.mxu0 %v888
        %1027 = vmatpush.msra.mxu0 %v879
        %1028 = vmatpush.msra.mxu0 %v870
        %1029 = vmatpush.msra.mxu0 %v861
        %1030 = vmatpush.msra.mxu0 %v852
        %1031 = vmatpush.msra.mxu0 %v843
        %1032 = vmatpush.msra.mxu0 %v834
        %1033 = vmatpush.msra.mxu0 %v825
        %1034 = vmatpush.msra.mxu0 %v816
        %1035 = vmatpush.msra.mxu0 %v807
        %1036 = vmatpush.msra.mxu0 %v798
        %1037 = vmatpush.msra.mxu0 %v789
        %1038 = vmatpush.msra.mxu0 %v780
        %1039 = vmatmul.f32.gmra.mxu0 %v490
        %v1040 = vpop.f32.mrf.mxu0
        %v1041 = vadd.f32 %v1021, %v1040
        %1042 = vdwg.mxu0
        %1043 = vmatpush.msra.mxu0 %v628
        %1044 = vmatpush.msra.mxu0 %v619
        %1045 = vmatpush.msra.mxu0 %v610
        %1046 = vmatpush.msra.mxu0 %v601
        %1047 = vmatpush.msra.mxu0 %v592
        %1048 = vmatpush.msra.mxu0 %v583
        %1049 = vmatpush.msra.mxu0 %v574
        %1050 = vmatpush.msra.mxu0 %v565
        %1051 = vmatpush.msra.mxu0 %v556
        %1052 = vmatpush.msra.mxu0 %v547
        %1053 = vmatpush.msra.mxu0 %v538
        %1054 = vmatpush.msra.mxu0 %v529
        %1055 = vmatpush.msra.mxu0 %v520
        %1056 = vmatpush.msra.mxu0 %v511
        %1057 = vmatpush.msra.mxu0 %v502
        %1058 = vmatpush.msra.mxu0 %v493
        %1059 = vmatmul.f32.gmra.mxu0 %v488
        %v1060 = vpop.f32.mrf.mxu0
        %v1061 = vadd.f32 0.0, %v1060
        %1062 = vdwg.mxu0
        %1063 = vmatpush.msra.mxu0 %v772
        %1064 = vmatpush.msra.mxu0 %v763
        %1065 = vmatpush.msra.mxu0 %v754
        %1066 = vmatpush.msra.mxu0 %v745
        %1067 = vmatpush.msra.mxu0 %v736
        %1068 = vmatpush.msra.mxu0 %v727
        %1069 = vmatpush.msra.mxu0 %v718
        %1070 = vmatpush.msra.mxu0 %v709
        %1071 = vmatpush.msra.mxu0 %v700
        %1072 = vmatpush.msra.mxu0 %v691
        %1073 = vmatpush.msra.mxu0 %v682
        %1074 = vmatpush.msra.mxu0 %v673
        %1075 = vmatpush.msra.mxu0 %v664
        %1076 = vmatpush.msra.mxu0 %v655
        %1077 = vmatpush.msra.mxu0 %v646
        %1078 = vmatpush.msra.mxu0 %v637
        %1079 = vmatmul.f32.gmra.mxu0 %v489
        %v1080 = vpop.f32.mrf.mxu0
        %v1081 = vadd.f32 %v1061, %v1080
        %1082 = vdwg.mxu0
        %1083 = vmatpush.msra.mxu0 %v916
        %1084 = vmatpush.msra.mxu0 %v907
        %1085 = vmatpush.msra.mxu0 %v898
        %1086 = vmatpush.msra.mxu0 %v889
        %1087 = vmatpush.msra.mxu0 %v880
        %1088 = vmatpush.msra.mxu0 %v871
        %1089 = vmatpush.msra.mxu0 %v862
        %1090 = vmatpush.msra.mxu0 %v853
        %1091 = vmatpush.msra.mxu0 %v844
        %1092 = vmatpush.msra.mxu0 %v835
        %1093 = vmatpush.msra.mxu0 %v826
        %1094 = vmatpush.msra.mxu0 %v817
        %1095 = vmatpush.msra.mxu0 %v808
        %1096 = vmatpush.msra.mxu0 %v799
        %1097 = vmatpush.msra.mxu0 %v790
        %1098 = vmatpush.msra.mxu0 %v781
        %1099 = vmatmul.f32.gmra.mxu0 %v490
        %v1100 = vpop.f32.mrf.mxu0
        %v1101 = vadd.f32 %v1081, %v1100
        %1102 = vdwg.mxu0
        %1103 = vmatpush.msra.mxu0 %v629
        %1104 = vmatpush.msra.mxu0 %v620
        %1105 = vmatpush.msra.mxu0 %v611
        %1106 = vmatpush.msra.mxu0 %v602
        %1107 = vmatpush.msra.mxu0 %v593
        %1108 = vmatpush.msra.mxu0 %v584
        %1109 = vmatpush.msra.mxu0 %v575
        %1110 = vmatpush.msra.mxu0 %v566
        %1111 = vmatpush.msra.mxu0 %v557
        %1112 = vmatpush.msra.mxu0 %v548
        %1113 = vmatpush.msra.mxu0 %v539
        %1114 = vmatpush.msra.mxu0 %v530
        %1115 = vmatpush.msra.mxu0 %v521
        %1116 = vmatpush.msra.mxu0 %v512
        %1117 = vmatpush.msra.mxu0 %v503
        %1118 = vmatpush.msra.mxu0 %v494
        %1119 = vmatmul.f32.gmra.mxu0 %v488
        %v1120 = vpop.f32.mrf.mxu0
        %v1121 = vadd.f32 0.0, %v1120
        %1122 = vdwg.mxu0
        %1123 = vmatpush.msra.mxu0 %v773
        %1124 = vmatpush.msra.mxu0 %v764
        %1125 = vmatpush.msra.mxu0 %v755
        %1126 = vmatpush.msra.mxu0 %v746
        %1127 = vmatpush.msra.mxu0 %v737
        %1128 = vmatpush.msra.mxu0 %v728
        %1129 = vmatpush.msra.mxu0 %v719
        %1130 = vmatpush.msra.mxu0 %v710
        %1131 = vmatpush.msra.mxu0 %v701
        %1132 = vmatpush.msra.mxu0 %v692
        %1133 = vmatpush.msra.mxu0 %v683
        %1134 = vmatpush.msra.mxu0 %v674
        %1135 = vmatpush.msra.mxu0 %v665
        %1136 = vmatpush.msra.mxu0 %v656
        %1137 = vmatpush.msra.mxu0 %v647
        %1138 = vmatpush.msra.mxu0 %v638
        %1139 = vmatmul.f32.gmra.mxu0 %v489
        %v1140 = vpop.f32.mrf.mxu0
        %v1141 = vadd.f32 %v1121, %v1140
        %1142 = vdwg.mxu0
        %1143 = vmatpush.msra.mxu0 %v917
        %1144 = vmatpush.msra.mxu0 %v908
        %1145 = vmatpush.msra.mxu0 %v899
        %1146 = vmatpush.msra.mxu0 %v890
        %1147 = vmatpush.msra.mxu0 %v881
        %1148 = vmatpush.msra.mxu0 %v872
        %1149 = vmatpush.msra.mxu0 %v863
        %1150 = vmatpush.msra.mxu0 %v854
        %1151 = vmatpush.msra.mxu0 %v845
        %1152 = vmatpush.msra.mxu0 %v836
        %1153 = vmatpush.msra.mxu0 %v827
        %1154 = vmatpush.msra.mxu0 %v818
        %1155 = vmatpush.msra.mxu0 %v809
        %1156 = vmatpush.msra.mxu0 %v800
        %1157 = vmatpush.msra.mxu0 %v791
        %1158 = vmatpush.msra.mxu0 %v782
        %1159 = vmatmul.f32.gmra.mxu0 %v490
        %v1160 = vpop.f32.mrf.mxu0
        %v1161 = vadd.f32 %v1141, %v1160
        %1162 = vdwg.mxu0
        %1163 = vmatpush.msra.mxu0 %v630
        %1164 = vmatpush.msra.mxu0 %v621
        %1165 = vmatpush.msra.mxu0 %v612
        %1166 = vmatpush.msra.mxu0 %v603
        %1167 = vmatpush.msra.mxu0 %v594
        %1168 = vmatpush.msra.mxu0 %v585
        %1169 = vmatpush.msra.mxu0 %v576
        %1170 = vmatpush.msra.mxu0 %v567
        %1171 = vmatpush.msra.mxu0 %v558
        %1172 = vmatpush.msra.mxu0 %v549
        %1173 = vmatpush.msra.mxu0 %v540
        %1174 = vmatpush.msra.mxu0 %v531
        %1175 = vmatpush.msra.mxu0 %v522
        %1176 = vmatpush.msra.mxu0 %v513
        %1177 = vmatpush.msra.mxu0 %v504
        %1178 = vmatpush.msra.mxu0 %v495
        %1179 = vmatmul.f32.gmra.mxu0 %v488
        %v1180 = vpop.f32.mrf.mxu0
        %v1181 = vadd.f32 0.0, %v1180
        %1182 = vdwg.mxu0
        %1183 = vmatpush.msra.mxu0 %v774
        %1184 = vmatpush.msra.mxu0 %v765
        %1185 = vmatpush.msra.mxu0 %v756
        %1186 = vmatpush.msra.mxu0 %v747
        %1187 = vmatpush.msra.mxu0 %v738
        %1188 = vmatpush.msra.mxu0 %v729
        %1189 = vmatpush.msra.mxu0 %v720
        %1190 = vmatpush.msra.mxu0 %v711
        %1191 = vmatpush.msra.mxu0 %v702
        %1192 = vmatpush.msra.mxu0 %v693
        %1193 = vmatpush.msra.mxu0 %v684
        %1194 = vmatpush.msra.mxu0 %v675
        %1195 = vmatpush.msra.mxu0 %v666
        %1196 = vmatpush.msra.mxu0 %v657
        %1197 = vmatpush.msra.mxu0 %v648
        %1198 = vmatpush.msra.mxu0 %v639
        %1199 = vmatmul.f32.gmra.mxu0 %v489
        %v1200 = vpop.f32.mrf.mxu0
        %v1201 = vadd.f32 %v1181, %v1200
        %1202 = vdwg.mxu0
        %1203 = vmatpush.msra.mxu0 %v918
        %1204 = vmatpush.msra.mxu0 %v909
        %1205 = vmatpush.msra.mxu0 %v900
        %1206 = vmatpush.msra.mxu0 %v891
        %1207 = vmatpush.msra.mxu0 %v882
        %1208 = vmatpush.msra.mxu0 %v873
        %1209 = vmatpush.msra.mxu0 %v864
        %1210 = vmatpush.msra.mxu0 %v855
        %1211 = vmatpush.msra.mxu0 %v846
        %1212 = vmatpush.msra.mxu0 %v837
        %1213 = vmatpush.msra.mxu0 %v828
        %1214 = vmatpush.msra.mxu0 %v819
        %1215 = vmatpush.msra.mxu0 %v810
        %1216 = vmatpush.msra.mxu0 %v801
        %1217 = vmatpush.msra.mxu0 %v792
        %1218 = vmatpush.msra.mxu0 %v783
        %1219 = vmatmul.f32.gmra.mxu0 %v490
        %v1220 = vpop.f32.mrf.mxu0
        %v1221 = vadd.f32 %v1201, %v1220
        %1222 = vdwg.mxu0
        %1223 = vmatpush.msra.mxu0 %v631
        %1224 = vmatpush.msra.mxu0 %v622
        %1225 = vmatpush.msra.mxu0 %v613
        %1226 = vmatpush.msra.mxu0 %v604
        %1227 = vmatpush.msra.mxu0 %v595
        %1228 = vmatpush.msra.mxu0 %v586
        %1229 = vmatpush.msra.mxu0 %v577
        %1230 = vmatpush.msra.mxu0 %v568
        %1231 = vmatpush.msra.mxu0 %v559
        %1232 = vmatpush.msra.mxu0 %v550
        %1233 = vmatpush.msra.mxu0 %v541
        %1234 = vmatpush.msra.mxu0 %v532
        %1235 = vmatpush.msra.mxu0 %v523
        %1236 = vmatpush.msra.mxu0 %v514
        %1237 = vmatpush.msra.mxu0 %v505
        %1238 = vmatpush.msra.mxu0 %v496
        %1239 = vmatmul.f32.gmra.mxu0 %v488
        %v1240 = vpop.f32.mrf.mxu0
        %v1241 = vadd.f32 0.0, %v1240
        %1242 = vdwg.mxu0
        %1243 = vmatpush.msra.mxu0 %v775
        %1244 = vmatpush.msra.mxu0 %v766
        %1245 = vmatpush.msra.mxu0 %v757
        %1246 = vmatpush.msra.mxu0 %v748
        %1247 = vmatpush.msra.mxu0 %v739
        %1248 = vmatpush.msra.mxu0 %v730
        %1249 = vmatpush.msra.mxu0 %v721
        %1250 = vmatpush.msra.mxu0 %v712
        %1251 = vmatpush.msra.mxu0 %v703
        %1252 = vmatpush.msra.mxu0 %v694
        %1253 = vmatpush.msra.mxu0 %v685
        %1254 = vmatpush.msra.mxu0 %v676
        %1255 = vmatpush.msra.mxu0 %v667
        %1256 = vmatpush.msra.mxu0 %v658
        %1257 = vmatpush.msra.mxu0 %v649
        %1258 = vmatpush.msra.mxu0 %v640
        %1259 = vmatmul.f32.gmra.mxu0 %v489
        %v1260 = vpop.f32.mrf.mxu0
        %v1261 = vadd.f32 %v1241, %v1260
        %1262 = vdwg.mxu0
        %1263 = vmatpush.msra.mxu0 %v919
        %1264 = vmatpush.msra.mxu0 %v910
        %1265 = vmatpush.msra.mxu0 %v901
        %1266 = vmatpush.msra.mxu0 %v892
        %1267 = vmatpush.msra.mxu0 %v883
        %1268 = vmatpush.msra.mxu0 %v874
        %1269 = vmatpush.msra.mxu0 %v865
        %1270 = vmatpush.msra.mxu0 %v856
        %1271 = vmatpush.msra.mxu0 %v847
        %1272 = vmatpush.msra.mxu0 %v838
        %1273 = vmatpush.msra.mxu0 %v829
        %1274 = vmatpush.msra.mxu0 %v820
        %1275 = vmatpush.msra.mxu0 %v811
        %1276 = vmatpush.msra.mxu0 %v802
        %1277 = vmatpush.msra.mxu0 %v793
        %1278 = vmatpush.msra.mxu0 %v784
        %1279 = vmatmul.f32.gmra.mxu0 %v490
        %v1280 = vpop.f32.mrf.mxu0
        %v1281 = vadd.f32 %v1261, %v1280
        %1282 = vdwg.mxu0
        %1283 = vmatpush.msra.mxu0 %v632
        %1284 = vmatpush.msra.mxu0 %v623
        %1285 = vmatpush.msra.mxu0 %v614
        %1286 = vmatpush.msra.mxu0 %v605
        %1287 = vmatpush.msra.mxu0 %v596
        %1288 = vmatpush.msra.mxu0 %v587
        %1289 = vmatpush.msra.mxu0 %v578
        %1290 = vmatpush.msra.mxu0 %v569
        %1291 = vmatpush.msra.mxu0 %v560
        %1292 = vmatpush.msra.mxu0 %v551
        %1293 = vmatpush.msra.mxu0 %v542
        %1294 = vmatpush.msra.mxu0 %v533
        %1295 = vmatpush.msra.mxu0 %v524
        %1296 = vmatpush.msra.mxu0 %v515
        %1297 = vmatpush.msra.mxu0 %v506
        %1298 = vmatpush.msra.mxu0 %v497
        %1299 = vmatmul.f32.gmra.mxu0 %v488
        %v1300 = vpop.f32.mrf.mxu0
        %v1301 = vadd.f32 0.0, %v1300
        %1302 = vdwg.mxu0
        %1303 = vmatpush.msra.mxu0 %v776
        %1304 = vmatpush.msra.mxu0 %v767
        %1305 = vmatpush.msra.mxu0 %v758
        %1306 = vmatpush.msra.mxu0 %v749
        %1307 = vmatpush.msra.mxu0 %v740
        %1308 = vmatpush.msra.mxu0 %v731
        %1309 = vmatpush.msra.mxu0 %v722
        %1310 = vmatpush.msra.mxu0 %v713
        %1311 = vmatpush.msra.mxu0 %v704
        %1312 = vmatpush.msra.mxu0 %v695
        %1313 = vmatpush.msra.mxu0 %v686
        %1314 = vmatpush.msra.mxu0 %v677
        %1315 = vmatpush.msra.mxu0 %v668
        %1316 = vmatpush.msra.mxu0 %v659
        %1317 = vmatpush.msra.mxu0 %v650
        %1318 = vmatpush.msra.mxu0 %v641
        %1319 = vmatmul.f32.gmra.mxu0 %v489
        %v1320 = vpop.f32.mrf.mxu0
        %v1321 = vadd.f32 %v1301, %v1320
        %1322 = vdwg.mxu0
        %1323 = vmatpush.msra.mxu0 %v920
        %1324 = vmatpush.msra.mxu0 %v911
        %1325 = vmatpush.msra.mxu0 %v902
        %1326 = vmatpush.msra.mxu0 %v893
        %1327 = vmatpush.msra.mxu0 %v884
        %1328 = vmatpush.msra.mxu0 %v875
        %1329 = vmatpush.msra.mxu0 %v866
        %1330 = vmatpush.msra.mxu0 %v857
        %1331 = vmatpush.msra.mxu0 %v848
        %1332 = vmatpush.msra.mxu0 %v839
        %1333 = vmatpush.msra.mxu0 %v830
        %1334 = vmatpush.msra.mxu0 %v821
        %1335 = vmatpush.msra.mxu0 %v812
        %1336 = vmatpush.msra.mxu0 %v803
        %1337 = vmatpush.msra.mxu0 %v794
        %1338 = vmatpush.msra.mxu0 %v785
        %1339 = vmatmul.f32.gmra.mxu0 %v490
        %v1340 = vpop.f32.mrf.mxu0
        %v1341 = vadd.f32 %v1321, %v1340
        %1342 = vdwg.mxu0
        %1343 = vmatpush.msra.mxu0 %v633
        %1344 = vmatpush.msra.mxu0 %v624
        %1345 = vmatpush.msra.mxu0 %v615
        %1346 = vmatpush.msra.mxu0 %v606
        %1347 = vmatpush.msra.mxu0 %v597
        %1348 = vmatpush.msra.mxu0 %v588
        %1349 = vmatpush.msra.mxu0 %v579
        %1350 = vmatpush.msra.mxu0 %v570
        %1351 = vmatpush.msra.mxu0 %v561
        %1352 = vmatpush.msra.mxu0 %v552
        %1353 = vmatpush.msra.mxu0 %v543
        %1354 = vmatpush.msra.mxu0 %v534
        %1355 = vmatpush.msra.mxu0 %v525
        %1356 = vmatpush.msra.mxu0 %v516
        %1357 = vmatpush.msra.mxu0 %v507
        %1358 = vmatpush.msra.mxu0 %v498
        %1359 = vmatmul.f32.gmra.mxu0 %v488
        %v1360 = vpop.f32.mrf.mxu0
        %v1361 = vadd.f32 0.0, %v1360
        %1362 = vdwg.mxu0
        %1363 = vmatpush.msra.mxu0 %v777
        %1364 = vmatpush.msra.mxu0 %v768
        %1365 = vmatpush.msra.mxu0 %v759
        %1366 = vmatpush.msra.mxu0 %v750
        %1367 = vmatpush.msra.mxu0 %v741
        %1368 = vmatpush.msra.mxu0 %v732
        %1369 = vmatpush.msra.mxu0 %v723
        %1370 = vmatpush.msra.mxu0 %v714
        %1371 = vmatpush.msra.mxu0 %v705
        %1372 = vmatpush.msra.mxu0 %v696
        %1373 = vmatpush.msra.mxu0 %v687
        %1374 = vmatpush.msra.mxu0 %v678
        %1375 = vmatpush.msra.mxu0 %v669
        %1376 = vmatpush.msra.mxu0 %v660
        %1377 = vmatpush.msra.mxu0 %v651
        %1378 = vmatpush.msra.mxu0 %v642
        %1379 = vmatmul.f32.gmra.mxu0 %v489
        %v1380 = vpop.f32.mrf.mxu0
        %v1381 = vadd.f32 %v1361, %v1380
        %1382 = vdwg.mxu0
        %1383 = vmatpush.msra.mxu0 %v921
        %1384 = vmatpush.msra.mxu0 %v912
        %1385 = vmatpush.msra.mxu0 %v903
        %1386 = vmatpush.msra.mxu0 %v894
        %1387 = vmatpush.msra.mxu0 %v885
        %1388 = vmatpush.msra.mxu0 %v876
        %1389 = vmatpush.msra.mxu0 %v867
        %1390 = vmatpush.msra.mxu0 %v858
        %1391 = vmatpush.msra.mxu0 %v849
        %1392 = vmatpush.msra.mxu0 %v840
        %1393 = vmatpush.msra.mxu0 %v831
        %1394 = vmatpush.msra.mxu0 %v822
        %1395 = vmatpush.msra.mxu0 %v813
        %1396 = vmatpush.msra.mxu0 %v804
        %1397 = vmatpush.msra.mxu0 %v795
        %1398 = vmatpush.msra.mxu0 %v786
        %1399 = vmatmul.f32.gmra.mxu0 %v490
        %v1400 = vpop.f32.mrf.mxu0
        %v1401 = vadd.f32 %v1381, %v1400
        %1402 = vdwg.mxu0
        %1403 = vmatpush.msra.mxu0 %v634
        %1404 = vmatpush.msra.mxu0 %v625
        %1405 = vmatpush.msra.mxu0 %v616
        %1406 = vmatpush.msra.mxu0 %v607
        %1407 = vmatpush.msra.mxu0 %v598
        %1408 = vmatpush.msra.mxu0 %v589
        %1409 = vmatpush.msra.mxu0 %v580
        %1410 = vmatpush.msra.mxu0 %v571
        %1411 = vmatpush.msra.mxu0 %v562
        %1412 = vmatpush.msra.mxu0 %v553
        %1413 = vmatpush.msra.mxu0 %v544
        %1414 = vmatpush.msra.mxu0 %v535
        %1415 = vmatpush.msra.mxu0 %v526
        %1416 = vmatpush.msra.mxu0 %v517
        %1417 = vmatpush.msra.mxu0 %v508
        %1418 = vmatpush.msra.mxu0 %v499
        %1419 = vmatmul.f32.gmra.mxu0 %v488
        %v1420 = vpop.f32.mrf.mxu0
        %v1421 = vadd.f32 0.0, %v1420
        %1422 = vdwg.mxu0
        %1423 = vmatpush.msra.mxu0 %v778
        %1424 = vmatpush.msra.mxu0 %v769
        %1425 = vmatpush.msra.mxu0 %v760
        %1426 = vmatpush.msra.mxu0 %v751
        %1427 = vmatpush.msra.mxu0 %v742
        %1428 = vmatpush.msra.mxu0 %v733
        %1429 = vmatpush.msra.mxu0 %v724
        %1430 = vmatpush.msra.mxu0 %v715
        %1431 = vmatpush.msra.mxu0 %v706
        %1432 = vmatpush.msra.mxu0 %v697
        %1433 = vmatpush.msra.mxu0 %v688
        %1434 = vmatpush.msra.mxu0 %v679
        %1435 = vmatpush.msra.mxu0 %v670
        %1436 = vmatpush.msra.mxu0 %v661
        %1437 = vmatpush.msra.mxu0 %v652
        %1438 = vmatpush.msra.mxu0 %v643
        %1439 = vmatmul.f32.gmra.mxu0 %v489
        %v1440 = vpop.f32.mrf.mxu0
        %v1441 = vadd.f32 %v1421, %v1440
        %1442 = vdwg.mxu0
        %1443 = vmatpush.msra.mxu0 %v922
        %1444 = vmatpush.msra.mxu0 %v913
        %1445 = vmatpush.msra.mxu0 %v904
        %1446 = vmatpush.msra.mxu0 %v895
        %1447 = vmatpush.msra.mxu0 %v886
        %1448 = vmatpush.msra.mxu0 %v877
        %1449 = vmatpush.msra.mxu0 %v868
        %1450 = vmatpush.msra.mxu0 %v859
        %1451 = vmatpush.msra.mxu0 %v850
        %1452 = vmatpush.msra.mxu0 %v841
        %1453 = vmatpush.msra.mxu0 %v832
        %1454 = vmatpush.msra.mxu0 %v823
        %1455 = vmatpush.msra.mxu0 %v814
        %1456 = vmatpush.msra.mxu0 %v805
        %1457 = vmatpush.msra.mxu0 %v796
        %1458 = vmatpush.msra.mxu0 %v787
        %1459 = vmatmul.f32.gmra.mxu0 %v490
        %v1460 = vpop.f32.mrf.mxu0
        %v1461 = vadd.f32 %v1441, %v1460
        %1462 = vdwg.mxu0
        %v1463 = vlaneseq
        %v1464 = vshrl.u32 %v1463, 7
        %v1465 = vlaneseq
        %v1466 = vand.u32 %v1465, 127
        %vm1467 = vcmp.le.s32.totalorder %v1466, %v1464
        %vm1468 = vcmask 523264
        %v1470 = vsel %vm1468, %v981, 0
        %v1473 = vsel %vm1468, %v1161, 0
        %1475 = vmatpush.xpose.msra.mxu0 0.0
        %1476 = vmatpush.xpose.msra.mxu0 0.0
        %1477 = vmatpush.xpose.msra.mxu0 0.0
        %1478 = vmatpush.xpose.msra.mxu0 0.0
        %1479 = vmatpush.xpose.msra.mxu0 0.0
        %1480 = vmatpush.xpose.msra.mxu0 0.0
        %1481 = vmatpush.xpose.msra.mxu0 0.0
        %1482 = vmatpush.xpose.msra.mxu0 0.0
        %1483 = vmatpush.xpose.msra.mxu0 0.0
        %1484 = vmatpush.xpose.msra.mxu0 0.0
        %1485 = vmatpush.xpose.msra.mxu0 0.0
        %1486 = vmatpush.xpose.msra.mxu0 0.0
        %1487 = vmatpush.xpose.msra.mxu0 0.0
        %1488 = vmatpush.xpose.msra.mxu0 0.0
        %1489 = vmatpush.xpose.msra.mxu0 0.0
        %1490 = vmatpush.xpose.msra.mxu0 %v1473
        %1491 = vmatmul.f32.gmra.mxu0 %v1470
        %v1492 = vpop.f32.mrf.mxu0
        %v1493 = vadd.f32 0.0, %v1492
        %1494 = vdwg.mxu0
        %v1495 = vmul.f32 %v1493, 0.05103104
        %v1496 = vsel %vm1467, %v1495, -inf
        %vm1497 = vcmask 64512
        %v1498 = vsel %vm1497, %v1496, -inf
        %1499 = vmax.xlane.f32.xlu0 %v1498
        %v1500 = vpop.xlane.xlu0 %1499
        %v1501 = vsub.f32 %v1496, %v1500
        %v1502 = vmul.f32 %v1501, 1.442695
        %v1503 = vpow.pop %v1502
        %v1504 = vsel %vm1497, %v1503, 0.0
        %1505 = vadd.xlane.f32.xlu0 %v1504
        %v1506 = vpop.xlane.xlu0 %1505
        %v1507 = vrcp.pop %v1506
        %v1508 = vmul.f32 %v1506, %v1507
        %v1509 = vsub.f32 1.0, %v1508
        %v1510 = vmul.f32 %v1507, %v1509
        %v1511 = vadd.f32 %v1507, %v1510
        %vm1512 = vweird.f32 %v1506
        %vm1513 = vweird.f32 %v1507
        %vm1514 = vmor %vm1512, %vm1513
        %v1515 = vsel %vm1514, %v1507, %v1511
        %v1516 = vand.u32 2147483647, %v1506
        %vm1517 = vcmp.eq.f32.partialorder %v1516, 8.507059e+37
        %v1518 = vand.u32 %v1506, 2147483648
        %v1519 = vor.u32 1.1754944e-38, %v1518
        %v1520 = vsel %vm1517, %v1519, %v1515
        %v1521 = vmul.f32 %v1503, %v1520
        %v1523 = vsel %vm1497, %v1521, 0
        %1525 = vmatpush.msra.mxu0 0.0
        %1526 = vmatpush.msra.mxu0 0.0
        %1527 = vmatpush.msra.mxu0 0.0
        %1528 = vmatpush.msra.mxu0 0.0
        %1529 = vmatpush.msra.mxu0 0.0
        %1530 = vmatpush.msra.mxu0 0.0
        %1531 = vmatpush.msra.mxu0 0.0
        %1532 = vmatpush.msra.mxu0 0.0
        %1533 = vmatpush.msra.mxu0 0.0
        %1534 = vmatpush.msra.mxu0 0.0
        %1535 = vmatpush.msra.mxu0 0.0
        %1536 = vmatpush.msra.mxu0 0.0
        %1537 = vmatpush.msra.mxu0 0.0
        %1538 = vmatpush.msra.mxu0 0.0
        %1539 = vmatpush.msra.mxu0 0.0
        %1540 = vmatpush.msra.mxu0 %v1341
        %1541 = vmatmul.f32.gmra.mxu0 %v1523
        %v1542 = vpop.f32.mrf.mxu0
        %v1543 = vadd.f32 0.0, %v1542
        %1544 = vdwg.mxu0
        %1545 = vrot.lane.b32.xlu0 %v981, 64
        %v1546 = vpop.permute.xlu0 %1545
        %1547 = vrot.lane.b32.xlu0 %v1161, 64
        %v1548 = vpop.permute.xlu0 %1547
        %v1549 = vsel %vm1468, %v1546, 0
        %v1551 = vsel %vm1468, %v1548, 0
        %1553 = vmatpush.xpose.msra.mxu0 0.0
        %1554 = vmatpush.xpose.msra.mxu0 0.0
        %1555 = vmatpush.xpose.msra.mxu0 0.0
        %1556 = vmatpush.xpose.msra.mxu0 0.0
        %1557 = vmatpush.xpose.msra.mxu0 0.0
        %1558 = vmatpush.xpose.msra.mxu0 0.0
        %1559 = vmatpush.xpose.msra.mxu0 0.0
        %1560 = vmatpush.xpose.msra.mxu0 0.0
        %1561 = vmatpush.xpose.msra.mxu0 0.0
        %1562 = vmatpush.xpose.msra.mxu0 0.0
        %1563 = vmatpush.xpose.msra.mxu0 0.0
        %1564 = vmatpush.xpose.msra.mxu0 0.0
        %1565 = vmatpush.xpose.msra.mxu0 0.0
        %1566 = vmatpush.xpose.msra.mxu0 0.0
        %1567 = vmatpush.xpose.msra.mxu0 0.0
        %1568 = vmatpush.xpose.msra.mxu0 %v1551
        %1569 = vmatmul.f32.gmra.mxu0 %v1549
        %v1570 = vpop.f32.mrf.mxu0
        %v1571 = vadd.f32 0.0, %v1570
        %1572 = vdwg.mxu0
        %v1573 = vmul.f32 %v1571, 0.05103104
        %v1574 = vsel %vm1467, %v1573, -inf
        %v1575 = vsel %vm1497, %v1574, -inf
        %1576 = vmax.xlane.f32.xlu0 %v1575
        %v1577 = vpop.xlane.xlu0 %1576
        %v1578 = vsub.f32 %v1574, %v1577
        %v1579 = vmul.f32 %v1578, 1.442695
        %v1580 = vpow.pop %v1579
        %v1581 = vsel %vm1497, %v1580, 0.0
        %1582 = vadd.xlane.f32.xlu0 %v1581
        %v1583 = vpop.xlane.xlu0 %1582
        %v1584 = vrcp.pop %v1583
        %v1585 = vmul.f32 %v1583, %v1584
        %v1586 = vsub.f32 1.0, %v1585
        %v1587 = vmul.f32 %v1584, %v1586
        %v1588 = vadd.f32 %v1584, %v1587
        %vm1589 = vweird.f32 %v1583
        %vm1590 = vweird.f32 %v1584
        %vm1591 = vmor %vm1589, %vm1590
        %v1592 = vsel %vm1591, %v1584, %v1588
        %v1593 = vand.u32 2147483647, %v1583
        %vm1594 = vcmp.eq.f32.partialorder %v1593, 8.507059e+37
        %v1595 = vand.u32 %v1583, 2147483648
        %v1596 = vor.u32 1.1754944e-38, %v1595
        %v1597 = vsel %vm1594, %v1596, %v1592
        %v1598 = vmul.f32 %v1580, %v1597
        %1600 = vrot.lane.b32.xlu0 %v1341, 64
        %v1601 = vpop.permute.xlu0 %1600
        %v1604 = vsel %vm1497, %v1598, 0
        %1606 = vmatpush.msra.mxu0 0.0
        %1607 = vmatpush.msra.mxu0 0.0
        %1608 = vmatpush.msra.mxu0 0.0
        %1609 = vmatpush.msra.mxu0 0.0
        %1610 = vmatpush.msra.mxu0 0.0
        %1611 = vmatpush.msra.mxu0 0.0
        %1612 = vmatpush.msra.mxu0 0.0
        %1613 = vmatpush.msra.mxu0 0.0
        %1614 = vmatpush.msra.mxu0 0.0
        %1615 = vmatpush.msra.mxu0 0.0
        %1616 = vmatpush.msra.mxu0 0.0
        %1617 = vmatpush.msra.mxu0 0.0
        %1618 = vmatpush.msra.mxu0 0.0
        %1619 = vmatpush.msra.mxu0 0.0
        %1620 = vmatpush.msra.mxu0 0.0
        %1621 = vmatpush.msra.mxu0 %v1601
        %1622 = vmatmul.f32.gmra.mxu0 %v1604
        %v1623 = vpop.f32.mrf.mxu0
        %v1624 = vadd.f32 0.0, %v1623
        %1625 = vdwg.mxu0
        %v1627 = vsel %vm1468, %v1041, 0
        %v1630 = vsel %vm1468, %v1221, 0
        %1632 = vmatpush.xpose.msra.mxu0 0.0
        %1633 = vmatpush.xpose.msra.mxu0 0.0
        %1634 = vmatpush.xpose.msra.mxu0 0.0
        %1635 = vmatpush.xpose.msra.mxu0 0.0
        %1636 = vmatpush.xpose.msra.mxu0 0.0
        %1637 = vmatpush.xpose.msra.mxu0 0.0
        %1638 = vmatpush.xpose.msra.mxu0 0.0
        %1639 = vmatpush.xpose.msra.mxu0 0.0
        %1640 = vmatpush.xpose.msra.mxu0 0.0
        %1641 = vmatpush.xpose.msra.mxu0 0.0
        %1642 = vmatpush.xpose.msra.mxu0 0.0
        %1643 = vmatpush.xpose.msra.mxu0 0.0
        %1644 = vmatpush.xpose.msra.mxu0 0.0
        %1645 = vmatpush.xpose.msra.mxu0 0.0
        %1646 = vmatpush.xpose.msra.mxu0 0.0
        %1647 = vmatpush.xpose.msra.mxu0 %v1630
        %1648 = vmatmul.f32.gmra.mxu0 %v1627
        %v1649 = vpop.f32.mrf.mxu0
        %v1650 = vadd.f32 0.0, %v1649
        %1651 = vdwg.mxu0
        %v1652 = vmul.f32 %v1650, 0.05103104
        %v1653 = vsel %vm1467, %v1652, -inf
        %v1654 = vsel %vm1497, %v1653, -inf
        %1655 = vmax.xlane.f32.xlu0 %v1654
        %v1656 = vpop.xlane.xlu0 %1655
        %v1657 = vsub.f32 %v1653, %v1656
        %v1658 = vmul.f32 %v1657, 1.442695
        %v1659 = vpow.pop %v1658
        %v1660 = vsel %vm1497, %v1659, 0.0
        %1661 = vadd.xlane.f32.xlu0 %v1660
        %v1662 = vpop.xlane.xlu0 %1661
        %v1663 = vrcp.pop %v1662
        %v1664 = vmul.f32 %v1662, %v1663
        %v1665 = vsub.f32 1.0, %v1664
        %v1666 = vmul.f32 %v1663, %v1665
        %v1667 = vadd.f32 %v1663, %v1666
        %vm1668 = vweird.f32 %v1662
        %vm1669 = vweird.f32 %v1663
        %vm1670 = vmor %vm1668, %vm1669
        %v1671 = vsel %vm1670, %v1663, %v1667
        %v1672 = vand.u32 2147483647, %v1662
        %vm1673 = vcmp.eq.f32.partialorder %v1672, 8.507059e+37
        %v1674 = vand.u32 %v1662, 2147483648
        %v1675 = vor.u32 1.1754944e-38, %v1674
        %v1676 = vsel %vm1673, %v1675, %v1671
        %v1677 = vmul.f32 %v1659, %v1676
        %v1679 = vsel %vm1497, %v1677, 0
        %1681 = vmatpush.msra.mxu0 0.0
        %1682 = vmatpush.msra.mxu0 0.0
        %1683 = vmatpush.msra.mxu0 0.0
        %1684 = vmatpush.msra.mxu0 0.0
        %1685 = vmatpush.msra.mxu0 0.0
        %1686 = vmatpush.msra.mxu0 0.0
        %1687 = vmatpush.msra.mxu0 0.0
        %1688 = vmatpush.msra.mxu0 0.0
        %1689 = vmatpush.msra.mxu0 0.0
        %1690 = vmatpush.msra.mxu0 0.0
        %1691 = vmatpush.msra.mxu0 0.0
        %1692 = vmatpush.msra.mxu0 0.0
        %1693 = vmatpush.msra.mxu0 0.0
        %1694 = vmatpush.msra.mxu0 0.0
        %1695 = vmatpush.msra.mxu0 0.0
        %1696 = vmatpush.msra.mxu0 %v1401
        %1697 = vmatmul.f32.gmra.mxu0 %v1679
        %v1698 = vpop.f32.mrf.mxu0
        %v1699 = vadd.f32 0.0, %v1698
        %1700 = vdwg.mxu0
        %1701 = vrot.lane.b32.xlu0 %v1041, 64
        %v1702 = vpop.permute.xlu0 %1701
        %1703 = vrot.lane.b32.xlu0 %v1221, 64
        %v1704 = vpop.permute.xlu0 %1703
        %v1705 = vsel %vm1468, %v1702, 0
        %v1707 = vsel %vm1468, %v1704, 0
        %1709 = vmatpush.xpose.msra.mxu0 0.0
        %1710 = vmatpush.xpose.msra.mxu0 0.0
        %1711 = vmatpush.xpose.msra.mxu0 0.0
        %1712 = vmatpush.xpose.msra.mxu0 0.0
        %1713 = vmatpush.xpose.msra.mxu0 0.0
        %1714 = vmatpush.xpose.msra.mxu0 0.0
        %1715 = vmatpush.xpose.msra.mxu0 0.0
        %1716 = vmatpush.xpose.msra.mxu0 0.0
        %1717 = vmatpush.xpose.msra.mxu0 0.0
        %1718 = vmatpush.xpose.msra.mxu0 0.0
        %1719 = vmatpush.xpose.msra.mxu0 0.0
        %1720 = vmatpush.xpose.msra.mxu0 0.0
        %1721 = vmatpush.xpose.msra.mxu0 0.0
        %1722 = vmatpush.xpose.msra.mxu0 0.0
        %1723 = vmatpush.xpose.msra.mxu0 0.0
        %1724 = vmatpush.xpose.msra.mxu0 %v1707
        %1725 = vmatmul.f32.gmra.mxu0 %v1705
        %v1726 = vpop.f32.mrf.mxu0
        %v1727 = vadd.f32 0.0, %v1726
        %1728 = vdwg.mxu0
        %v1729 = vmul.f32 %v1727, 0.05103104
        %v1730 = vsel %vm1467, %v1729, -inf
        %v1731 = vsel %vm1497, %v1730, -inf
        %1732 = vmax.xlane.f32.xlu0 %v1731
        %v1733 = vpop.xlane.xlu0 %1732
        %v1734 = vsub.f32 %v1730, %v1733
        %v1735 = vmul.f32 %v1734, 1.442695
        %v1736 = vpow.pop %v1735
        %v1737 = vsel %vm1497, %v1736, 0.0
        %1738 = vadd.xlane.f32.xlu0 %v1737
        %v1739 = vpop.xlane.xlu0 %1738
        %v1740 = vrcp.pop %v1739
        %v1741 = vmul.f32 %v1739, %v1740
        %v1742 = vsub.f32 1.0, %v1741
        %v1743 = vmul.f32 %v1740, %v1742
        %v1744 = vadd.f32 %v1740, %v1743
        %vm1745 = vweird.f32 %v1739
        %vm1746 = vweird.f32 %v1740
        %vm1747 = vmor %vm1745, %vm1746
        %v1748 = vsel %vm1747, %v1740, %v1744
        %v1749 = vand.u32 2147483647, %v1739
        %vm1750 = vcmp.eq.f32.partialorder %v1749, 8.507059e+37
        %v1751 = vand.u32 %v1739, 2147483648
        %v1752 = vor.u32 1.1754944e-38, %v1751
        %v1753 = vsel %vm1750, %v1752, %v1748
        %v1754 = vmul.f32 %v1736, %v1753
        %1756 = vrot.lane.b32.xlu0 %v1401, 64
        %v1757 = vpop.permute.xlu0 %1756
        %v1760 = vsel %vm1497, %v1754, 0
        %1762 = vmatpush.msra.mxu0 0.0
        %1763 = vmatpush.msra.mxu0 0.0
        %1764 = vmatpush.msra.mxu0 0.0
        %1765 = vmatpush.msra.mxu0 0.0
        %1766 = vmatpush.msra.mxu0 0.0
        %1767 = vmatpush.msra.mxu0 0.0
        %1768 = vmatpush.msra.mxu0 0.0
        %1769 = vmatpush.msra.mxu0 0.0
        %1770 = vmatpush.msra.mxu0 0.0
        %1771 = vmatpush.msra.mxu0 0.0
        %1772 = vmatpush.msra.mxu0 0.0
        %1773 = vmatpush.msra.mxu0 0.0
        %1774 = vmatpush.msra.mxu0 0.0
        %1775 = vmatpush.msra.mxu0 0.0
        %1776 = vmatpush.msra.mxu0 0.0
        %1777 = vmatpush.msra.mxu0 %v1757
        %1778 = vmatmul.f32.gmra.mxu0 %v1760
        %v1779 = vpop.f32.mrf.mxu0
        %v1780 = vadd.f32 0.0, %v1779
        %1781 = vdwg.mxu0
        %v1783 = vsel %vm1468, %v1101, 0
        %v1786 = vsel %vm1468, %v1281, 0
        %1788 = vmatpush.xpose.msra.mxu0 0.0
        %1789 = vmatpush.xpose.msra.mxu0 0.0
        %1790 = vmatpush.xpose.msra.mxu0 0.0
        %1791 = vmatpush.xpose.msra.mxu0 0.0
        %1792 = vmatpush.xpose.msra.mxu0 0.0
        %1793 = vmatpush.xpose.msra.mxu0 0.0
        %1794 = vmatpush.xpose.msra.mxu0 0.0
        %1795 = vmatpush.xpose.msra.mxu0 0.0
        %1796 = vmatpush.xpose.msra.mxu0 0.0
        %1797 = vmatpush.xpose.msra.mxu0 0.0
        %1798 = vmatpush.xpose.msra.mxu0 0.0
        %1799 = vmatpush.xpose.msra.mxu0 0.0
        %1800 = vmatpush.xpose.msra.mxu0 0.0
        %1801 = vmatpush.xpose.msra.mxu0 0.0
        %1802 = vmatpush.xpose.msra.mxu0 0.0
        %1803 = vmatpush.xpose.msra.mxu0 %v1786
        %1804 = vmatmul.f32.gmra.mxu0 %v1783
        %v1805 = vpop.f32.mrf.mxu0
        %v1806 = vadd.f32 0.0, %v1805
        %1807 = vdwg.mxu0
        %v1808 = vmul.f32 %v1806, 0.05103104
        %v1809 = vsel %vm1467, %v1808, -inf
        %v1810 = vsel %vm1497, %v1809, -inf
        %1811 = vmax.xlane.f32.xlu0 %v1810
        %v1812 = vpop.xlane.xlu0 %1811
        %v1813 = vsub.f32 %v1809, %v1812
        %v1814 = vmul.f32 %v1813, 1.442695
        %v1815 = vpow.pop %v1814
        %v1816 = vsel %vm1497, %v1815, 0.0
        %1817 = vadd.xlane.f32.xlu0 %v1816
        %v1818 = vpop.xlane.xlu0 %1817
        %v1819 = vrcp.pop %v1818
        %v1820 = vmul.f32 %v1818, %v1819
        %v1821 = vsub.f32 1.0, %v1820
        %v1822 = vmul.f32 %v1819, %v1821
        %v1823 = vadd.f32 %v1819, %v1822
        %vm1824 = vweird.f32 %v1818
        %vm1825 = vweird.f32 %v1819
        %vm1826 = vmor %vm1824, %vm1825
        %v1827 = vsel %vm1826, %v1819, %v1823
        %v1828 = vand.u32 2147483647, %v1818
        %vm1829 = vcmp.eq.f32.partialorder %v1828, 8.507059e+37
        %v1830 = vand.u32 %v1818, 2147483648
        %v1831 = vor.u32 1.1754944e-38, %v1830
        %v1832 = vsel %vm1829, %v1831, %v1827
        %v1833 = vmul.f32 %v1815, %v1832
        %v1835 = vsel %vm1497, %v1833, 0
        %1837 = vmatpush.msra.mxu0 0.0
        %1838 = vmatpush.msra.mxu0 0.0
        %1839 = vmatpush.msra.mxu0 0.0
        %1840 = vmatpush.msra.mxu0 0.0
        %1841 = vmatpush.msra.mxu0 0.0
        %1842 = vmatpush.msra.mxu0 0.0
        %1843 = vmatpush.msra.mxu0 0.0
        %1844 = vmatpush.msra.mxu0 0.0
        %1845 = vmatpush.msra.mxu0 0.0
        %1846 = vmatpush.msra.mxu0 0.0
        %1847 = vmatpush.msra.mxu0 0.0
        %1848 = vmatpush.msra.mxu0 0.0
        %1849 = vmatpush.msra.mxu0 0.0
        %1850 = vmatpush.msra.mxu0 0.0
        %1851 = vmatpush.msra.mxu0 0.0
        %1852 = vmatpush.msra.mxu0 %v1461
        %1853 = vmatmul.f32.gmra.mxu0 %v1835
        %v1854 = vpop.f32.mrf.mxu0
        %v1855 = vadd.f32 0.0, %v1854
        %1856 = vdwg.mxu0
        %1857 = vrot.lane.b32.xlu0 %v1101, 64
        %v1858 = vpop.permute.xlu0 %1857
        %1859 = vrot.lane.b32.xlu0 %v1281, 64
        %v1860 = vpop.permute.xlu0 %1859
        %v1861 = vsel %vm1468, %v1858, 0
        %v1863 = vsel %vm1468, %v1860, 0
        %1865 = vmatpush.xpose.msra.mxu0 0.0
        %1866 = vmatpush.xpose.msra.mxu0 0.0
        %1867 = vmatpush.xpose.msra.mxu0 0.0
        %1868 = vmatpush.xpose.msra.mxu0 0.0
        %1869 = vmatpush.xpose.msra.mxu0 0.0
        %1870 = vmatpush.xpose.msra.mxu0 0.0
        %1871 = vmatpush.xpose.msra.mxu0 0.0
        %1872 = vmatpush.xpose.msra.mxu0 0.0
        %1873 = vmatpush.xpose.msra.mxu0 0.0
        %1874 = vmatpush.xpose.msra.mxu0 0.0
        %1875 = vmatpush.xpose.msra.mxu0 0.0
        %1876 = vmatpush.xpose.msra.mxu0 0.0
        %1877 = vmatpush.xpose.msra.mxu0 0.0
        %1878 = vmatpush.xpose.msra.mxu0 0.0
        %1879 = vmatpush.xpose.msra.mxu0 0.0
        %1880 = vmatpush.xpose.msra.mxu0 %v1863
        %1881 = vmatmul.f32.gmra.mxu0 %v1861
        %v1882 = vpop.f32.mrf.mxu0
        %v1883 = vadd.f32 0.0, %v1882
        %1884 = vdwg.mxu0
        %v1885 = vmul.f32 %v1883, 0.05103104
        %v1886 = vsel %vm1467, %v1885, -inf
        %v1887 = vsel %vm1497, %v1886, -inf
        %1888 = vmax.xlane.f32.xlu0 %v1887
        %v1889 = vpop.xlane.xlu0 %1888
        %v1890 = vsub.f32 %v1886, %v1889
        %v1891 = vmul.f32 %v1890, 1.442695
        %v1892 = vpow.pop %v1891
        %v1893 = vsel %vm1497, %v1892, 0.0
        %1894 = vadd.xlane.f32.xlu0 %v1893
        %v1895 = vpop.xlane.xlu0 %1894
        %v1896 = vrcp.pop %v1895
        %v1897 = vmul.f32 %v1895, %v1896
        %v1898 = vsub.f32 1.0, %v1897
        %v1899 = vmul.f32 %v1896, %v1898
        %v1900 = vadd.f32 %v1896, %v1899
        %vm1901 = vweird.f32 %v1895
        %vm1902 = vweird.f32 %v1896
        %vm1903 = vmor %vm1901, %vm1902
        %v1904 = vsel %vm1903, %v1896, %v1900
        %v1905 = vand.u32 2147483647, %v1895
        %vm1906 = vcmp.eq.f32.partialorder %v1905, 8.507059e+37
        %v1907 = vand.u32 %v1895, 2147483648
        %v1908 = vor.u32 1.1754944e-38, %v1907
        %v1909 = vsel %vm1906, %v1908, %v1904
        %v1910 = vmul.f32 %v1892, %v1909
        %1912 = vrot.lane.b32.xlu0 %v1461, 64
        %v1913 = vpop.permute.xlu0 %1912
        %v1916 = vsel %vm1497, %v1910, 0
        %1918 = vmatpush.msra.mxu0 0.0
        %1919 = vmatpush.msra.mxu0 0.0
        %1920 = vmatpush.msra.mxu0 0.0
        %1921 = vmatpush.msra.mxu0 0.0
        %1922 = vmatpush.msra.mxu0 0.0
        %1923 = vmatpush.msra.mxu0 0.0
        %1924 = vmatpush.msra.mxu0 0.0
        %1925 = vmatpush.msra.mxu0 0.0
        %1926 = vmatpush.msra.mxu0 0.0
        %1927 = vmatpush.msra.mxu0 0.0
        %1928 = vmatpush.msra.mxu0 0.0
        %1929 = vmatpush.msra.mxu0 0.0
        %1930 = vmatpush.msra.mxu0 0.0
        %1931 = vmatpush.msra.mxu0 0.0
        %1932 = vmatpush.msra.mxu0 0.0
        %1933 = vmatpush.msra.mxu0 %v1913
        %1934 = vmatmul.f32.gmra.mxu0 %v1916
        %v1935 = vpop.f32.mrf.mxu0
        %v1936 = vadd.f32 0.0, %v1935
        %1937 = vdwg.mxu0
        %1939 = vrot.lane.b32.xlu0 %v1624, 64
        %v1940 = vpop.permute.xlu0 %1939
        %1943 = vrot.lane.b32.xlu0 %v1780, 64
        %v1944 = vpop.permute.xlu0 %1943
        %1947 = vrot.lane.b32.xlu0 %v1936, 64
        %v1948 = vpop.permute.xlu0 %1947
        %v1950 = vsel %vm1468, %v1543, %v1940
        %v1951 = vsel %vm1468, %v1699, %v1944
        %v1952 = vsel %vm1468, %v1855, %v1948
        %v1953 = vld [vmem:[%s4] sm:$0xff]
        %v1954 = vld [vmem:[%s4 + $0x8] sm:$0xff]
        %v1955 = vld [vmem:[%s4 + $0x10] sm:$0xff]
        %v1956 = vld [vmem:[%s4 + $0x18] sm:$0xff]
        %v1957 = vld [vmem:[%s4 + $0x20] sm:$0xff]
        %v1958 = vld [vmem:[%s4 + $0x28] sm:$0xff]
        %v1959 = vld [vmem:[%s4 + $0x30] sm:$0xff]
        %v1960 = vld [vmem:[%s4 + $0x38] sm:$0xff]
        %v1961 = vld [vmem:[%s4 + $0x40] sm:$0xff]
        %v1962 = vld [vmem:[%s4 + $0x48] sm:$0xff]
        %v1963 = vld [vmem:[%s4 + $0x50] sm:$0xff]
        %v1964 = vld [vmem:[%s4 + $0x58] sm:$0xff]
        %v1965 = vld [vmem:[%s4 + $0x60] sm:$0xff]
        %v1966 = vld [vmem:[%s4 + $0x68] sm:$0xff]
        %v1967 = vld [vmem:[%s4 + $0x70] sm:$0xff]
        %v1968 = vld [vmem:[%s4 + $0x78] sm:$0xff]
        %v1969 = vld [vmem:[%s4 + $0x80] sm:$0xff]
        %v1970 = vld [vmem:[%s4 + $0x88] sm:$0xff]
        %v1971 = vld [vmem:[%s4 + $0x90] sm:$0xff]
        %v1972 = vld [vmem:[%s4 + $0x98] sm:$0xff]
        %v1973 = vld [vmem:[%s4 + $0xa0] sm:$0xff]
        %v1974 = vld [vmem:[%s4 + $0xa8] sm:$0xff]
        %v1975 = vld [vmem:[%s4 + $0xb0] sm:$0xff]
        %v1976 = vld [vmem:[%s4 + $0xb8] sm:$0xff]
        %v1977 = vld [vmem:[%s4 + $0xc0] sm:$0xff]
        %v1978 = vld [vmem:[%s4 + $0xc8] sm:$0xff]
        %v1979 = vld [vmem:[%s4 + $0xd0] sm:$0xff]
        %v1980 = vld [vmem:[%s4 + $0xd8] sm:$0xff]
        %v1981 = vld [vmem:[%s4 + $0xe0] sm:$0xff]
        %v1982 = vld [vmem:[%s4 + $0xe8] sm:$0xff]
        %v1983 = vld [vmem:[%s4 + $0xf0] sm:$0xff]
        %v1984 = vld [vmem:[%s4 + $0xf8] sm:$0xff]
        %v1985 = vld [vmem:[%s4 + $0x100] sm:$0xff]
        %v1986 = vld [vmem:[%s4 + $0x108] sm:$0xff]
        %v1987 = vld [vmem:[%s4 + $0x110] sm:$0xff]
        %v1988 = vld [vmem:[%s4 + $0x118] sm:$0xff]
        %v1989 = vld [vmem:[%s4 + $0x120] sm:$0xff]
        %v1990 = vld [vmem:[%s4 + $0x128] sm:$0xff]
        %v1991 = vld [vmem:[%s4 + $0x130] sm:$0xff]
        %v1992 = vld [vmem:[%s4 + $0x138] sm:$0xff]
        %v1993 = vld [vmem:[%s4 + $0x140] sm:$0xff]
        %v1994 = vld [vmem:[%s4 + $0x148] sm:$0xff]
        %v1995 = vld [vmem:[%s4 + $0x150] sm:$0xff]
        %v1996 = vld [vmem:[%s4 + $0x158] sm:$0xff]
        %v1997 = vld [vmem:[%s4 + $0x160] sm:$0xff]
        %v1998 = vld [vmem:[%s4 + $0x168] sm:$0xff]
        %v1999 = vld [vmem:[%s4 + $0x170] sm:$0xff]
        %v2000 = vld [vmem:[%s4 + $0x178] sm:$0xff]
        %v2001 = vld [vmem:[%s4 + $0x180] sm:$0xff]
        %v2002 = vld [vmem:[%s4 + $0x188] sm:$0xff]
        %v2003 = vld [vmem:[%s4 + $0x190] sm:$0xff]
        %v2004 = vld [vmem:[%s4 + $0x198] sm:$0xff]
        %v2005 = vld [vmem:[%s4 + $0x1a0] sm:$0xff]
        %v2006 = vld [vmem:[%s4 + $0x1a8] sm:$0xff]
        %v2007 = vld [vmem:[%s4 + $0x1b0] sm:$0xff]
        %v2008 = vld [vmem:[%s4 + $0x1b8] sm:$0xff]
        %v2009 = vld [vmem:[%s4 + $0x1c0] sm:$0xff]
        %v2010 = vld [vmem:[%s4 + $0x1c8] sm:$0xff]
        %v2011 = vld [vmem:[%s4 + $0x1d0] sm:$0xff]
        %v2012 = vld [vmem:[%s4 + $0x1d8] sm:$0xff]
        %v2013 = vld [vmem:[%s4 + $0x1e0] sm:$0xff]
        %v2014 = vld [vmem:[%s4 + $0x1e8] sm:$0xff]
        %v2015 = vld [vmem:[%s4 + $0x1f0] sm:$0xff]
        %v2016 = vld [vmem:[%s4 + $0x1f8] sm:$0xff]
        %v2017 = vld [vmem:[%s4 + $0x200] sm:$0xff]
        %v2018 = vld [vmem:[%s4 + $0x208] sm:$0xff]
        %v2019 = vld [vmem:[%s4 + $0x210] sm:$0xff]
        %v2020 = vld [vmem:[%s4 + $0x218] sm:$0xff]
        %v2021 = vld [vmem:[%s4 + $0x220] sm:$0xff]
        %v2022 = vld [vmem:[%s4 + $0x228] sm:$0xff]
        %v2023 = vld [vmem:[%s4 + $0x230] sm:$0xff]
        %v2024 = vld [vmem:[%s4 + $0x238] sm:$0xff]
        %v2025 = vld [vmem:[%s4 + $0x240] sm:$0xff]
        %v2026 = vld [vmem:[%s4 + $0x248] sm:$0xff]
        %v2027 = vld [vmem:[%s4 + $0x250] sm:$0xff]
        %v2028 = vld [vmem:[%s4 + $0x258] sm:$0xff]
        %v2029 = vld [vmem:[%s4 + $0x260] sm:$0xff]
        %v2030 = vld [vmem:[%s4 + $0x268] sm:$0xff]
        %v2031 = vld [vmem:[%s4 + $0x270] sm:$0xff]
        %v2032 = vld [vmem:[%s4 + $0x278] sm:$0xff]
        %v2033 = vld [vmem:[%s4 + $0x280] sm:$0xff]
        %v2034 = vld [vmem:[%s4 + $0x288] sm:$0xff]
        %v2035 = vld [vmem:[%s4 + $0x290] sm:$0xff]
        %v2036 = vld [vmem:[%s4 + $0x298] sm:$0xff]
        %v2037 = vld [vmem:[%s4 + $0x2a0] sm:$0xff]
        %v2038 = vld [vmem:[%s4 + $0x2a8] sm:$0xff]
        %v2039 = vld [vmem:[%s4 + $0x2b0] sm:$0xff]
        %v2040 = vld [vmem:[%s4 + $0x2b8] sm:$0xff]
        %v2041 = vld [vmem:[%s4 + $0x2c0] sm:$0xff]
        %v2042 = vld [vmem:[%s4 + $0x2c8] sm:$0xff]
        %v2043 = vld [vmem:[%s4 + $0x2d0] sm:$0xff]
        %v2044 = vld [vmem:[%s4 + $0x2d8] sm:$0xff]
        %v2045 = vld [vmem:[%s4 + $0x2e0] sm:$0xff]
        %v2046 = vld [vmem:[%s4 + $0x2e8] sm:$0xff]
        %v2047 = vld [vmem:[%s4 + $0x2f0] sm:$0xff]
        %v2048 = vld [vmem:[%s4 + $0x2f8] sm:$0xff]
        %v2049 = vld [vmem:[%s4 + $0x300] sm:$0xff]
        %v2050 = vld [vmem:[%s4 + $0x308] sm:$0xff]
        %v2051 = vld [vmem:[%s4 + $0x310] sm:$0xff]
        %v2052 = vld [vmem:[%s4 + $0x318] sm:$0xff]
        %v2053 = vld [vmem:[%s4 + $0x320] sm:$0xff]
        %v2054 = vld [vmem:[%s4 + $0x328] sm:$0xff]
        %v2055 = vld [vmem:[%s4 + $0x330] sm:$0xff]
        %v2056 = vld [vmem:[%s4 + $0x338] sm:$0xff]
        %v2057 = vld [vmem:[%s4 + $0x340] sm:$0xff]
        %v2058 = vld [vmem:[%s4 + $0x348] sm:$0xff]
        %v2059 = vld [vmem:[%s4 + $0x350] sm:$0xff]
        %v2060 = vld [vmem:[%s4 + $0x358] sm:$0xff]
        %v2061 = vld [vmem:[%s4 + $0x360] sm:$0xff]
        %v2062 = vld [vmem:[%s4 + $0x368] sm:$0xff]
        %v2063 = vld [vmem:[%s4 + $0x370] sm:$0xff]
        %v2064 = vld [vmem:[%s4 + $0x378] sm:$0xff]
        %v2065 = vld [vmem:[%s4 + $0x380] sm:$0xff]
        %v2066 = vld [vmem:[%s4 + $0x388] sm:$0xff]
        %v2067 = vld [vmem:[%s4 + $0x390] sm:$0xff]
        %v2068 = vld [vmem:[%s4 + $0x398] sm:$0xff]
        %v2069 = vld [vmem:[%s4 + $0x3a0] sm:$0xff]
        %v2070 = vld [vmem:[%s4 + $0x3a8] sm:$0xff]
        %v2071 = vld [vmem:[%s4 + $0x3b0] sm:$0xff]
        %v2072 = vld [vmem:[%s4 + $0x3b8] sm:$0xff]
        %v2073 = vld [vmem:[%s4 + $0x3c0] sm:$0xff]
        %v2074 = vld [vmem:[%s4 + $0x3c8] sm:$0xff]
        %v2075 = vld [vmem:[%s4 + $0x3d0] sm:$0xff]
        %v2076 = vld [vmem:[%s4 + $0x3d8] sm:$0xff]
        %v2077 = vld [vmem:[%s4 + $0x3e0] sm:$0xff]
        %v2078 = vld [vmem:[%s4 + $0x3e8] sm:$0xff]
        %v2079 = vld [vmem:[%s4 + $0x3f0] sm:$0xff]
        %v2080 = vld [vmem:[%s4 + $0x3f8] sm:$0xff]
        %v2081 = vld [vmem:[%s4 + $0x400] sm:$0xff]
        %v2082 = vld [vmem:[%s4 + $0x408] sm:$0xff]
        %v2083 = vld [vmem:[%s4 + $0x410] sm:$0xff]
        %v2084 = vld [vmem:[%s4 + $0x418] sm:$0xff]
        %v2085 = vld [vmem:[%s4 + $0x420] sm:$0xff]
        %v2086 = vld [vmem:[%s4 + $0x428] sm:$0xff]
        %v2087 = vld [vmem:[%s4 + $0x430] sm:$0xff]
        %v2088 = vld [vmem:[%s4 + $0x438] sm:$0xff]
        %v2089 = vld [vmem:[%s4 + $0x440] sm:$0xff]
        %v2090 = vld [vmem:[%s4 + $0x448] sm:$0xff]
        %v2091 = vld [vmem:[%s4 + $0x450] sm:$0xff]
        %v2092 = vld [vmem:[%s4 + $0x458] sm:$0xff]
        %v2093 = vld [vmem:[%s4 + $0x460] sm:$0xff]
        %v2094 = vld [vmem:[%s4 + $0x468] sm:$0xff]
        %v2095 = vld [vmem:[%s4 + $0x470] sm:$0xff]
        %v2096 = vld [vmem:[%s4 + $0x478] sm:$0xff]
        %v2097 = vld [vmem:[%s5] sm:$0x7]
        %v2099 = vperm.slane %v2097, 0
        %v2100 = vperm.slane %v2097, 1
        %v2101 = vperm.slane %v2097, 2
        %2105 = vmatpush.msra.mxu0 %v1998
        %2106 = vmatpush.msra.mxu0 %v1995
        %2107 = vmatpush.msra.mxu0 %v1992
        %2108 = vmatpush.msra.mxu0 %v1989
        %2109 = vmatpush.msra.mxu0 %v1986
        %2110 = vmatpush.msra.mxu0 %v1983
        %2111 = vmatpush.msra.mxu0 %v1980
        %2112 = vmatpush.msra.mxu0 %v1977
        %2113 = vmatpush.msra.mxu0 %v1974
        %2114 = vmatpush.msra.mxu0 %v1971
        %2115 = vmatpush.msra.mxu0 %v1968
        %2116 = vmatpush.msra.mxu0 %v1965
        %2117 = vmatpush.msra.mxu0 %v1962
        %2118 = vmatpush.msra.mxu0 %v1959
        %2119 = vmatpush.msra.mxu0 %v1956
        %2120 = vmatpush.msra.mxu0 %v1953
        %2121 = vmatmul.f32.gmra.mxu0 %v1950
        %v2122 = vpop.f32.mrf.mxu0
        %v2123 = vadd.f32 %v2099, %v2122
        %2124 = vdwg.mxu0
        %2125 = vmatpush.msra.mxu0 %v2046
        %2126 = vmatpush.msra.mxu0 %v2043
        %2127 = vmatpush.msra.mxu0 %v2040
        %2128 = vmatpush.msra.mxu0 %v2037
        %2129 = vmatpush.msra.mxu0 %v2034
        %2130 = vmatpush.msra.mxu0 %v2031
        %2131 = vmatpush.msra.mxu0 %v2028
        %2132 = vmatpush.msra.mxu0 %v2025
        %2133 = vmatpush.msra.mxu0 %v2022
        %2134 = vmatpush.msra.mxu0 %v2019
        %2135 = vmatpush.msra.mxu0 %v2016
        %2136 = vmatpush.msra.mxu0 %v2013
        %2137 = vmatpush.msra.mxu0 %v2010
        %2138 = vmatpush.msra.mxu0 %v2007
        %2139 = vmatpush.msra.mxu0 %v2004
        %2140 = vmatpush.msra.mxu0 %v2001
        %2141 = vmatmul.f32.gmra.mxu0 %v1951
        %v2142 = vpop.f32.mrf.mxu0
        %v2143 = vadd.f32 %v2123, %v2142
        %2144 = vdwg.mxu0
        %2145 = vmatpush.msra.mxu0 %v2094
        %2146 = vmatpush.msra.mxu0 %v2091
        %2147 = vmatpush.msra.mxu0 %v2088
        %2148 = vmatpush.msra.mxu0 %v2085
        %2149 = vmatpush.msra.mxu0 %v2082
        %2150 = vmatpush.msra.mxu0 %v2079
        %2151 = vmatpush.msra.mxu0 %v2076
        %2152 = vmatpush.msra.mxu0 %v2073
        %2153 = vmatpush.msra.mxu0 %v2070
        %2154 = vmatpush.msra.mxu0 %v2067
        %2155 = vmatpush.msra.mxu0 %v2064
        %2156 = vmatpush.msra.mxu0 %v2061
        %2157 = vmatpush.msra.mxu0 %v2058
        %2158 = vmatpush.msra.mxu0 %v2055
        %2159 = vmatpush.msra.mxu0 %v2052
        %2160 = vmatpush.msra.mxu0 %v2049
        %2161 = vmatmul.f32.gmra.mxu0 %v1952
        %v2162 = vpop.f32.mrf.mxu0
        %v2163 = vadd.f32 %v2143, %v2162
        %2164 = vdwg.mxu0
        %2165 = vmatpush.msra.mxu0 %v1999
        %2166 = vmatpush.msra.mxu0 %v1996
        %2167 = vmatpush.msra.mxu0 %v1993
        %2168 = vmatpush.msra.mxu0 %v1990
        %2169 = vmatpush.msra.mxu0 %v1987
        %2170 = vmatpush.msra.mxu0 %v1984
        %2171 = vmatpush.msra.mxu0 %v1981
        %2172 = vmatpush.msra.mxu0 %v1978
        %2173 = vmatpush.msra.mxu0 %v1975
        %2174 = vmatpush.msra.mxu0 %v1972
        %2175 = vmatpush.msra.mxu0 %v1969
        %2176 = vmatpush.msra.mxu0 %v1966
        %2177 = vmatpush.msra.mxu0 %v1963
        %2178 = vmatpush.msra.mxu0 %v1960
        %2179 = vmatpush.msra.mxu0 %v1957
        %2180 = vmatpush.msra.mxu0 %v1954
        %2181 = vmatmul.f32.gmra.mxu0 %v1950
        %v2182 = vpop.f32.mrf.mxu0
        %v2183 = vadd.f32 %v2100, %v2182
        %2184 = vdwg.mxu0
        %2185 = vmatpush.msra.mxu0 %v2047
        %2186 = vmatpush.msra.mxu0 %v2044
        %2187 = vmatpush.msra.mxu0 %v2041
        %2188 = vmatpush.msra.mxu0 %v2038
        %2189 = vmatpush.msra.mxu0 %v2035
        %2190 = vmatpush.msra.mxu0 %v2032
        %2191 = vmatpush.msra.mxu0 %v2029
        %2192 = vmatpush.msra.mxu0 %v2026
        %2193 = vmatpush.msra.mxu0 %v2023
        %2194 = vmatpush.msra.mxu0 %v2020
        %2195 = vmatpush.msra.mxu0 %v2017
        %2196 = vmatpush.msra.mxu0 %v2014
        %2197 = vmatpush.msra.mxu0 %v2011
        %2198 = vmatpush.msra.mxu0 %v2008
        %2199 = vmatpush.msra.mxu0 %v2005
        %2200 = vmatpush.msra.mxu0 %v2002
        %2201 = vmatmul.f32.gmra.mxu0 %v1951
        %v2202 = vpop.f32.mrf.mxu0
        %v2203 = vadd.f32 %v2183, %v2202
        %2204 = vdwg.mxu0
        %2205 = vmatpush.msra.mxu0 %v2095
        %2206 = vmatpush.msra.mxu0 %v2092
        %2207 = vmatpush.msra.mxu0 %v2089
        %2208 = vmatpush.msra.mxu0 %v2086
        %2209 = vmatpush.msra.mxu0 %v2083
        %2210 = vmatpush.msra.mxu0 %v2080
        %2211 = vmatpush.msra.mxu0 %v2077
        %2212 = vmatpush.msra.mxu0 %v2074
        %2213 = vmatpush.msra.mxu0 %v2071
        %2214 = vmatpush.msra.mxu0 %v2068
        %2215 = vmatpush.msra.mxu0 %v2065
        %2216 = vmatpush.msra.mxu0 %v2062
        %2217 = vmatpush.msra.mxu0 %v2059
        %2218 = vmatpush.msra.mxu0 %v2056
        %2219 = vmatpush.msra.mxu0 %v2053
        %2220 = vmatpush.msra.mxu0 %v2050
        %2221 = vmatmul.f32.gmra.mxu0 %v1952
        %v2222 = vpop.f32.mrf.mxu0
        %v2223 = vadd.f32 %v2203, %v2222
        %2224 = vdwg.mxu0
        %2225 = vmatpush.msra.mxu0 %v2000
        %2226 = vmatpush.msra.mxu0 %v1997
        %2227 = vmatpush.msra.mxu0 %v1994
        %2228 = vmatpush.msra.mxu0 %v1991
        %2229 = vmatpush.msra.mxu0 %v1988
        %2230 = vmatpush.msra.mxu0 %v1985
        %2231 = vmatpush.msra.mxu0 %v1982
        %2232 = vmatpush.msra.mxu0 %v1979
        %2233 = vmatpush.msra.mxu0 %v1976
        %2234 = vmatpush.msra.mxu0 %v1973
        %2235 = vmatpush.msra.mxu0 %v1970
        %2236 = vmatpush.msra.mxu0 %v1967
        %2237 = vmatpush.msra.mxu0 %v1964
        %2238 = vmatpush.msra.mxu0 %v1961
        %2239 = vmatpush.msra.mxu0 %v1958
        %2240 = vmatpush.msra.mxu0 %v1955
        %2241 = vmatmul.f32.gmra.mxu0 %v1950
        %v2242 = vpop.f32.mrf.mxu0
        %v2243 = vadd.f32 %v2101, %v2242
        %2244 = vdwg.mxu0
        %2245 = vmatpush.msra.mxu0 %v2048
        %2246 = vmatpush.msra.mxu0 %v2045
        %2247 = vmatpush.msra.mxu0 %v2042
        %2248 = vmatpush.msra.mxu0 %v2039
        %2249 = vmatpush.msra.mxu0 %v2036
        %2250 = vmatpush.msra.mxu0 %v2033
        %2251 = vmatpush.msra.mxu0 %v2030
        %2252 = vmatpush.msra.mxu0 %v2027
        %2253 = vmatpush.msra.mxu0 %v2024
        %2254 = vmatpush.msra.mxu0 %v2021
        %2255 = vmatpush.msra.mxu0 %v2018
        %2256 = vmatpush.msra.mxu0 %v2015
        %2257 = vmatpush.msra.mxu0 %v2012
        %2258 = vmatpush.msra.mxu0 %v2009
        %2259 = vmatpush.msra.mxu0 %v2006
        %2260 = vmatpush.msra.mxu0 %v2003
        %2261 = vmatmul.f32.gmra.mxu0 %v1951
        %v2262 = vpop.f32.mrf.mxu0
        %v2263 = vadd.f32 %v2243, %v2262
        %2264 = vdwg.mxu0
        %2265 = vmatpush.msra.mxu0 %v2096
        %2266 = vmatpush.msra.mxu0 %v2093
        %2267 = vmatpush.msra.mxu0 %v2090
        %2268 = vmatpush.msra.mxu0 %v2087
        %2269 = vmatpush.msra.mxu0 %v2084
        %2270 = vmatpush.msra.mxu0 %v2081
        %2271 = vmatpush.msra.mxu0 %v2078
        %2272 = vmatpush.msra.mxu0 %v2075
        %2273 = vmatpush.msra.mxu0 %v2072
        %2274 = vmatpush.msra.mxu0 %v2069
        %2275 = vmatpush.msra.mxu0 %v2066
        %2276 = vmatpush.msra.mxu0 %v2063
        %2277 = vmatpush.msra.mxu0 %v2060
        %2278 = vmatpush.msra.mxu0 %v2057
        %2279 = vmatpush.msra.mxu0 %v2054
        %2280 = vmatpush.msra.mxu0 %v2051
        %2281 = vmatmul.f32.gmra.mxu0 %v1952
        %v2282 = vpop.f32.mrf.mxu0
        %v2283 = vadd.f32 %v2263, %v2282
        %2284 = vdwg.mxu0
        %v2285 = vadd.f32 %v429, %v2163
        %v2286 = vadd.f32 %v430, %v2223
        %v2287 = vadd.f32 %v431, %v2283
        %v2288 = vld [vmem:[%s6] sm:$0x7]
        %v2289 = vld [vmem:[%s7] sm:$0x7]
        %v2290 = vadd.f32 %v2285, %v2286
        %v2291 = vadd.f32 %v2290, %v2287
        %2292 = vadd.xlane.f32.xlu0 %v2291
        %v2293 = vpop.xlane.xlu0 %2292
        %v2294 = vmul.f32 %v2293, %v444
        %v2295 = vsub.f32 %v2285, %v2294
        %v2296 = vsub.f32 %v2286, %v2294
        %v2297 = vsub.f32 %v2287, %v2294
        %v2298 = vmul.f32 %v2295, %v2295
        %v2299 = vmul.f32 %v2296, %v2296
        %v2300 = vmul.f32 %v2297, %v2297
        %v2301 = vadd.f32 %v2298, %v2299
        %v2302 = vadd.f32 %v2301, %v2300
        %2303 = vadd.xlane.f32.xlu0 %v2302
        %v2304 = vpop.xlane.xlu0 %2303
        %v2305 = vmul.f32 %v2304, %v444
        %v2306 = vadd.f32 %v2305, 1e-05
        %v2307 = vrsqrt.pop %v2306
        %v2308 = vmul.f32 %v2307, %v2306
        %v2309 = vmul.f32 %v2308, %v2307
        %v2310 = vmul.f32 0.5, %v2309
        %v2311 = vsub.f32 1.5, %v2310
        %v2312 = vmul.f32 %v2307, %v2311
        %vm2313 = vweird.f32 %v2306
        %vm2314 = vweird.f32 %v2307
        %vm2315 = vmor %vm2313, %vm2314
        %v2316 = vsel %vm2315, %v2307, %v2312
        %v2317 = vmul.f32 %v2295, %v2316
        %v2318 = vmul.f32 %v2296, %v2316
        %v2319 = vmul.f32 %v2297, %v2316
        %v2321 = vperm.slane %v2288, 0
        %v2322 = vperm.slane %v2288, 1
        %v2323 = vperm.slane %v2288, 2
        %v2327 = vmul.f32 %v2317, %v2321
        %v2328 = vmul.f32 %v2318, %v2322
        %v2329 = vmul.f32 %v2319, %v2323
        %v2331 = vperm.slane %v2289, 0
        %v2332 = vperm.slane %v2289, 1
        %v2333 = vperm.slane %v2289, 2
        %v2337 = vadd.f32 %v2327, %v2331
        %v2338 = vadd.f32 %v2328, %v2332
        %v2339 = vadd.f32 %v2329, %v2333
        %v2340 = vld [vmem:[%s8] sm:$0xff]
        %v2341 = vld [vmem:[%s8 + $0x8] sm:$0xff]
        %v2342 = vld [vmem:[%s8 + $0x10] sm:$0xff]
        %v2343 = vld [vmem:[%s8 + $0x18] sm:$0xff]
        %v2344 = vld [vmem:[%s8 + $0x20] sm:$0xff]
        %v2345 = vld [vmem:[%s8 + $0x28] sm:$0xff]
        %v2346 = vld [vmem:[%s8 + $0x30] sm:$0xff]
        %v2347 = vld [vmem:[%s8 + $0x38] sm:$0xff]
        %v2348 = vld [vmem:[%s8 + $0x40] sm:$0xff]
        %v2349 = vld [vmem:[%s8 + $0x48] sm:$0xff]
        %v2350 = vld [vmem:[%s8 + $0x50] sm:$0xff]
        %v2351 = vld [vmem:[%s8 + $0x58] sm:$0xff]
        %v2352 = vld [vmem:[%s8 + $0x60] sm:$0xff]
        %v2353 = vld [vmem:[%s8 + $0x68] sm:$0xff]
        %v2354 = vld [vmem:[%s8 + $0x70] sm:$0xff]
        %v2355 = vld [vmem:[%s8 + $0x78] sm:$0xff]
        %v2356 = vld [vmem:[%s8 + $0x80] sm:$0xff]
        %v2357 = vld [vmem:[%s8 + $0x88] sm:$0xff]
        %v2358 = vld [vmem:[%s8 + $0x90] sm:$0xff]
        %v2359 = vld [vmem:[%s8 + $0x98] sm:$0xff]
        %v2360 = vld [vmem:[%s8 + $0xa0] sm:$0xff]
        %v2361 = vld [vmem:[%s8 + $0xa8] sm:$0xff]
        %v2362 = vld [vmem:[%s8 + $0xb0] sm:$0xff]
        %v2363 = vld [vmem:[%s8 + $0xb8] sm:$0xff]
        %v2364 = vld [vmem:[%s8 + $0xc0] sm:$0xff]
        %v2365 = vld [vmem:[%s8 + $0xc8] sm:$0xff]
        %v2366 = vld [vmem:[%s8 + $0xd0] sm:$0xff]
        %v2367 = vld [vmem:[%s8 + $0xd8] sm:$0xff]
        %v2368 = vld [vmem:[%s8 + $0xe0] sm:$0xff]
        %v2369 = vld [vmem:[%s8 + $0xe8] sm:$0xff]
        %v2370 = vld [vmem:[%s8 + $0xf0] sm:$0xff]
        %v2371 = vld [vmem:[%s8 + $0xf8] sm:$0xff]
        %v2372 = vld [vmem:[%s8 + $0x100] sm:$0xff]
        %v2373 = vld [vmem:[%s8 + $0x108] sm:$0xff]
        %v2374 = vld [vmem:[%s8 + $0x110] sm:$0xff]
        %v2375 = vld [vmem:[%s8 + $0x118] sm:$0xff]
        %v2376 = vld [vmem:[%s8 + $0x120] sm:$0xff]
        %v2377 = vld [vmem:[%s8 + $0x128] sm:$0xff]
        %v2378 = vld [vmem:[%s8 + $0x130] sm:$0xff]
        %v2379 = vld [vmem:[%s8 + $0x138] sm:$0xff]
        %v2380 = vld [vmem:[%s8 + $0x140] sm:$0xff]
        %v2381 = vld [vmem:[%s8 + $0x148] sm:$0xff]
        %v2382 = vld [vmem:[%s8 + $0x150] sm:$0xff]
        %v2383 = vld [vmem:[%s8 + $0x158] sm:$0xff]
        %v2384 = vld [vmem:[%s8 + $0x160] sm:$0xff]
        %v2385 = vld [vmem:[%s8 + $0x168] sm:$0xff]
        %v2386 = vld [vmem:[%s8 + $0x170] sm:$0xff]
        %v2387 = vld [vmem:[%s8 + $0x178] sm:$0xff]
        %v2388 = vld [vmem:[%s8 + $0x180] sm:$0xff]
        %v2389 = vld [vmem:[%s8 + $0x188] sm:$0xff]
        %v2390 = vld [vmem:[%s8 + $0x190] sm:$0xff]
        %v2391 = vld [vmem:[%s8 + $0x198] sm:$0xff]
        %v2392 = vld [vmem:[%s8 + $0x1a0] sm:$0xff]
        %v2393 = vld [vmem:[%s8 + $0x1a8] sm:$0xff]
        %v2394 = vld [vmem:[%s8 + $0x1b0] sm:$0xff]
        %v2395 = vld [vmem:[%s8 + $0x1b8] sm:$0xff]
        %v2396 = vld [vmem:[%s8 + $0x1c0] sm:$0xff]
        %v2397 = vld [vmem:[%s8 + $0x1c8] sm:$0xff]
        %v2398 = vld [vmem:[%s8 + $0x1d0] sm:$0xff]
        %v2399 = vld [vmem:[%s8 + $0x1d8] sm:$0xff]
        %v2400 = vld [vmem:[%s8 + $0x1e0] sm:$0xff]
        %v2401 = vld [vmem:[%s8 + $0x1e8] sm:$0xff]
        %v2402 = vld [vmem:[%s8 + $0x1f0] sm:$0xff]
        %v2403 = vld [vmem:[%s8 + $0x1f8] sm:$0xff]
        %v2404 = vld [vmem:[%s8 + $0x200] sm:$0xff]
        %v2405 = vld [vmem:[%s8 + $0x208] sm:$0xff]
        %v2406 = vld [vmem:[%s8 + $0x210] sm:$0xff]
        %v2407 = vld [vmem:[%s8 + $0x218] sm:$0xff]
        %v2408 = vld [vmem:[%s8 + $0x220] sm:$0xff]
        %v2409 = vld [vmem:[%s8 + $0x228] sm:$0xff]
        %v2410 = vld [vmem:[%s8 + $0x230] sm:$0xff]
        %v2411 = vld [vmem:[%s8 + $0x238] sm:$0xff]
        %v2412 = vld [vmem:[%s8 + $0x240] sm:$0xff]
        %v2413 = vld [vmem:[%s8 + $0x248] sm:$0xff]
        %v2414 = vld [vmem:[%s8 + $0x250] sm:$0xff]
        %v2415 = vld [vmem:[%s8 + $0x258] sm:$0xff]
        %v2416 = vld [vmem:[%s8 + $0x260] sm:$0xff]
        %v2417 = vld [vmem:[%s8 + $0x268] sm:$0xff]
        %v2418 = vld [vmem:[%s8 + $0x270] sm:$0xff]
        %v2419 = vld [vmem:[%s8 + $0x278] sm:$0xff]
        %v2420 = vld [vmem:[%s8 + $0x280] sm:$0xff]
        %v2421 = vld [vmem:[%s8 + $0x288] sm:$0xff]
        %v2422 = vld [vmem:[%s8 + $0x290] sm:$0xff]
        %v2423 = vld [vmem:[%s8 + $0x298] sm:$0xff]
        %v2424 = vld [vmem:[%s8 + $0x2a0] sm:$0xff]
        %v2425 = vld [vmem:[%s8 + $0x2a8] sm:$0xff]
        %v2426 = vld [vmem:[%s8 + $0x2b0] sm:$0xff]
        %v2427 = vld [vmem:[%s8 + $0x2b8] sm:$0xff]
        %v2428 = vld [vmem:[%s8 + $0x2c0] sm:$0xff]
        %v2429 = vld [vmem:[%s8 + $0x2c8] sm:$0xff]
        %v2430 = vld [vmem:[%s8 + $0x2d0] sm:$0xff]
        %v2431 = vld [vmem:[%s8 + $0x2d8] sm:$0xff]
        %v2432 = vld [vmem:[%s8 + $0x2e0] sm:$0xff]
        %v2433 = vld [vmem:[%s8 + $0x2e8] sm:$0xff]
        %v2434 = vld [vmem:[%s8 + $0x2f0] sm:$0xff]
        %v2435 = vld [vmem:[%s8 + $0x2f8] sm:$0xff]
        %v2436 = vld [vmem:[%s8 + $0x300] sm:$0xff]
        %v2437 = vld [vmem:[%s8 + $0x308] sm:$0xff]
        %v2438 = vld [vmem:[%s8 + $0x310] sm:$0xff]
        %v2439 = vld [vmem:[%s8 + $0x318] sm:$0xff]
        %v2440 = vld [vmem:[%s8 + $0x320] sm:$0xff]
        %v2441 = vld [vmem:[%s8 + $0x328] sm:$0xff]
        %v2442 = vld [vmem:[%s8 + $0x330] sm:$0xff]
        %v2443 = vld [vmem:[%s8 + $0x338] sm:$0xff]
        %v2444 = vld [vmem:[%s8 + $0x340] sm:$0xff]
        %v2445 = vld [vmem:[%s8 + $0x348] sm:$0xff]
        %v2446 = vld [vmem:[%s8 + $0x350] sm:$0xff]
        %v2447 = vld [vmem:[%s8 + $0x358] sm:$0xff]
        %v2448 = vld [vmem:[%s8 + $0x360] sm:$0xff]
        %v2449 = vld [vmem:[%s8 + $0x368] sm:$0xff]
        %v2450 = vld [vmem:[%s8 + $0x370] sm:$0xff]
        %v2451 = vld [vmem:[%s8 + $0x378] sm:$0xff]
        %v2452 = vld [vmem:[%s8 + $0x380] sm:$0xff]
        %v2453 = vld [vmem:[%s8 + $0x388] sm:$0xff]
        %v2454 = vld [vmem:[%s8 + $0x390] sm:$0xff]
        %v2455 = vld [vmem:[%s8 + $0x398] sm:$0xff]
        %v2456 = vld [vmem:[%s8 + $0x3a0] sm:$0xff]
        %v2457 = vld [vmem:[%s8 + $0x3a8] sm:$0xff]
        %v2458 = vld [vmem:[%s8 + $0x3b0] sm:$0xff]
        %v2459 = vld [vmem:[%s8 + $0x3b8] sm:$0xff]
        %v2460 = vld [vmem:[%s8 + $0x3c0] sm:$0xff]
        %v2461 = vld [vmem:[%s8 + $0x3c8] sm:$0xff]
        %v2462 = vld [vmem:[%s8 + $0x3d0] sm:$0xff]
        %v2463 = vld [vmem:[%s8 + $0x3d8] sm:$0xff]
        %v2464 = vld [vmem:[%s8 + $0x3e0] sm:$0xff]
        %v2465 = vld [vmem:[%s8 + $0x3e8] sm:$0xff]
        %v2466 = vld [vmem:[%s8 + $0x3f0] sm:$0xff]
        %v2467 = vld [vmem:[%s8 + $0x3f8] sm:$0xff]
        %v2468 = vld [vmem:[%s8 + $0x400] sm:$0xff]
        %v2469 = vld [vmem:[%s8 + $0x408] sm:$0xff]
        %v2470 = vld [vmem:[%s8 + $0x410] sm:$0xff]
        %v2471 = vld [vmem:[%s8 + $0x418] sm:$0xff]
        %v2472 = vld [vmem:[%s8 + $0x420] sm:$0xff]
        %v2473 = vld [vmem:[%s8 + $0x428] sm:$0xff]
        %v2474 = vld [vmem:[%s8 + $0x430] sm:$0xff]
        %v2475 = vld [vmem:[%s8 + $0x438] sm:$0xff]
        %v2476 = vld [vmem:[%s8 + $0x440] sm:$0xff]
        %v2477 = vld [vmem:[%s8 + $0x448] sm:$0xff]
        %v2478 = vld [vmem:[%s8 + $0x450] sm:$0xff]
        %v2479 = vld [vmem:[%s8 + $0x458] sm:$0xff]
        %v2480 = vld [vmem:[%s8 + $0x460] sm:$0xff]
        %v2481 = vld [vmem:[%s8 + $0x468] sm:$0xff]
        %v2482 = vld [vmem:[%s8 + $0x470] sm:$0xff]
        %v2483 = vld [vmem:[%s8 + $0x478] sm:$0xff]
        %v2484 = vld [vmem:[%s8 + $0x480] sm:$0xff]
        %v2485 = vld [vmem:[%s8 + $0x488] sm:$0xff]
        %v2486 = vld [vmem:[%s8 + $0x490] sm:$0xff]
        %v2487 = vld [vmem:[%s8 + $0x498] sm:$0xff]
        %v2488 = vld [vmem:[%s8 + $0x4a0] sm:$0xff]
        %v2489 = vld [vmem:[%s8 + $0x4a8] sm:$0xff]
        %v2490 = vld [vmem:[%s8 + $0x4b0] sm:$0xff]
        %v2491 = vld [vmem:[%s8 + $0x4b8] sm:$0xff]
        %v2492 = vld [vmem:[%s8 + $0x4c0] sm:$0xff]
        %v2493 = vld [vmem:[%s8 + $0x4c8] sm:$0xff]
        %v2494 = vld [vmem:[%s8 + $0x4d0] sm:$0xff]
        %v2495 = vld [vmem:[%s8 + $0x4d8] sm:$0xff]
        %v2496 = vld [vmem:[%s8 + $0x4e0] sm:$0xff]
        %v2497 = vld [vmem:[%s8 + $0x4e8] sm:$0xff]
        %v2498 = vld [vmem:[%s8 + $0x4f0] sm:$0xff]
        %v2499 = vld [vmem:[%s8 + $0x4f8] sm:$0xff]
        %v2500 = vld [vmem:[%s8 + $0x500] sm:$0xff]
        %v2501 = vld [vmem:[%s8 + $0x508] sm:$0xff]
        %v2502 = vld [vmem:[%s8 + $0x510] sm:$0xff]
        %v2503 = vld [vmem:[%s8 + $0x518] sm:$0xff]
        %v2504 = vld [vmem:[%s8 + $0x520] sm:$0xff]
        %v2505 = vld [vmem:[%s8 + $0x528] sm:$0xff]
        %v2506 = vld [vmem:[%s8 + $0x530] sm:$0xff]
        %v2507 = vld [vmem:[%s8 + $0x538] sm:$0xff]
        %v2508 = vld [vmem:[%s8 + $0x540] sm:$0xff]
        %v2509 = vld [vmem:[%s8 + $0x548] sm:$0xff]
        %v2510 = vld [vmem:[%s8 + $0x550] sm:$0xff]
        %v2511 = vld [vmem:[%s8 + $0x558] sm:$0xff]
        %v2512 = vld [vmem:[%s8 + $0x560] sm:$0xff]
        %v2513 = vld [vmem:[%s8 + $0x568] sm:$0xff]
        %v2514 = vld [vmem:[%s8 + $0x570] sm:$0xff]
        %v2515 = vld [vmem:[%s8 + $0x578] sm:$0xff]
        %v2516 = vld [vmem:[%s8 + $0x580] sm:$0xff]
        %v2517 = vld [vmem:[%s8 + $0x588] sm:$0xff]
        %v2518 = vld [vmem:[%s8 + $0x590] sm:$0xff]
        %v2519 = vld [vmem:[%s8 + $0x598] sm:$0xff]
        %v2520 = vld [vmem:[%s8 + $0x5a0] sm:$0xff]
        %v2521 = vld [vmem:[%s8 + $0x5a8] sm:$0xff]
        %v2522 = vld [vmem:[%s8 + $0x5b0] sm:$0xff]
        %v2523 = vld [vmem:[%s8 + $0x5b8] sm:$0xff]
        %v2524 = vld [vmem:[%s8 + $0x5c0] sm:$0xff]
        %v2525 = vld [vmem:[%s8 + $0x5c8] sm:$0xff]
        %v2526 = vld [vmem:[%s8 + $0x5d0] sm:$0xff]
        %v2527 = vld [vmem:[%s8 + $0x5d8] sm:$0xff]
        %v2528 = vld [vmem:[%s8 + $0x5e0] sm:$0xff]
        %v2529 = vld [vmem:[%s8 + $0x5e8] sm:$0xff]
        %v2530 = vld [vmem:[%s8 + $0x5f0] sm:$0xff]
        %v2531 = vld [vmem:[%s8 + $0x5f8] sm:$0xff]
        %v2532 = vld [vmem:[%s8 + $0x600] sm:$0xff]
        %v2533 = vld [vmem:[%s8 + $0x608] sm:$0xff]
        %v2534 = vld [vmem:[%s8 + $0x610] sm:$0xff]
        %v2535 = vld [vmem:[%s8 + $0x618] sm:$0xff]
        %v2536 = vld [vmem:[%s8 + $0x620] sm:$0xff]
        %v2537 = vld [vmem:[%s8 + $0x628] sm:$0xff]
        %v2538 = vld [vmem:[%s8 + $0x630] sm:$0xff]
        %v2539 = vld [vmem:[%s8 + $0x638] sm:$0xff]
        %v2540 = vld [vmem:[%s8 + $0x640] sm:$0xff]
        %v2541 = vld [vmem:[%s8 + $0x648] sm:$0xff]
        %v2542 = vld [vmem:[%s8 + $0x650] sm:$0xff]
        %v2543 = vld [vmem:[%s8 + $0x658] sm:$0xff]
        %v2544 = vld [vmem:[%s8 + $0x660] sm:$0xff]
        %v2545 = vld [vmem:[%s8 + $0x668] sm:$0xff]
        %v2546 = vld [vmem:[%s8 + $0x670] sm:$0xff]
        %v2547 = vld [vmem:[%s8 + $0x678] sm:$0xff]
        %v2548 = vld [vmem:[%s8 + $0x680] sm:$0xff]
        %v2549 = vld [vmem:[%s8 + $0x688] sm:$0xff]
        %v2550 = vld [vmem:[%s8 + $0x690] sm:$0xff]
        %v2551 = vld [vmem:[%s8 + $0x698] sm:$0xff]
        %v2552 = vld [vmem:[%s8 + $0x6a0] sm:$0xff]
        %v2553 = vld [vmem:[%s8 + $0x6a8] sm:$0xff]
        %v2554 = vld [vmem:[%s8 + $0x6b0] sm:$0xff]
        %v2555 = vld [vmem:[%s8 + $0x6b8] sm:$0xff]
        %v2556 = vld [vmem:[%s8 + $0x6c0] sm:$0xff]
        %v2557 = vld [vmem:[%s8 + $0x6c8] sm:$0xff]
        %v2558 = vld [vmem:[%s8 + $0x6d0] sm:$0xff]
        %v2559 = vld [vmem:[%s8 + $0x6d8] sm:$0xff]
        %v2560 = vld [vmem:[%s8 + $0x6e0] sm:$0xff]
        %v2561 = vld [vmem:[%s8 + $0x6e8] sm:$0xff]
        %v2562 = vld [vmem:[%s8 + $0x6f0] sm:$0xff]
        %v2563 = vld [vmem:[%s8 + $0x6f8] sm:$0xff]
        %v2564 = vld [vmem:[%s8 + $0x700] sm:$0xff]
        %v2565 = vld [vmem:[%s8 + $0x708] sm:$0xff]
        %v2566 = vld [vmem:[%s8 + $0x710] sm:$0xff]
        %v2567 = vld [vmem:[%s8 + $0x718] sm:$0xff]
        %v2568 = vld [vmem:[%s8 + $0x720] sm:$0xff]
        %v2569 = vld [vmem:[%s8 + $0x728] sm:$0xff]
        %v2570 = vld [vmem:[%s8 + $0x730] sm:$0xff]
        %v2571 = vld [vmem:[%s8 + $0x738] sm:$0xff]
        %v2572 = vld [vmem:[%s8 + $0x740] sm:$0xff]
        %v2573 = vld [vmem:[%s8 + $0x748] sm:$0xff]
        %v2574 = vld [vmem:[%s8 + $0x750] sm:$0xff]
        %v2575 = vld [vmem:[%s8 + $0x758] sm:$0xff]
        %v2576 = vld [vmem:[%s8 + $0x760] sm:$0xff]
        %v2577 = vld [vmem:[%s8 + $0x768] sm:$0xff]
        %v2578 = vld [vmem:[%s8 + $0x770] sm:$0xff]
        %v2579 = vld [vmem:[%s8 + $0x778] sm:$0xff]
        %v2580 = vld [vmem:[%s8 + $0x780] sm:$0xff]
        %v2581 = vld [vmem:[%s8 + $0x788] sm:$0xff]
        %v2582 = vld [vmem:[%s8 + $0x790] sm:$0xff]
        %v2583 = vld [vmem:[%s8 + $0x798] sm:$0xff]
        %v2584 = vld [vmem:[%s8 + $0x7a0] sm:$0xff]
        %v2585 = vld [vmem:[%s8 + $0x7a8] sm:$0xff]
        %v2586 = vld [vmem:[%s8 + $0x7b0] sm:$0xff]
        %v2587 = vld [vmem:[%s8 + $0x7b8] sm:$0xff]
        %v2588 = vld [vmem:[%s8 + $0x7c0] sm:$0xff]
        %v2589 = vld [vmem:[%s8 + $0x7c8] sm:$0xff]
        %v2590 = vld [vmem:[%s8 + $0x7d0] sm:$0xff]
        %v2591 = vld [vmem:[%s8 + $0x7d8] sm:$0xff]
        %v2592 = vld [vmem:[%s8 + $0x7e0] sm:$0xff]
        %v2593 = vld [vmem:[%s8 + $0x7e8] sm:$0xff]
        %v2594 = vld [vmem:[%s8 + $0x7f0] sm:$0xff]
        %v2595 = vld [vmem:[%s8 + $0x7f8] sm:$0xff]
        %v2596 = vld [vmem:[%s8 + $0x800] sm:$0xff]
        %v2597 = vld [vmem:[%s8 + $0x808] sm:$0xff]
        %v2598 = vld [vmem:[%s8 + $0x810] sm:$0xff]
        %v2599 = vld [vmem:[%s8 + $0x818] sm:$0xff]
        %v2600 = vld [vmem:[%s8 + $0x820] sm:$0xff]
        %v2601 = vld [vmem:[%s8 + $0x828] sm:$0xff]
        %v2602 = vld [vmem:[%s8 + $0x830] sm:$0xff]
        %v2603 = vld [vmem:[%s8 + $0x838] sm:$0xff]
        %v2604 = vld [vmem:[%s8 + $0x840] sm:$0xff]
        %v2605 = vld [vmem:[%s8 + $0x848] sm:$0xff]
        %v2606 = vld [vmem:[%s8 + $0x850] sm:$0xff]
        %v2607 = vld [vmem:[%s8 + $0x858] sm:$0xff]
        %v2608 = vld [vmem:[%s8 + $0x860] sm:$0xff]
        %v2609 = vld [vmem:[%s8 + $0x868] sm:$0xff]
        %v2610 = vld [vmem:[%s8 + $0x870] sm:$0xff]
        %v2611 = vld [vmem:[%s8 + $0x878] sm:$0xff]
        %v2612 = vld [vmem:[%s8 + $0x880] sm:$0xff]
        %v2613 = vld [vmem:[%s8 + $0x888] sm:$0xff]
        %v2614 = vld [vmem:[%s8 + $0x890] sm:$0xff]
        %v2615 = vld [vmem:[%s8 + $0x898] sm:$0xff]
        %v2616 = vld [vmem:[%s8 + $0x8a0] sm:$0xff]
        %v2617 = vld [vmem:[%s8 + $0x8a8] sm:$0xff]
        %v2618 = vld [vmem:[%s8 + $0x8b0] sm:$0xff]
        %v2619 = vld [vmem:[%s8 + $0x8b8] sm:$0xff]
        %v2620 = vld [vmem:[%s8 + $0x8c0] sm:$0xff]
        %v2621 = vld [vmem:[%s8 + $0x8c8] sm:$0xff]
        %v2622 = vld [vmem:[%s8 + $0x8d0] sm:$0xff]
        %v2623 = vld [vmem:[%s8 + $0x8d8] sm:$0xff]
        %v2624 = vld [vmem:[%s8 + $0x8e0] sm:$0xff]
        %v2625 = vld [vmem:[%s8 + $0x8e8] sm:$0xff]
        %v2626 = vld [vmem:[%s8 + $0x8f0] sm:$0xff]
        %v2627 = vld [vmem:[%s8 + $0x8f8] sm:$0xff]
        %v2628 = vld [vmem:[%s8 + $0x900] sm:$0xff]
        %v2629 = vld [vmem:[%s8 + $0x908] sm:$0xff]
        %v2630 = vld [vmem:[%s8 + $0x910] sm:$0xff]
        %v2631 = vld [vmem:[%s8 + $0x918] sm:$0xff]
        %v2632 = vld [vmem:[%s8 + $0x920] sm:$0xff]
        %v2633 = vld [vmem:[%s8 + $0x928] sm:$0xff]
        %v2634 = vld [vmem:[%s8 + $0x930] sm:$0xff]
        %v2635 = vld [vmem:[%s8 + $0x938] sm:$0xff]
        %v2636 = vld [vmem:[%s8 + $0x940] sm:$0xff]
        %v2637 = vld [vmem:[%s8 + $0x948] sm:$0xff]
        %v2638 = vld [vmem:[%s8 + $0x950] sm:$0xff]
        %v2639 = vld [vmem:[%s8 + $0x958] sm:$0xff]
        %v2640 = vld [vmem:[%s8 + $0x960] sm:$0xff]
        %v2641 = vld [vmem:[%s8 + $0x968] sm:$0xff]
        %v2642 = vld [vmem:[%s8 + $0x970] sm:$0xff]
        %v2643 = vld [vmem:[%s8 + $0x978] sm:$0xff]
        %v2644 = vld [vmem:[%s8 + $0x980] sm:$0xff]
        %v2645 = vld [vmem:[%s8 + $0x988] sm:$0xff]
        %v2646 = vld [vmem:[%s8 + $0x990] sm:$0xff]
        %v2647 = vld [vmem:[%s8 + $0x998] sm:$0xff]
        %v2648 = vld [vmem:[%s8 + $0x9a0] sm:$0xff]
        %v2649 = vld [vmem:[%s8 + $0x9a8] sm:$0xff]
        %v2650 = vld [vmem:[%s8 + $0x9b0] sm:$0xff]
        %v2651 = vld [vmem:[%s8 + $0x9b8] sm:$0xff]
        %v2652 = vld [vmem:[%s8 + $0x9c0] sm:$0xff]
        %v2653 = vld [vmem:[%s8 + $0x9c8] sm:$0xff]
        %v2654 = vld [vmem:[%s8 + $0x9d0] sm:$0xff]
        %v2655 = vld [vmem:[%s8 + $0x9d8] sm:$0xff]
        %v2656 = vld [vmem:[%s8 + $0x9e0] sm:$0xff]
        %v2657 = vld [vmem:[%s8 + $0x9e8] sm:$0xff]
        %v2658 = vld [vmem:[%s8 + $0x9f0] sm:$0xff]
        %v2659 = vld [vmem:[%s8 + $0x9f8] sm:$0xff]
        %v2660 = vld [vmem:[%s8 + $0xa00] sm:$0xff]
        %v2661 = vld [vmem:[%s8 + $0xa08] sm:$0xff]
        %v2662 = vld [vmem:[%s8 + $0xa10] sm:$0xff]
        %v2663 = vld [vmem:[%s8 + $0xa18] sm:$0xff]
        %v2664 = vld [vmem:[%s8 + $0xa20] sm:$0xff]
        %v2665 = vld [vmem:[%s8 + $0xa28] sm:$0xff]
        %v2666 = vld [vmem:[%s8 + $0xa30] sm:$0xff]
        %v2667 = vld [vmem:[%s8 + $0xa38] sm:$0xff]
        %v2668 = vld [vmem:[%s8 + $0xa40] sm:$0xff]
        %v2669 = vld [vmem:[%s8 + $0xa48] sm:$0xff]
        %v2670 = vld [vmem:[%s8 + $0xa50] sm:$0xff]
        %v2671 = vld [vmem:[%s8 + $0xa58] sm:$0xff]
        %v2672 = vld [vmem:[%s8 + $0xa60] sm:$0xff]
        %v2673 = vld [vmem:[%s8 + $0xa68] sm:$0xff]
        %v2674 = vld [vmem:[%s8 + $0xa70] sm:$0xff]
        %v2675 = vld [vmem:[%s8 + $0xa78] sm:$0xff]
        %v2676 = vld [vmem:[%s8 + $0xa80] sm:$0xff]
        %v2677 = vld [vmem:[%s8 + $0xa88] sm:$0xff]
        %v2678 = vld [vmem:[%s8 + $0xa90] sm:$0xff]
        %v2679 = vld [vmem:[%s8 + $0xa98] sm:$0xff]
        %v2680 = vld [vmem:[%s8 + $0xaa0] sm:$0xff]
        %v2681 = vld [vmem:[%s8 + $0xaa8] sm:$0xff]
        %v2682 = vld [vmem:[%s8 + $0xab0] sm:$0xff]
        %v2683 = vld [vmem:[%s8 + $0xab8] sm:$0xff]
        %v2684 = vld [vmem:[%s8 + $0xac0] sm:$0xff]
        %v2685 = vld [vmem:[%s8 + $0xac8] sm:$0xff]
        %v2686 = vld [vmem:[%s8 + $0xad0] sm:$0xff]
        %v2687 = vld [vmem:[%s8 + $0xad8] sm:$0xff]
        %v2688 = vld [vmem:[%s8 + $0xae0] sm:$0xff]
        %v2689 = vld [vmem:[%s8 + $0xae8] sm:$0xff]
        %v2690 = vld [vmem:[%s8 + $0xaf0] sm:$0xff]
        %v2691 = vld [vmem:[%s8 + $0xaf8] sm:$0xff]
        %v2692 = vld [vmem:[%s8 + $0xb00] sm:$0xff]
        %v2693 = vld [vmem:[%s8 + $0xb08] sm:$0xff]
        %v2694 = vld [vmem:[%s8 + $0xb10] sm:$0xff]
        %v2695 = vld [vmem:[%s8 + $0xb18] sm:$0xff]
        %v2696 = vld [vmem:[%s8 + $0xb20] sm:$0xff]
        %v2697 = vld [vmem:[%s8 + $0xb28] sm:$0xff]
        %v2698 = vld [vmem:[%s8 + $0xb30] sm:$0xff]
        %v2699 = vld [vmem:[%s8 + $0xb38] sm:$0xff]
        %v2700 = vld [vmem:[%s8 + $0xb40] sm:$0xff]
        %v2701 = vld [vmem:[%s8 + $0xb48] sm:$0xff]
        %v2702 = vld [vmem:[%s8 + $0xb50] sm:$0xff]
        %v2703 = vld [vmem:[%s8 + $0xb58] sm:$0xff]
        %v2704 = vld [vmem:[%s8 + $0xb60] sm:$0xff]
        %v2705 = vld [vmem:[%s8 + $0xb68] sm:$0xff]
        %v2706 = vld [vmem:[%s8 + $0xb70] sm:$0xff]
        %v2707 = vld [vmem:[%s8 + $0xb78] sm:$0xff]
        %v2708 = vld [vmem:[%s8 + $0xb80] sm:$0xff]
        %v2709 = vld [vmem:[%s8 + $0xb88] sm:$0xff]
        %v2710 = vld [vmem:[%s8 + $0xb90] sm:$0xff]
        %v2711 = vld [vmem:[%s8 + $0xb98] sm:$0xff]
        %v2712 = vld [vmem:[%s8 + $0xba0] sm:$0xff]
        %v2713 = vld [vmem:[%s8 + $0xba8] sm:$0xff]
        %v2714 = vld [vmem:[%s8 + $0xbb0] sm:$0xff]
        %v2715 = vld [vmem:[%s8 + $0xbb8] sm:$0xff]
        %v2716 = vld [vmem:[%s8 + $0xbc0] sm:$0xff]
        %v2717 = vld [vmem:[%s8 + $0xbc8] sm:$0xff]
        %v2718 = vld [vmem:[%s8 + $0xbd0] sm:$0xff]
        %v2719 = vld [vmem:[%s8 + $0xbd8] sm:$0xff]
        %v2720 = vld [vmem:[%s8 + $0xbe0] sm:$0xff]
        %v2721 = vld [vmem:[%s8 + $0xbe8] sm:$0xff]
        %v2722 = vld [vmem:[%s8 + $0xbf0] sm:$0xff]
        %v2723 = vld [vmem:[%s8 + $0xbf8] sm:$0xff]
        %v2724 = vld [vmem:[%s8 + $0xc00] sm:$0xff]
        %v2725 = vld [vmem:[%s8 + $0xc08] sm:$0xff]
        %v2726 = vld [vmem:[%s8 + $0xc10] sm:$0xff]
        %v2727 = vld [vmem:[%s8 + $0xc18] sm:$0xff]
        %v2728 = vld [vmem:[%s8 + $0xc20] sm:$0xff]
        %v2729 = vld [vmem:[%s8 + $0xc28] sm:$0xff]
        %v2730 = vld [vmem:[%s8 + $0xc30] sm:$0xff]
        %v2731 = vld [vmem:[%s8 + $0xc38] sm:$0xff]
        %v2732 = vld [vmem:[%s8 + $0xc40] sm:$0xff]
        %v2733 = vld [vmem:[%s8 + $0xc48] sm:$0xff]
        %v2734 = vld [vmem:[%s8 + $0xc50] sm:$0xff]
        %v2735 = vld [vmem:[%s8 + $0xc58] sm:$0xff]
        %v2736 = vld [vmem:[%s8 + $0xc60] sm:$0xff]
        %v2737 = vld [vmem:[%s8 + $0xc68] sm:$0xff]
        %v2738 = vld [vmem:[%s8 + $0xc70] sm:$0xff]
        %v2739 = vld [vmem:[%s8 + $0xc78] sm:$0xff]
        %v2740 = vld [vmem:[%s8 + $0xc80] sm:$0xff]
        %v2741 = vld [vmem:[%s8 + $0xc88] sm:$0xff]
        %v2742 = vld [vmem:[%s8 + $0xc90] sm:$0xff]
        %v2743 = vld [vmem:[%s8 + $0xc98] sm:$0xff]
        %v2744 = vld [vmem:[%s8 + $0xca0] sm:$0xff]
        %v2745 = vld [vmem:[%s8 + $0xca8] sm:$0xff]
        %v2746 = vld [vmem:[%s8 + $0xcb0] sm:$0xff]
        %v2747 = vld [vmem:[%s8 + $0xcb8] sm:$0xff]
        %v2748 = vld [vmem:[%s8 + $0xcc0] sm:$0xff]
        %v2749 = vld [vmem:[%s8 + $0xcc8] sm:$0xff]
        %v2750 = vld [vmem:[%s8 + $0xcd0] sm:$0xff]
        %v2751 = vld [vmem:[%s8 + $0xcd8] sm:$0xff]
        %v2752 = vld [vmem:[%s8 + $0xce0] sm:$0xff]
        %v2753 = vld [vmem:[%s8 + $0xce8] sm:$0xff]
        %v2754 = vld [vmem:[%s8 + $0xcf0] sm:$0xff]
        %v2755 = vld [vmem:[%s8 + $0xcf8] sm:$0xff]
        %v2756 = vld [vmem:[%s8 + $0xd00] sm:$0xff]
        %v2757 = vld [vmem:[%s8 + $0xd08] sm:$0xff]
        %v2758 = vld [vmem:[%s8 + $0xd10] sm:$0xff]
        %v2759 = vld [vmem:[%s8 + $0xd18] sm:$0xff]
        %v2760 = vld [vmem:[%s8 + $0xd20] sm:$0xff]
        %v2761 = vld [vmem:[%s8 + $0xd28] sm:$0xff]
        %v2762 = vld [vmem:[%s8 + $0xd30] sm:$0xff]
        %v2763 = vld [vmem:[%s8 + $0xd38] sm:$0xff]
        %v2764 = vld [vmem:[%s8 + $0xd40] sm:$0xff]
        %v2765 = vld [vmem:[%s8 + $0xd48] sm:$0xff]
        %v2766 = vld [vmem:[%s8 + $0xd50] sm:$0xff]
        %v2767 = vld [vmem:[%s8 + $0xd58] sm:$0xff]
        %v2768 = vld [vmem:[%s8 + $0xd60] sm:$0xff]
        %v2769 = vld [vmem:[%s8 + $0xd68] sm:$0xff]
        %v2770 = vld [vmem:[%s8 + $0xd70] sm:$0xff]
        %v2771 = vld [vmem:[%s8 + $0xd78] sm:$0xff]
        %v2772 = vld [vmem:[%s8 + $0xd80] sm:$0xff]
        %v2773 = vld [vmem:[%s8 + $0xd88] sm:$0xff]
        %v2774 = vld [vmem:[%s8 + $0xd90] sm:$0xff]
        %v2775 = vld [vmem:[%s8 + $0xd98] sm:$0xff]
        %v2776 = vld [vmem:[%s8 + $0xda0] sm:$0xff]
        %v2777 = vld [vmem:[%s8 + $0xda8] sm:$0xff]
        %v2778 = vld [vmem:[%s8 + $0xdb0] sm:$0xff]
        %v2779 = vld [vmem:[%s8 + $0xdb8] sm:$0xff]
        %v2780 = vld [vmem:[%s8 + $0xdc0] sm:$0xff]
        %v2781 = vld [vmem:[%s8 + $0xdc8] sm:$0xff]
        %v2782 = vld [vmem:[%s8 + $0xdd0] sm:$0xff]
        %v2783 = vld [vmem:[%s8 + $0xdd8] sm:$0xff]
        %v2784 = vld [vmem:[%s8 + $0xde0] sm:$0xff]
        %v2785 = vld [vmem:[%s8 + $0xde8] sm:$0xff]
        %v2786 = vld [vmem:[%s8 + $0xdf0] sm:$0xff]
        %v2787 = vld [vmem:[%s8 + $0xdf8] sm:$0xff]
        %v2788 = vld [vmem:[%s8 + $0xe00] sm:$0xff]
        %v2789 = vld [vmem:[%s8 + $0xe08] sm:$0xff]
        %v2790 = vld [vmem:[%s8 + $0xe10] sm:$0xff]
        %v2791 = vld [vmem:[%s8 + $0xe18] sm:$0xff]
        %v2792 = vld [vmem:[%s8 + $0xe20] sm:$0xff]
        %v2793 = vld [vmem:[%s8 + $0xe28] sm:$0xff]
        %v2794 = vld [vmem:[%s8 + $0xe30] sm:$0xff]
        %v2795 = vld [vmem:[%s8 + $0xe38] sm:$0xff]
        %v2796 = vld [vmem:[%s8 + $0xe40] sm:$0xff]
        %v2797 = vld [vmem:[%s8 + $0xe48] sm:$0xff]
        %v2798 = vld [vmem:[%s8 + $0xe50] sm:$0xff]
        %v2799 = vld [vmem:[%s8 + $0xe58] sm:$0xff]
        %v2800 = vld [vmem:[%s8 + $0xe60] sm:$0xff]
        %v2801 = vld [vmem:[%s8 + $0xe68] sm:$0xff]
        %v2802 = vld [vmem:[%s8 + $0xe70] sm:$0xff]
        %v2803 = vld [vmem:[%s8 + $0xe78] sm:$0xff]
        %v2804 = vld [vmem:[%s8 + $0xe80] sm:$0xff]
        %v2805 = vld [vmem:[%s8 + $0xe88] sm:$0xff]
        %v2806 = vld [vmem:[%s8 + $0xe90] sm:$0xff]
        %v2807 = vld [vmem:[%s8 + $0xe98] sm:$0xff]
        %v2808 = vld [vmem:[%s8 + $0xea0] sm:$0xff]
        %v2809 = vld [vmem:[%s8 + $0xea8] sm:$0xff]
        %v2810 = vld [vmem:[%s8 + $0xeb0] sm:$0xff]
        %v2811 = vld [vmem:[%s8 + $0xeb8] sm:$0xff]
        %v2812 = vld [vmem:[%s8 + $0xec0] sm:$0xff]
        %v2813 = vld [vmem:[%s8 + $0xec8] sm:$0xff]
        %v2814 = vld [vmem:[%s8 + $0xed0] sm:$0xff]
        %v2815 = vld [vmem:[%s8 + $0xed8] sm:$0xff]
        %v2816 = vld [vmem:[%s8 + $0xee0] sm:$0xff]
        %v2817 = vld [vmem:[%s8 + $0xee8] sm:$0xff]
        %v2818 = vld [vmem:[%s8 + $0xef0] sm:$0xff]
        %v2819 = vld [vmem:[%s8 + $0xef8] sm:$0xff]
        %v2820 = vld [vmem:[%s8 + $0xf00] sm:$0xff]
        %v2821 = vld [vmem:[%s8 + $0xf08] sm:$0xff]
        %v2822 = vld [vmem:[%s8 + $0xf10] sm:$0xff]
        %v2823 = vld [vmem:[%s8 + $0xf18] sm:$0xff]
        %v2824 = vld [vmem:[%s8 + $0xf20] sm:$0xff]
        %v2825 = vld [vmem:[%s8 + $0xf28] sm:$0xff]
        %v2826 = vld [vmem:[%s8 + $0xf30] sm:$0xff]
        %v2827 = vld [vmem:[%s8 + $0xf38] sm:$0xff]
        %v2828 = vld [vmem:[%s8 + $0xf40] sm:$0xff]
        %v2829 = vld [vmem:[%s8 + $0xf48] sm:$0xff]
        %v2830 = vld [vmem:[%s8 + $0xf50] sm:$0xff]
        %v2831 = vld [vmem:[%s8 + $0xf58] sm:$0xff]
        %v2832 = vld [vmem:[%s8 + $0xf60] sm:$0xff]
        %v2833 = vld [vmem:[%s8 + $0xf68] sm:$0xff]
        %v2834 = vld [vmem:[%s8 + $0xf70] sm:$0xff]
        %v2835 = vld [vmem:[%s8 + $0xf78] sm:$0xff]
        %v2836 = vld [vmem:[%s8 + $0xf80] sm:$0xff]
        %v2837 = vld [vmem:[%s8 + $0xf88] sm:$0xff]
        %v2838 = vld [vmem:[%s8 + $0xf90] sm:$0xff]
        %v2839 = vld [vmem:[%s8 + $0xf98] sm:$0xff]
        %v2840 = vld [vmem:[%s8 + $0xfa0] sm:$0xff]
        %v2841 = vld [vmem:[%s8 + $0xfa8] sm:$0xff]
        %v2842 = vld [vmem:[%s8 + $0xfb0] sm:$0xff]
        %v2843 = vld [vmem:[%s8 + $0xfb8] sm:$0xff]
        %v2844 = vld [vmem:[%s8 + $0xfc0] sm:$0xff]
        %v2845 = vld [vmem:[%s8 + $0xfc8] sm:$0xff]
        %v2846 = vld [vmem:[%s8 + $0xfd0] sm:$0xff]
        %v2847 = vld [vmem:[%s8 + $0xfd8] sm:$0xff]
        %v2848 = vld [vmem:[%s8 + $0xfe0] sm:$0xff]
        %v2849 = vld [vmem:[%s8 + $0xfe8] sm:$0xff]
        %v2850 = vld [vmem:[%s8 + $0xff0] sm:$0xff]
        %v2851 = vld [vmem:[%s8 + $0xff8] sm:$0xff]
        %v2852 = vld [vmem:[%s8 + $0x1000] sm:$0xff]
        %v2853 = vld [vmem:[%s8 + $0x1008] sm:$0xff]
        %v2854 = vld [vmem:[%s8 + $0x1010] sm:$0xff]
        %v2855 = vld [vmem:[%s8 + $0x1018] sm:$0xff]
        %v2856 = vld [vmem:[%s8 + $0x1020] sm:$0xff]
        %v2857 = vld [vmem:[%s8 + $0x1028] sm:$0xff]
        %v2858 = vld [vmem:[%s8 + $0x1030] sm:$0xff]
        %v2859 = vld [vmem:[%s8 + $0x1038] sm:$0xff]
        %v2860 = vld [vmem:[%s8 + $0x1040] sm:$0xff]
        %v2861 = vld [vmem:[%s8 + $0x1048] sm:$0xff]
        %v2862 = vld [vmem:[%s8 + $0x1050] sm:$0xff]
        %v2863 = vld [vmem:[%s8 + $0x1058] sm:$0xff]
        %v2864 = vld [vmem:[%s8 + $0x1060] sm:$0xff]
        %v2865 = vld [vmem:[%s8 + $0x1068] sm:$0xff]
        %v2866 = vld [vmem:[%s8 + $0x1070] sm:$0xff]
        %v2867 = vld [vmem:[%s8 + $0x1078] sm:$0xff]
        %v2868 = vld [vmem:[%s8 + $0x1080] sm:$0xff]
        %v2869 = vld [vmem:[%s8 + $0x1088] sm:$0xff]
        %v2870 = vld [vmem:[%s8 + $0x1090] sm:$0xff]
        %v2871 = vld [vmem:[%s8 + $0x1098] sm:$0xff]
        %v2872 = vld [vmem:[%s8 + $0x10a0] sm:$0xff]
        %v2873 = vld [vmem:[%s8 + $0x10a8] sm:$0xff]
        %v2874 = vld [vmem:[%s8 + $0x10b0] sm:$0xff]
        %v2875 = vld [vmem:[%s8 + $0x10b8] sm:$0xff]
        %v2876 = vld [vmem:[%s8 + $0x10c0] sm:$0xff]
        %v2877 = vld [vmem:[%s8 + $0x10c8] sm:$0xff]
        %v2878 = vld [vmem:[%s8 + $0x10d0] sm:$0xff]
        %v2879 = vld [vmem:[%s8 + $0x10d8] sm:$0xff]
        %v2880 = vld [vmem:[%s8 + $0x10e0] sm:$0xff]
        %v2881 = vld [vmem:[%s8 + $0x10e8] sm:$0xff]
        %v2882 = vld [vmem:[%s8 + $0x10f0] sm:$0xff]
        %v2883 = vld [vmem:[%s8 + $0x10f8] sm:$0xff]
        %v2884 = vld [vmem:[%s8 + $0x1100] sm:$0xff]
        %v2885 = vld [vmem:[%s8 + $0x1108] sm:$0xff]
        %v2886 = vld [vmem:[%s8 + $0x1110] sm:$0xff]
        %v2887 = vld [vmem:[%s8 + $0x1118] sm:$0xff]
        %v2888 = vld [vmem:[%s8 + $0x1120] sm:$0xff]
        %v2889 = vld [vmem:[%s8 + $0x1128] sm:$0xff]
        %v2890 = vld [vmem:[%s8 + $0x1130] sm:$0xff]
        %v2891 = vld [vmem:[%s8 + $0x1138] sm:$0xff]
        %v2892 = vld [vmem:[%s8 + $0x1140] sm:$0xff]
        %v2893 = vld [vmem:[%s8 + $0x1148] sm:$0xff]
        %v2894 = vld [vmem:[%s8 + $0x1150] sm:$0xff]
        %v2895 = vld [vmem:[%s8 + $0x1158] sm:$0xff]
        %v2896 = vld [vmem:[%s8 + $0x1160] sm:$0xff]
        %v2897 = vld [vmem:[%s8 + $0x1168] sm:$0xff]
        %v2898 = vld [vmem:[%s8 + $0x1170] sm:$0xff]
        %v2899 = vld [vmem:[%s8 + $0x1178] sm:$0xff]
        %v2900 = vld [vmem:[%s8 + $0x1180] sm:$0xff]
        %v2901 = vld [vmem:[%s8 + $0x1188] sm:$0xff]
        %v2902 = vld [vmem:[%s8 + $0x1190] sm:$0xff]
        %v2903 = vld [vmem:[%s8 + $0x1198] sm:$0xff]
        %v2904 = vld [vmem:[%s8 + $0x11a0] sm:$0xff]
        %v2905 = vld [vmem:[%s8 + $0x11a8] sm:$0xff]
        %v2906 = vld [vmem:[%s8 + $0x11b0] sm:$0xff]
        %v2907 = vld [vmem:[%s8 + $0x11b8] sm:$0xff]
        %v2908 = vld [vmem:[%s8 + $0x11c0] sm:$0xff]
        %v2909 = vld [vmem:[%s8 + $0x11c8] sm:$0xff]
        %v2910 = vld [vmem:[%s8 + $0x11d0] sm:$0xff]
        %v2911 = vld [vmem:[%s8 + $0x11d8] sm:$0xff]
        %v2912 = vld [vmem:[%s8 + $0x11e0] sm:$0xff]
        %v2913 = vld [vmem:[%s8 + $0x11e8] sm:$0xff]
        %v2914 = vld [vmem:[%s8 + $0x11f0] sm:$0xff]
        %v2915 = vld [vmem:[%s8 + $0x11f8] sm:$0xff]
        %v2916 = vld [vmem:[%s9] sm:$0xff]
        %v2917 = vld [vmem:[%s9 + $0x8] sm:$0xf]
        %v2920 = vperm.slane %v2916, 0
        %v2921 = vperm.slane %v2916, 1
        %v2922 = vperm.slane %v2916, 2
        %v2923 = vperm.slane %v2916, 3
        %v2924 = vperm.slane %v2916, 4
        %v2925 = vperm.slane %v2916, 5
        %v2926 = vperm.slane %v2916, 6
        %v2927 = vperm.slane %v2916, 7
        %v2928 = vperm.slane %v2917, 0
        %v2929 = vperm.slane %v2917, 1
        %v2930 = vperm.slane %v2917, 2
        %v2931 = vperm.slane %v2917, 3
        %2944 = vmatpush.msra.mxu0 %v2520
        %2945 = vmatpush.msra.mxu0 %v2508
        %2946 = vmatpush.msra.mxu0 %v2496
        %2947 = vmatpush.msra.mxu0 %v2484
        %2948 = vmatpush.msra.mxu0 %v2472
        %2949 = vmatpush.msra.mxu0 %v2460
        %2950 = vmatpush.msra.mxu0 %v2448
        %2951 = vmatpush.msra.mxu0 %v2436
        %2952 = vmatpush.msra.mxu0 %v2424
        %2953 = vmatpush.msra.mxu0 %v2412
        %2954 = vmatpush.msra.mxu0 %v2400
        %2955 = vmatpush.msra.mxu0 %v2388
        %2956 = vmatpush.msra.mxu0 %v2376
        %2957 = vmatpush.msra.mxu0 %v2364
        %2958 = vmatpush.msra.mxu0 %v2352
        %2959 = vmatpush.msra.mxu0 %v2340
        %2960 = vmatmul.f32.gmra.mxu0 %v2337
        %v2961 = vpop.f32.mrf.mxu0
        %v2962 = vadd.f32 %v2920, %v2961
        %2963 = vdwg.mxu0
        %2964 = vmatpush.msra.mxu0 %v2712
        %2965 = vmatpush.msra.mxu0 %v2700
        %2966 = vmatpush.msra.mxu0 %v2688
        %2967 = vmatpush.msra.mxu0 %v2676
        %2968 = vmatpush.msra.mxu0 %v2664
        %2969 = vmatpush.msra.mxu0 %v2652
        %2970 = vmatpush.msra.mxu0 %v2640
        %2971 = vmatpush.msra.mxu0 %v2628
        %2972 = vmatpush.msra.mxu0 %v2616
        %2973 = vmatpush.msra.mxu0 %v2604
        %2974 = vmatpush.msra.mxu0 %v2592
        %2975 = vmatpush.msra.mxu0 %v2580
        %2976 = vmatpush.msra.mxu0 %v2568
        %2977 = vmatpush.msra.mxu0 %v2556
        %2978 = vmatpush.msra.mxu0 %v2544
        %2979 = vmatpush.msra.mxu0 %v2532
        %2980 = vmatmul.f32.gmra.mxu0 %v2338
        %v2981 = vpop.f32.mrf.mxu0
        %v2982 = vadd.f32 %v2962, %v2981
        %2983 = vdwg.mxu0
        %2984 = vmatpush.msra.mxu0 %v2904
        %2985 = vmatpush.msra.mxu0 %v2892
        %2986 = vmatpush.msra.mxu0 %v2880
        %2987 = vmatpush.msra.mxu0 %v2868
        %2988 = vmatpush.msra.mxu0 %v2856
        %2989 = vmatpush.msra.mxu0 %v2844
        %2990 = vmatpush.msra.mxu0 %v2832
        %2991 = vmatpush.msra.mxu0 %v2820
        %2992 = vmatpush.msra.mxu0 %v2808
        %2993 = vmatpush.msra.mxu0 %v2796
        %2994 = vmatpush.msra.mxu0 %v2784
        %2995 = vmatpush.msra.mxu0 %v2772
        %2996 = vmatpush.msra.mxu0 %v2760
        %2997 = vmatpush.msra.mxu0 %v2748
        %2998 = vmatpush.msra.mxu0 %v2736
        %2999 = vmatpush.msra.mxu0 %v2724
        %3000 = vmatmul.f32.gmra.mxu0 %v2339
        %v3001 = vpop.f32.mrf.mxu0
        %v3002 = vadd.f32 %v2982, %v3001
        %3003 = vdwg.mxu0
        %3004 = vmatpush.msra.mxu0 %v2521
        %3005 = vmatpush.msra.mxu0 %v2509
        %3006 = vmatpush.msra.mxu0 %v2497
        %3007 = vmatpush.msra.mxu0 %v2485
        %3008 = vmatpush.msra.mxu0 %v2473
        %3009 = vmatpush.msra.mxu0 %v2461
        %3010 = vmatpush.msra.mxu0 %v2449
        %3011 = vmatpush.msra.mxu0 %v2437
        %3012 = vmatpush.msra.mxu0 %v2425
        %3013 = vmatpush.msra.mxu0 %v2413
        %3014 = vmatpush.msra.mxu0 %v2401
        %3015 = vmatpush.msra.mxu0 %v2389
        %3016 = vmatpush.msra.mxu0 %v2377
        %3017 = vmatpush.msra.mxu0 %v2365
        %3018 = vmatpush.msra.mxu0 %v2353
        %3019 = vmatpush.msra.mxu0 %v2341
        %3020 = vmatmul.f32.gmra.mxu0 %v2337
        %v3021 = vpop.f32.mrf.mxu0
        %v3022 = vadd.f32 %v2921, %v3021
        %3023 = vdwg.mxu0
        %3024 = vmatpush.msra.mxu0 %v2713
        %3025 = vmatpush.msra.mxu0 %v2701
        %3026 = vmatpush.msra.mxu0 %v2689
        %3027 = vmatpush.msra.mxu0 %v2677
        %3028 = vmatpush.msra.mxu0 %v2665
        %3029 = vmatpush.msra.mxu0 %v2653
        %3030 = vmatpush.msra.mxu0 %v2641
        %3031 = vmatpush.msra.mxu0 %v2629
        %3032 = vmatpush.msra.mxu0 %v2617
        %3033 = vmatpush.msra.mxu0 %v2605
        %3034 = vmatpush.msra.mxu0 %v2593
        %3035 = vmatpush.msra.mxu0 %v2581
        %3036 = vmatpush.msra.mxu0 %v2569
        %3037 = vmatpush.msra.mxu0 %v2557
        %3038 = vmatpush.msra.mxu0 %v2545
        %3039 = vmatpush.msra.mxu0 %v2533
        %3040 = vmatmul.f32.gmra.mxu0 %v2338
        %v3041 = vpop.f32.mrf.mxu0
        %v3042 = vadd.f32 %v3022, %v3041
        %3043 = vdwg.mxu0
        %3044 = vmatpush.msra.mxu0 %v2905
        %3045 = vmatpush.msra.mxu0 %v2893
        %3046 = vmatpush.msra.mxu0 %v2881
        %3047 = vmatpush.msra.mxu0 %v2869
        %3048 = vmatpush.msra.mxu0 %v2857
        %3049 = vmatpush.msra.mxu0 %v2845
        %3050 = vmatpush.msra.mxu0 %v2833
        %3051 = vmatpush.msra.mxu0 %v2821
        %3052 = vmatpush.msra.mxu0 %v2809
        %3053 = vmatpush.msra.mxu0 %v2797
        %3054 = vmatpush.msra.mxu0 %v2785
        %3055 = vmatpush.msra.mxu0 %v2773
        %3056 = vmatpush.msra.mxu0 %v2761
        %3057 = vmatpush.msra.mxu0 %v2749
        %3058 = vmatpush.msra.mxu0 %v2737
        %3059 = vmatpush.msra.mxu0 %v2725
        %3060 = vmatmul.f32.gmra.mxu0 %v2339
        %v3061 = vpop.f32.mrf.mxu0
        %v3062 = vadd.f32 %v3042, %v3061
        %3063 = vdwg.mxu0
        %3064 = vmatpush.msra.mxu0 %v2522
        %3065 = vmatpush.msra.mxu0 %v2510
        %3066 = vmatpush.msra.mxu0 %v2498
        %3067 = vmatpush.msra.mxu0 %v2486
        %3068 = vmatpush.msra.mxu0 %v2474
        %3069 = vmatpush.msra.mxu0 %v2462
        %3070 = vmatpush.msra.mxu0 %v2450
        %3071 = vmatpush.msra.mxu0 %v2438
        %3072 = vmatpush.msra.mxu0 %v2426
        %3073 = vmatpush.msra.mxu0 %v2414
        %3074 = vmatpush.msra.mxu0 %v2402
        %3075 = vmatpush.msra.mxu0 %v2390
        %3076 = vmatpush.msra.mxu0 %v2378
        %3077 = vmatpush.msra.mxu0 %v2366
        %3078 = vmatpush.msra.mxu0 %v2354
        %3079 = vmatpush.msra.mxu0 %v2342
        %3080 = vmatmul.f32.gmra.mxu0 %v2337
        %v3081 = vpop.f32.mrf.mxu0
        %v3082 = vadd.f32 %v2922, %v3081
        %3083 = vdwg.mxu0
        %3084 = vmatpush.msra.mxu0 %v2714
        %3085 = vmatpush.msra.mxu0 %v2702
        %3086 = vmatpush.msra.mxu0 %v2690
        %3087 = vmatpush.msra.mxu0 %v2678
        %3088 = vmatpush.msra.mxu0 %v2666
        %3089 = vmatpush.msra.mxu0 %v2654
        %3090 = vmatpush.msra.mxu0 %v2642
        %3091 = vmatpush.msra.mxu0 %v2630
        %3092 = vmatpush.msra.mxu0 %v2618
        %3093 = vmatpush.msra.mxu0 %v2606
        %3094 = vmatpush.msra.mxu0 %v2594
        %3095 = vmatpush.msra.mxu0 %v2582
        %3096 = vmatpush.msra.mxu0 %v2570
        %3097 = vmatpush.msra.mxu0 %v2558
        %3098 = vmatpush.msra.mxu0 %v2546
        %3099 = vmatpush.msra.mxu0 %v2534
        %3100 = vmatmul.f32.gmra.mxu0 %v2338
        %v3101 = vpop.f32.mrf.mxu0
        %v3102 = vadd.f32 %v3082, %v3101
        %3103 = vdwg.mxu0
        %3104 = vmatpush.msra.mxu0 %v2906
        %3105 = vmatpush.msra.mxu0 %v2894
        %3106 = vmatpush.msra.mxu0 %v2882
        %3107 = vmatpush.msra.mxu0 %v2870
        %3108 = vmatpush.msra.mxu0 %v2858
        %3109 = vmatpush.msra.mxu0 %v2846
        %3110 = vmatpush.msra.mxu0 %v2834
        %3111 = vmatpush.msra.mxu0 %v2822
        %3112 = vmatpush.msra.mxu0 %v2810
        %3113 = vmatpush.msra.mxu0 %v2798
        %3114 = vmatpush.msra.mxu0 %v2786
        %3115 = vmatpush.msra.mxu0 %v2774
        %3116 = vmatpush.msra.mxu0 %v2762
        %3117 = vmatpush.msra.mxu0 %v2750
        %3118 = vmatpush.msra.mxu0 %v2738
        %3119 = vmatpush.msra.mxu0 %v2726
        %3120 = vmatmul.f32.gmra.mxu0 %v2339
        %v3121 = vpop.f32.mrf.mxu0
        %v3122 = vadd.f32 %v3102, %v3121
        %3123 = vdwg.mxu0
        %3124 = vmatpush.msra.mxu0 %v2523
        %3125 = vmatpush.msra.mxu0 %v2511
        %3126 = vmatpush.msra.mxu0 %v2499
        %3127 = vmatpush.msra.mxu0 %v2487
        %3128 = vmatpush.msra.mxu0 %v2475
        %3129 = vmatpush.msra.mxu0 %v2463
        %3130 = vmatpush.msra.mxu0 %v2451
        %3131 = vmatpush.msra.mxu0 %v2439
        %3132 = vmatpush.msra.mxu0 %v2427
        %3133 = vmatpush.msra.mxu0 %v2415
        %3134 = vmatpush.msra.mxu0 %v2403
        %3135 = vmatpush.msra.mxu0 %v2391
        %3136 = vmatpush.msra.mxu0 %v2379
        %3137 = vmatpush.msra.mxu0 %v2367
        %3138 = vmatpush.msra.mxu0 %v2355
        %3139 = vmatpush.msra.mxu0 %v2343
        %3140 = vmatmul.f32.gmra.mxu0 %v2337
        %v3141 = vpop.f32.mrf.mxu0
        %v3142 = vadd.f32 %v2923, %v3141
        %3143 = vdwg.mxu0
        %3144 = vmatpush.msra.mxu0 %v2715
        %3145 = vmatpush.msra.mxu0 %v2703
        %3146 = vmatpush.msra.mxu0 %v2691
        %3147 = vmatpush.msra.mxu0 %v2679
        %3148 = vmatpush.msra.mxu0 %v2667
        %3149 = vmatpush.msra.mxu0 %v2655
        %3150 = vmatpush.msra.mxu0 %v2643
        %3151 = vmatpush.msra.mxu0 %v2631
        %3152 = vmatpush.msra.mxu0 %v2619
        %3153 = vmatpush.msra.mxu0 %v2607
        %3154 = vmatpush.msra.mxu0 %v2595
        %3155 = vmatpush.msra.mxu0 %v2583
        %3156 = vmatpush.msra.mxu0 %v2571
        %3157 = vmatpush.msra.mxu0 %v2559
        %3158 = vmatpush.msra.mxu0 %v2547
        %3159 = vmatpush.msra.mxu0 %v2535
        %3160 = vmatmul.f32.gmra.mxu0 %v2338
        %v3161 = vpop.f32.mrf.mxu0
        %v3162 = vadd.f32 %v3142, %v3161
        %3163 = vdwg.mxu0
        %3164 = vmatpush.msra.mxu0 %v2907
        %3165 = vmatpush.msra.mxu0 %v2895
        %3166 = vmatpush.msra.mxu0 %v2883
        %3167 = vmatpush.msra.mxu0 %v2871
        %3168 = vmatpush.msra.mxu0 %v2859
        %3169 = vmatpush.msra.mxu0 %v2847
        %3170 = vmatpush.msra.mxu0 %v2835
        %3171 = vmatpush.msra.mxu0 %v2823
        %3172 = vmatpush.msra.mxu0 %v2811
        %3173 = vmatpush.msra.mxu0 %v2799
        %3174 = vmatpush.msra.mxu0 %v2787
        %3175 = vmatpush.msra.mxu0 %v2775
        %3176 = vmatpush.msra.mxu0 %v2763
        %3177 = vmatpush.msra.mxu0 %v2751
        %3178 = vmatpush.msra.mxu0 %v2739
        %3179 = vmatpush.msra.mxu0 %v2727
        %3180 = vmatmul.f32.gmra.mxu0 %v2339
        %v3181 = vpop.f32.mrf.mxu0
        %v3182 = vadd.f32 %v3162, %v3181
        %3183 = vdwg.mxu0
        %3184 = vmatpush.msra.mxu0 %v2524
        %3185 = vmatpush.msra.mxu0 %v2512
        %3186 = vmatpush.msra.mxu0 %v2500
        %3187 = vmatpush.msra.mxu0 %v2488
        %3188 = vmatpush.msra.mxu0 %v2476
        %3189 = vmatpush.msra.mxu0 %v2464
        %3190 = vmatpush.msra.mxu0 %v2452
        %3191 = vmatpush.msra.mxu0 %v2440
        %3192 = vmatpush.msra.mxu0 %v2428
        %3193 = vmatpush.msra.mxu0 %v2416
        %3194 = vmatpush.msra.mxu0 %v2404
        %3195 = vmatpush.msra.mxu0 %v2392
        %3196 = vmatpush.msra.mxu0 %v2380
        %3197 = vmatpush.msra.mxu0 %v2368
        %3198 = vmatpush.msra.mxu0 %v2356
        %3199 = vmatpush.msra.mxu0 %v2344
        %3200 = vmatmul.f32.gmra.mxu0 %v2337
        %v3201 = vpop.f32.mrf.mxu0
        %v3202 = vadd.f32 %v2924, %v3201
        %3203 = vdwg.mxu0
        %3204 = vmatpush.msra.mxu0 %v2716
        %3205 = vmatpush.msra.mxu0 %v2704
        %3206 = vmatpush.msra.mxu0 %v2692
        %3207 = vmatpush.msra.mxu0 %v2680
        %3208 = vmatpush.msra.mxu0 %v2668
        %3209 = vmatpush.msra.mxu0 %v2656
        %3210 = vmatpush.msra.mxu0 %v2644
        %3211 = vmatpush.msra.mxu0 %v2632
        %3212 = vmatpush.msra.mxu0 %v2620
        %3213 = vmatpush.msra.mxu0 %v2608
        %3214 = vmatpush.msra.mxu0 %v2596
        %3215 = vmatpush.msra.mxu0 %v2584
        %3216 = vmatpush.msra.mxu0 %v2572
        %3217 = vmatpush.msra.mxu0 %v2560
        %3218 = vmatpush.msra.mxu0 %v2548
        %3219 = vmatpush.msra.mxu0 %v2536
        %3220 = vmatmul.f32.gmra.mxu0 %v2338
        %v3221 = vpop.f32.mrf.mxu0
        %v3222 = vadd.f32 %v3202, %v3221
        %3223 = vdwg.mxu0
        %3224 = vmatpush.msra.mxu0 %v2908
        %3225 = vmatpush.msra.mxu0 %v2896
        %3226 = vmatpush.msra.mxu0 %v2884
        %3227 = vmatpush.msra.mxu0 %v2872
        %3228 = vmatpush.msra.mxu0 %v2860
        %3229 = vmatpush.msra.mxu0 %v2848
        %3230 = vmatpush.msra.mxu0 %v2836
        %3231 = vmatpush.msra.mxu0 %v2824
        %3232 = vmatpush.msra.mxu0 %v2812
        %3233 = vmatpush.msra.mxu0 %v2800
        %3234 = vmatpush.msra.mxu0 %v2788
        %3235 = vmatpush.msra.mxu0 %v2776
        %3236 = vmatpush.msra.mxu0 %v2764
        %3237 = vmatpush.msra.mxu0 %v2752
        %3238 = vmatpush.msra.mxu0 %v2740
        %3239 = vmatpush.msra.mxu0 %v2728
        %3240 = vmatmul.f32.gmra.mxu0 %v2339
        %v3241 = vpop.f32.mrf.mxu0
        %v3242 = vadd.f32 %v3222, %v3241
        %3243 = vdwg.mxu0
        %3244 = vmatpush.msra.mxu0 %v2525
        %3245 = vmatpush.msra.mxu0 %v2513
        %3246 = vmatpush.msra.mxu0 %v2501
        %3247 = vmatpush.msra.mxu0 %v2489
        %3248 = vmatpush.msra.mxu0 %v2477
        %3249 = vmatpush.msra.mxu0 %v2465
        %3250 = vmatpush.msra.mxu0 %v2453
        %3251 = vmatpush.msra.mxu0 %v2441
        %3252 = vmatpush.msra.mxu0 %v2429
        %3253 = vmatpush.msra.mxu0 %v2417
        %3254 = vmatpush.msra.mxu0 %v2405
        %3255 = vmatpush.msra.mxu0 %v2393
        %3256 = vmatpush.msra.mxu0 %v2381
        %3257 = vmatpush.msra.mxu0 %v2369
        %3258 = vmatpush.msra.mxu0 %v2357
        %3259 = vmatpush.msra.mxu0 %v2345
        %3260 = vmatmul.f32.gmra.mxu0 %v2337
        %v3261 = vpop.f32.mrf.mxu0
        %v3262 = vadd.f32 %v2925, %v3261
        %3263 = vdwg.mxu0
        %3264 = vmatpush.msra.mxu0 %v2717
        %3265 = vmatpush.msra.mxu0 %v2705
        %3266 = vmatpush.msra.mxu0 %v2693
        %3267 = vmatpush.msra.mxu0 %v2681
        %3268 = vmatpush.msra.mxu0 %v2669
        %3269 = vmatpush.msra.mxu0 %v2657
        %3270 = vmatpush.msra.mxu0 %v2645
        %3271 = vmatpush.msra.mxu0 %v2633
        %3272 = vmatpush.msra.mxu0 %v2621
        %3273 = vmatpush.msra.mxu0 %v2609
        %3274 = vmatpush.msra.mxu0 %v2597
        %3275 = vmatpush.msra.mxu0 %v2585
        %3276 = vmatpush.msra.mxu0 %v2573
        %3277 = vmatpush.msra.mxu0 %v2561
        %3278 = vmatpush.msra.mxu0 %v2549
        %3279 = vmatpush.msra.mxu0 %v2537
        %3280 = vmatmul.f32.gmra.mxu0 %v2338
        %v3281 = vpop.f32.mrf.mxu0
        %v3282 = vadd.f32 %v3262, %v3281
        %3283 = vdwg.mxu0
        %3284 = vmatpush.msra.mxu0 %v2909
        %3285 = vmatpush.msra.mxu0 %v2897
        %3286 = vmatpush.msra.mxu0 %v2885
        %3287 = vmatpush.msra.mxu0 %v2873
        %3288 = vmatpush.msra.mxu0 %v2861
        %3289 = vmatpush.msra.mxu0 %v2849
        %3290 = vmatpush.msra.mxu0 %v2837
        %3291 = vmatpush.msra.mxu0 %v2825
        %3292 = vmatpush.msra.mxu0 %v2813
        %3293 = vmatpush.msra.mxu0 %v2801
        %3294 = vmatpush.msra.mxu0 %v2789
        %3295 = vmatpush.msra.mxu0 %v2777
        %3296 = vmatpush.msra.mxu0 %v2765
        %3297 = vmatpush.msra.mxu0 %v2753
        %3298 = vmatpush.msra.mxu0 %v2741
        %3299 = vmatpush.msra.mxu0 %v2729
        %3300 = vmatmul.f32.gmra.mxu0 %v2339
        %v3301 = vpop.f32.mrf.mxu0
        %v3302 = vadd.f32 %v3282, %v3301
        %3303 = vdwg.mxu0
        %3304 = vmatpush.msra.mxu0 %v2526
        %3305 = vmatpush.msra.mxu0 %v2514
        %3306 = vmatpush.msra.mxu0 %v2502
        %3307 = vmatpush.msra.mxu0 %v2490
        %3308 = vmatpush.msra.mxu0 %v2478
        %3309 = vmatpush.msra.mxu0 %v2466
        %3310 = vmatpush.msra.mxu0 %v2454
        %3311 = vmatpush.msra.mxu0 %v2442
        %3312 = vmatpush.msra.mxu0 %v2430
        %3313 = vmatpush.msra.mxu0 %v2418
        %3314 = vmatpush.msra.mxu0 %v2406
        %3315 = vmatpush.msra.mxu0 %v2394
        %3316 = vmatpush.msra.mxu0 %v2382
        %3317 = vmatpush.msra.mxu0 %v2370
        %3318 = vmatpush.msra.mxu0 %v2358
        %3319 = vmatpush.msra.mxu0 %v2346
        %3320 = vmatmul.f32.gmra.mxu0 %v2337
        %v3321 = vpop.f32.mrf.mxu0
        %v3322 = vadd.f32 %v2926, %v3321
        %3323 = vdwg.mxu0
        %3324 = vmatpush.msra.mxu0 %v2718
        %3325 = vmatpush.msra.mxu0 %v2706
        %3326 = vmatpush.msra.mxu0 %v2694
        %3327 = vmatpush.msra.mxu0 %v2682
        %3328 = vmatpush.msra.mxu0 %v2670
        %3329 = vmatpush.msra.mxu0 %v2658
        %3330 = vmatpush.msra.mxu0 %v2646
        %3331 = vmatpush.msra.mxu0 %v2634
        %3332 = vmatpush.msra.mxu0 %v2622
        %3333 = vmatpush.msra.mxu0 %v2610
        %3334 = vmatpush.msra.mxu0 %v2598
        %3335 = vmatpush.msra.mxu0 %v2586
        %3336 = vmatpush.msra.mxu0 %v2574
        %3337 = vmatpush.msra.mxu0 %v2562
        %3338 = vmatpush.msra.mxu0 %v2550
        %3339 = vmatpush.msra.mxu0 %v2538
        %3340 = vmatmul.f32.gmra.mxu0 %v2338
        %v3341 = vpop.f32.mrf.mxu0
        %v3342 = vadd.f32 %v3322, %v3341
        %3343 = vdwg.mxu0
        %3344 = vmatpush.msra.mxu0 %v2910
        %3345 = vmatpush.msra.mxu0 %v2898
        %3346 = vmatpush.msra.mxu0 %v2886
        %3347 = vmatpush.msra.mxu0 %v2874
        %3348 = vmatpush.msra.mxu0 %v2862
        %3349 = vmatpush.msra.mxu0 %v2850
        %3350 = vmatpush.msra.mxu0 %v2838
        %3351 = vmatpush.msra.mxu0 %v2826
        %3352 = vmatpush.msra.mxu0 %v2814
        %3353 = vmatpush.msra.mxu0 %v2802
        %3354 = vmatpush.msra.mxu0 %v2790
        %3355 = vmatpush.msra.mxu0 %v2778
        %3356 = vmatpush.msra.mxu0 %v2766
        %3357 = vmatpush.msra.mxu0 %v2754
        %3358 = vmatpush.msra.mxu0 %v2742
        %3359 = vmatpush.msra.mxu0 %v2730
        %3360 = vmatmul.f32.gmra.mxu0 %v2339
        %v3361 = vpop.f32.mrf.mxu0
        %v3362 = vadd.f32 %v3342, %v3361
        %3363 = vdwg.mxu0
        %3364 = vmatpush.msra.mxu0 %v2527
        %3365 = vmatpush.msra.mxu0 %v2515
        %3366 = vmatpush.msra.mxu0 %v2503
        %3367 = vmatpush.msra.mxu0 %v2491
        %3368 = vmatpush.msra.mxu0 %v2479
        %3369 = vmatpush.msra.mxu0 %v2467
        %3370 = vmatpush.msra.mxu0 %v2455
        %3371 = vmatpush.msra.mxu0 %v2443
        %3372 = vmatpush.msra.mxu0 %v2431
        %3373 = vmatpush.msra.mxu0 %v2419
        %3374 = vmatpush.msra.mxu0 %v2407
        %3375 = vmatpush.msra.mxu0 %v2395
        %3376 = vmatpush.msra.mxu0 %v2383
        %3377 = vmatpush.msra.mxu0 %v2371
        %3378 = vmatpush.msra.mxu0 %v2359
        %3379 = vmatpush.msra.mxu0 %v2347
        %3380 = vmatmul.f32.gmra.mxu0 %v2337
        %v3381 = vpop.f32.mrf.mxu0
        %v3382 = vadd.f32 %v2927, %v3381
        %3383 = vdwg.mxu0
        %3384 = vmatpush.msra.mxu0 %v2719
        %3385 = vmatpush.msra.mxu0 %v2707
        %3386 = vmatpush.msra.mxu0 %v2695
        %3387 = vmatpush.msra.mxu0 %v2683
        %3388 = vmatpush.msra.mxu0 %v2671
        %3389 = vmatpush.msra.mxu0 %v2659
        %3390 = vmatpush.msra.mxu0 %v2647
        %3391 = vmatpush.msra.mxu0 %v2635
        %3392 = vmatpush.msra.mxu0 %v2623
        %3393 = vmatpush.msra.mxu0 %v2611
        %3394 = vmatpush.msra.mxu0 %v2599
        %3395 = vmatpush.msra.mxu0 %v2587
        %3396 = vmatpush.msra.mxu0 %v2575
        %3397 = vmatpush.msra.mxu0 %v2563
        %3398 = vmatpush.msra.mxu0 %v2551
        %3399 = vmatpush.msra.mxu0 %v2539
        %3400 = vmatmul.f32.gmra.mxu0 %v2338
        %v3401 = vpop.f32.mrf.mxu0
        %v3402 = vadd.f32 %v3382, %v3401
        %3403 = vdwg.mxu0
        %3404 = vmatpush.msra.mxu0 %v2911
        %3405 = vmatpush.msra.mxu0 %v2899
        %3406 = vmatpush.msra.mxu0 %v2887
        %3407 = vmatpush.msra.mxu0 %v2875
        %3408 = vmatpush.msra.mxu0 %v2863
        %3409 = vmatpush.msra.mxu0 %v2851
        %3410 = vmatpush.msra.mxu0 %v2839
        %3411 = vmatpush.msra.mxu0 %v2827
        %3412 = vmatpush.msra.mxu0 %v2815
        %3413 = vmatpush.msra.mxu0 %v2803
        %3414 = vmatpush.msra.mxu0 %v2791
        %3415 = vmatpush.msra.mxu0 %v2779
        %3416 = vmatpush.msra.mxu0 %v2767
        %3417 = vmatpush.msra.mxu0 %v2755
        %3418 = vmatpush.msra.mxu0 %v2743
        %3419 = vmatpush.msra.mxu0 %v2731
        %3420 = vmatmul.f32.gmra.mxu0 %v2339
        %v3421 = vpop.f32.mrf.mxu0
        %v3422 = vadd.f32 %v3402, %v3421
        %3423 = vdwg.mxu0
        %3424 = vmatpush.msra.mxu0 %v2528
        %3425 = vmatpush.msra.mxu0 %v2516
        %3426 = vmatpush.msra.mxu0 %v2504
        %3427 = vmatpush.msra.mxu0 %v2492
        %3428 = vmatpush.msra.mxu0 %v2480
        %3429 = vmatpush.msra.mxu0 %v2468
        %3430 = vmatpush.msra.mxu0 %v2456
        %3431 = vmatpush.msra.mxu0 %v2444
        %3432 = vmatpush.msra.mxu0 %v2432
        %3433 = vmatpush.msra.mxu0 %v2420
        %3434 = vmatpush.msra.mxu0 %v2408
        %3435 = vmatpush.msra.mxu0 %v2396
        %3436 = vmatpush.msra.mxu0 %v2384
        %3437 = vmatpush.msra.mxu0 %v2372
        %3438 = vmatpush.msra.mxu0 %v2360
        %3439 = vmatpush.msra.mxu0 %v2348
        %3440 = vmatmul.f32.gmra.mxu0 %v2337
        %v3441 = vpop.f32.mrf.mxu0
        %v3442 = vadd.f32 %v2928, %v3441
        %3443 = vdwg.mxu0
        %3444 = vmatpush.msra.mxu0 %v2720
        %3445 = vmatpush.msra.mxu0 %v2708
        %3446 = vmatpush.msra.mxu0 %v2696
        %3447 = vmatpush.msra.mxu0 %v2684
        %3448 = vmatpush.msra.mxu0 %v2672
        %3449 = vmatpush.msra.mxu0 %v2660
        %3450 = vmatpush.msra.mxu0 %v2648
        %3451 = vmatpush.msra.mxu0 %v2636
        %3452 = vmatpush.msra.mxu0 %v2624
        %3453 = vmatpush.msra.mxu0 %v2612
        %3454 = vmatpush.msra.mxu0 %v2600
        %3455 = vmatpush.msra.mxu0 %v2588
        %3456 = vmatpush.msra.mxu0 %v2576
        %3457 = vmatpush.msra.mxu0 %v2564
        %3458 = vmatpush.msra.mxu0 %v2552
        %3459 = vmatpush.msra.mxu0 %v2540
        %3460 = vmatmul.f32.gmra.mxu0 %v2338
        %v3461 = vpop.f32.mrf.mxu0
        %v3462 = vadd.f32 %v3442, %v3461
        %3463 = vdwg.mxu0
        %3464 = vmatpush.msra.mxu0 %v2912
        %3465 = vmatpush.msra.mxu0 %v2900
        %3466 = vmatpush.msra.mxu0 %v2888
        %3467 = vmatpush.msra.mxu0 %v2876
        %3468 = vmatpush.msra.mxu0 %v2864
        %3469 = vmatpush.msra.mxu0 %v2852
        %3470 = vmatpush.msra.mxu0 %v2840
        %3471 = vmatpush.msra.mxu0 %v2828
        %3472 = vmatpush.msra.mxu0 %v2816
        %3473 = vmatpush.msra.mxu0 %v2804
        %3474 = vmatpush.msra.mxu0 %v2792
        %3475 = vmatpush.msra.mxu0 %v2780
        %3476 = vmatpush.msra.mxu0 %v2768
        %3477 = vmatpush.msra.mxu0 %v2756
        %3478 = vmatpush.msra.mxu0 %v2744
        %3479 = vmatpush.msra.mxu0 %v2732
        %3480 = vmatmul.f32.gmra.mxu0 %v2339
        %v3481 = vpop.f32.mrf.mxu0
        %v3482 = vadd.f32 %v3462, %v3481
        %3483 = vdwg.mxu0
        %3484 = vmatpush.msra.mxu0 %v2529
        %3485 = vmatpush.msra.mxu0 %v2517
        %3486 = vmatpush.msra.mxu0 %v2505
        %3487 = vmatpush.msra.mxu0 %v2493
        %3488 = vmatpush.msra.mxu0 %v2481
        %3489 = vmatpush.msra.mxu0 %v2469
        %3490 = vmatpush.msra.mxu0 %v2457
        %3491 = vmatpush.msra.mxu0 %v2445
        %3492 = vmatpush.msra.mxu0 %v2433
        %3493 = vmatpush.msra.mxu0 %v2421
        %3494 = vmatpush.msra.mxu0 %v2409
        %3495 = vmatpush.msra.mxu0 %v2397
        %3496 = vmatpush.msra.mxu0 %v2385
        %3497 = vmatpush.msra.mxu0 %v2373
        %3498 = vmatpush.msra.mxu0 %v2361
        %3499 = vmatpush.msra.mxu0 %v2349
        %3500 = vmatmul.f32.gmra.mxu0 %v2337
        %v3501 = vpop.f32.mrf.mxu0
        %v3502 = vadd.f32 %v2929, %v3501
        %3503 = vdwg.mxu0
        %3504 = vmatpush.msra.mxu0 %v2721
        %3505 = vmatpush.msra.mxu0 %v2709
        %3506 = vmatpush.msra.mxu0 %v2697
        %3507 = vmatpush.msra.mxu0 %v2685
        %3508 = vmatpush.msra.mxu0 %v2673
        %3509 = vmatpush.msra.mxu0 %v2661
        %3510 = vmatpush.msra.mxu0 %v2649
        %3511 = vmatpush.msra.mxu0 %v2637
        %3512 = vmatpush.msra.mxu0 %v2625
        %3513 = vmatpush.msra.mxu0 %v2613
        %3514 = vmatpush.msra.mxu0 %v2601
        %3515 = vmatpush.msra.mxu0 %v2589
        %3516 = vmatpush.msra.mxu0 %v2577
        %3517 = vmatpush.msra.mxu0 %v2565
        %3518 = vmatpush.msra.mxu0 %v2553
        %3519 = vmatpush.msra.mxu0 %v2541
        %3520 = vmatmul.f32.gmra.mxu0 %v2338
        %v3521 = vpop.f32.mrf.mxu0
        %v3522 = vadd.f32 %v3502, %v3521
        %3523 = vdwg.mxu0
        %3524 = vmatpush.msra.mxu0 %v2913
        %3525 = vmatpush.msra.mxu0 %v2901
        %3526 = vmatpush.msra.mxu0 %v2889
        %3527 = vmatpush.msra.mxu0 %v2877
        %3528 = vmatpush.msra.mxu0 %v2865
        %3529 = vmatpush.msra.mxu0 %v2853
        %3530 = vmatpush.msra.mxu0 %v2841
        %3531 = vmatpush.msra.mxu0 %v2829
        %3532 = vmatpush.msra.mxu0 %v2817
        %3533 = vmatpush.msra.mxu0 %v2805
        %3534 = vmatpush.msra.mxu0 %v2793
        %3535 = vmatpush.msra.mxu0 %v2781
        %3536 = vmatpush.msra.mxu0 %v2769
        %3537 = vmatpush.msra.mxu0 %v2757
        %3538 = vmatpush.msra.mxu0 %v2745
        %3539 = vmatpush.msra.mxu0 %v2733
        %3540 = vmatmul.f32.gmra.mxu0 %v2339
        %v3541 = vpop.f32.mrf.mxu0
        %v3542 = vadd.f32 %v3522, %v3541
        %3543 = vdwg.mxu0
        %3544 = vmatpush.msra.mxu0 %v2530
        %3545 = vmatpush.msra.mxu0 %v2518
        %3546 = vmatpush.msra.mxu0 %v2506
        %3547 = vmatpush.msra.mxu0 %v2494
        %3548 = vmatpush.msra.mxu0 %v2482
        %3549 = vmatpush.msra.mxu0 %v2470
        %3550 = vmatpush.msra.mxu0 %v2458
        %3551 = vmatpush.msra.mxu0 %v2446
        %3552 = vmatpush.msra.mxu0 %v2434
        %3553 = vmatpush.msra.mxu0 %v2422
        %3554 = vmatpush.msra.mxu0 %v2410
        %3555 = vmatpush.msra.mxu0 %v2398
        %3556 = vmatpush.msra.mxu0 %v2386
        %3557 = vmatpush.msra.mxu0 %v2374
        %3558 = vmatpush.msra.mxu0 %v2362
        %3559 = vmatpush.msra.mxu0 %v2350
        %3560 = vmatmul.f32.gmra.mxu0 %v2337
        %v3561 = vpop.f32.mrf.mxu0
        %v3562 = vadd.f32 %v2930, %v3561
        %3563 = vdwg.mxu0
        %3564 = vmatpush.msra.mxu0 %v2722
        %3565 = vmatpush.msra.mxu0 %v2710
        %3566 = vmatpush.msra.mxu0 %v2698
        %3567 = vmatpush.msra.mxu0 %v2686
        %3568 = vmatpush.msra.mxu0 %v2674
        %3569 = vmatpush.msra.mxu0 %v2662
        %3570 = vmatpush.msra.mxu0 %v2650
        %3571 = vmatpush.msra.mxu0 %v2638
        %3572 = vmatpush.msra.mxu0 %v2626
        %3573 = vmatpush.msra.mxu0 %v2614
        %3574 = vmatpush.msra.mxu0 %v2602
        %3575 = vmatpush.msra.mxu0 %v2590
        %3576 = vmatpush.msra.mxu0 %v2578
        %3577 = vmatpush.msra.mxu0 %v2566
        %3578 = vmatpush.msra.mxu0 %v2554
        %3579 = vmatpush.msra.mxu0 %v2542
        %3580 = vmatmul.f32.gmra.mxu0 %v2338
        %v3581 = vpop.f32.mrf.mxu0
        %v3582 = vadd.f32 %v3562, %v3581
        %3583 = vdwg.mxu0
        %3584 = vmatpush.msra.mxu0 %v2914
        %3585 = vmatpush.msra.mxu0 %v2902
        %3586 = vmatpush.msra.mxu0 %v2890
        %3587 = vmatpush.msra.mxu0 %v2878
        %3588 = vmatpush.msra.mxu0 %v2866
        %3589 = vmatpush.msra.mxu0 %v2854
        %3590 = vmatpush.msra.mxu0 %v2842
        %3591 = vmatpush.msra.mxu0 %v2830
        %3592 = vmatpush.msra.mxu0 %v2818
        %3593 = vmatpush.msra.mxu0 %v2806
        %3594 = vmatpush.msra.mxu0 %v2794
        %3595 = vmatpush.msra.mxu0 %v2782
        %3596 = vmatpush.msra.mxu0 %v2770
        %3597 = vmatpush.msra.mxu0 %v2758
        %3598 = vmatpush.msra.mxu0 %v2746
        %3599 = vmatpush.msra.mxu0 %v2734
        %3600 = vmatmul.f32.gmra.mxu0 %v2339
        %v3601 = vpop.f32.mrf.mxu0
        %v3602 = vadd.f32 %v3582, %v3601
        %3603 = vdwg.mxu0
        %3604 = vmatpush.msra.mxu0 %v2531
        %3605 = vmatpush.msra.mxu0 %v2519
        %3606 = vmatpush.msra.mxu0 %v2507
        %3607 = vmatpush.msra.mxu0 %v2495
        %3608 = vmatpush.msra.mxu0 %v2483
        %3609 = vmatpush.msra.mxu0 %v2471
        %3610 = vmatpush.msra.mxu0 %v2459
        %3611 = vmatpush.msra.mxu0 %v2447
        %3612 = vmatpush.msra.mxu0 %v2435
        %3613 = vmatpush.msra.mxu0 %v2423
        %3614 = vmatpush.msra.mxu0 %v2411
        %3615 = vmatpush.msra.mxu0 %v2399
        %3616 = vmatpush.msra.mxu0 %v2387
        %3617 = vmatpush.msra.mxu0 %v2375
        %3618 = vmatpush.msra.mxu0 %v2363
        %3619 = vmatpush.msra.mxu0 %v2351
        %3620 = vmatmul.f32.gmra.mxu0 %v2337
        %v3621 = vpop.f32.mrf.mxu0
        %v3622 = vadd.f32 %v2931, %v3621
        %3623 = vdwg.mxu0
        %3624 = vmatpush.msra.mxu0 %v2723
        %3625 = vmatpush.msra.mxu0 %v2711
        %3626 = vmatpush.msra.mxu0 %v2699
        %3627 = vmatpush.msra.mxu0 %v2687
        %3628 = vmatpush.msra.mxu0 %v2675
        %3629 = vmatpush.msra.mxu0 %v2663
        %3630 = vmatpush.msra.mxu0 %v2651
        %3631 = vmatpush.msra.mxu0 %v2639
        %3632 = vmatpush.msra.mxu0 %v2627
        %3633 = vmatpush.msra.mxu0 %v2615
        %3634 = vmatpush.msra.mxu0 %v2603
        %3635 = vmatpush.msra.mxu0 %v2591
        %3636 = vmatpush.msra.mxu0 %v2579
        %3637 = vmatpush.msra.mxu0 %v2567
        %3638 = vmatpush.msra.mxu0 %v2555
        %3639 = vmatpush.msra.mxu0 %v2543
        %3640 = vmatmul.f32.gmra.mxu0 %v2338
        %v3641 = vpop.f32.mrf.mxu0
        %v3642 = vadd.f32 %v3622, %v3641
        %3643 = vdwg.mxu0
        %3644 = vmatpush.msra.mxu0 %v2915
        %3645 = vmatpush.msra.mxu0 %v2903
        %3646 = vmatpush.msra.mxu0 %v2891
        %3647 = vmatpush.msra.mxu0 %v2879
        %3648 = vmatpush.msra.mxu0 %v2867
        %3649 = vmatpush.msra.mxu0 %v2855
        %3650 = vmatpush.msra.mxu0 %v2843
        %3651 = vmatpush.msra.mxu0 %v2831
        %3652 = vmatpush.msra.mxu0 %v2819
        %3653 = vmatpush.msra.mxu0 %v2807
        %3654 = vmatpush.msra.mxu0 %v2795
        %3655 = vmatpush.msra.mxu0 %v2783
        %3656 = vmatpush.msra.mxu0 %v2771
        %3657 = vmatpush.msra.mxu0 %v2759
        %3658 = vmatpush.msra.mxu0 %v2747
        %3659 = vmatpush.msra.mxu0 %v2735
        %3660 = vmatmul.f32.gmra.mxu0 %v2339
        %v3661 = vpop.f32.mrf.mxu0
        %v3662 = vadd.f32 %v3642, %v3661
        %3663 = vdwg.mxu0
        %v3664 = vmax.f32 %v3002, 0.0
        %v3665 = vmax.f32 %v3062, 0.0
        %v3666 = vmax.f32 %v3122, 0.0
        %v3667 = vmax.f32 %v3182, 0.0
        %v3668 = vmax.f32 %v3242, 0.0
        %v3669 = vmax.f32 %v3302, 0.0
        %v3670 = vmax.f32 %v3362, 0.0
        %v3671 = vmax.f32 %v3422, 0.0
        %v3672 = vmax.f32 %v3482, 0.0
        %v3673 = vmax.f32 %v3542, 0.0
        %v3674 = vmax.f32 %v3602, 0.0
        %v3675 = vmax.f32 %v3662, 0.0
        %v3676 = vld [vmem:[#allocation2] sm:$0xff]
        %v3677 = vld [vmem:[#allocation2 + $0x8] sm:$0xff]
        %v3678 = vld [vmem:[#allocation2 + $0x10] sm:$0xff]
        %v3679 = vld [vmem:[#allocation2 + $0x18] sm:$0xff]
        %v3680 = vld [vmem:[#allocation2 + $0x20] sm:$0xff]
        %v3681 = vld [vmem:[#allocation2 + $0x28] sm:$0xff]
        %v3682 = vld [vmem:[#allocation2 + $0x30] sm:$0xff]
        %v3683 = vld [vmem:[#allocation2 + $0x38] sm:$0xff]
        %v3684 = vld [vmem:[#allocation2 + $0x40] sm:$0xff]
        %v3685 = vld [vmem:[#allocation2 + $0x48] sm:$0xff]
        %v3686 = vld [vmem:[#allocation2 + $0x50] sm:$0xff]
        %v3687 = vld [vmem:[#allocation2 + $0x58] sm:$0xff]
        %v3688 = vld [vmem:[#allocation2 + $0x60] sm:$0xff]
        %v3689 = vld [vmem:[#allocation2 + $0x68] sm:$0xff]
        %v3690 = vld [vmem:[#allocation2 + $0x70] sm:$0xff]
        %v3691 = vld [vmem:[#allocation2 + $0x78] sm:$0xff]
        %v3692 = vld [vmem:[#allocation2 + $0x80] sm:$0xff]
        %v3693 = vld [vmem:[#allocation2 + $0x88] sm:$0xff]
        %v3694 = vld [vmem:[#allocation2 + $0x90] sm:$0xff]
        %v3695 = vld [vmem:[#allocation2 + $0x98] sm:$0xff]
        %v3696 = vld [vmem:[#allocation2 + $0xa0] sm:$0xff]
        %v3697 = vld [vmem:[#allocation2 + $0xa8] sm:$0xff]
        %v3698 = vld [vmem:[#allocation2 + $0xb0] sm:$0xff]
        %v3699 = vld [vmem:[#allocation2 + $0xb8] sm:$0xff]
        %v3700 = vld [vmem:[#allocation2 + $0xc0] sm:$0xff]
        %v3701 = vld [vmem:[#allocation2 + $0xc8] sm:$0xff]
        %v3702 = vld [vmem:[#allocation2 + $0xd0] sm:$0xff]
        %v3703 = vld [vmem:[#allocation2 + $0xd8] sm:$0xff]
        %v3704 = vld [vmem:[#allocation2 + $0xe0] sm:$0xff]
        %v3705 = vld [vmem:[#allocation2 + $0xe8] sm:$0xff]
        %v3706 = vld [vmem:[#allocation2 + $0xf0] sm:$0xff]
        %v3707 = vld [vmem:[#allocation2 + $0xf8] sm:$0xff]
        %v3708 = vld [vmem:[#allocation2 + $0x100] sm:$0xff]
        %v3709 = vld [vmem:[#allocation2 + $0x108] sm:$0xff]
        %v3710 = vld [vmem:[#allocation2 + $0x110] sm:$0xff]
        %v3711 = vld [vmem:[#allocation2 + $0x118] sm:$0xff]
        %v3712 = vld [vmem:[#allocation2 + $0x120] sm:$0xff]
        %v3713 = vld [vmem:[#allocation2 + $0x128] sm:$0xff]
        %v3714 = vld [vmem:[#allocation2 + $0x130] sm:$0xff]
        %v3715 = vld [vmem:[#allocation2 + $0x138] sm:$0xff]
        %v3716 = vld [vmem:[#allocation2 + $0x140] sm:$0xff]
        %v3717 = vld [vmem:[#allocation2 + $0x148] sm:$0xff]
        %v3718 = vld [vmem:[#allocation2 + $0x150] sm:$0xff]
        %v3719 = vld [vmem:[#allocation2 + $0x158] sm:$0xff]
        %v3720 = vld [vmem:[#allocation2 + $0x160] sm:$0xff]
        %v3721 = vld [vmem:[#allocation2 + $0x168] sm:$0xff]
        %v3722 = vld [vmem:[#allocation2 + $0x170] sm:$0xff]
        %v3723 = vld [vmem:[#allocation2 + $0x178] sm:$0xff]
        %v3724 = vld [vmem:[#allocation2 + $0x180] sm:$0xff]
        %v3725 = vld [vmem:[#allocation2 + $0x188] sm:$0xff]
        %v3726 = vld [vmem:[#allocation2 + $0x190] sm:$0xff]
        %v3727 = vld [vmem:[#allocation2 + $0x198] sm:$0xff]
        %v3728 = vld [vmem:[#allocation2 + $0x1a0] sm:$0xff]
        %v3729 = vld [vmem:[#allocation2 + $0x1a8] sm:$0xff]
        %v3730 = vld [vmem:[#allocation2 + $0x1b0] sm:$0xff]
        %v3731 = vld [vmem:[#allocation2 + $0x1b8] sm:$0xff]
        %v3732 = vld [vmem:[#allocation2 + $0x1c0] sm:$0xff]
        %v3733 = vld [vmem:[#allocation2 + $0x1c8] sm:$0xff]
        %v3734 = vld [vmem:[#allocation2 + $0x1d0] sm:$0xff]
        %v3735 = vld [vmem:[#allocation2 + $0x1d8] sm:$0xff]
        %v3736 = vld [vmem:[#allocation2 + $0x1e0] sm:$0xff]
        %v3737 = vld [vmem:[#allocation2 + $0x1e8] sm:$0xff]
        %v3738 = vld [vmem:[#allocation2 + $0x1f0] sm:$0xff]
        %v3739 = vld [vmem:[#allocation2 + $0x1f8] sm:$0xff]
        %v3740 = vld [vmem:[#allocation2 + $0x200] sm:$0xff]
        %v3741 = vld [vmem:[#allocation2 + $0x208] sm:$0xff]
        %v3742 = vld [vmem:[#allocation2 + $0x210] sm:$0xff]
        %v3743 = vld [vmem:[#allocation2 + $0x218] sm:$0xff]
        %v3744 = vld [vmem:[#allocation2 + $0x220] sm:$0xff]
        %v3745 = vld [vmem:[#allocation2 + $0x228] sm:$0xff]
        %v3746 = vld [vmem:[#allocation2 + $0x230] sm:$0xff]
        %v3747 = vld [vmem:[#allocation2 + $0x238] sm:$0xff]
        %v3748 = vld [vmem:[#allocation2 + $0x240] sm:$0xff]
        %v3749 = vld [vmem:[#allocation2 + $0x248] sm:$0xff]
        %v3750 = vld [vmem:[#allocation2 + $0x250] sm:$0xff]
        %v3751 = vld [vmem:[#allocation2 + $0x258] sm:$0xff]
        %v3752 = vld [vmem:[#allocation2 + $0x260] sm:$0xff]
        %v3753 = vld [vmem:[#allocation2 + $0x268] sm:$0xff]
        %v3754 = vld [vmem:[#allocation2 + $0x270] sm:$0xff]
        %v3755 = vld [vmem:[#allocation2 + $0x278] sm:$0xff]
        %v3756 = vld [vmem:[#allocation2 + $0x280] sm:$0xff]
        %v3757 = vld [vmem:[#allocation2 + $0x288] sm:$0xff]
        %v3758 = vld [vmem:[#allocation2 + $0x290] sm:$0xff]
        %v3759 = vld [vmem:[#allocation2 + $0x298] sm:$0xff]
        %v3760 = vld [vmem:[#allocation2 + $0x2a0] sm:$0xff]
        %v3761 = vld [vmem:[#allocation2 + $0x2a8] sm:$0xff]
        %v3762 = vld [vmem:[#allocation2 + $0x2b0] sm:$0xff]
        %v3763 = vld [vmem:[#allocation2 + $0x2b8] sm:$0xff]
        %v3764 = vld [vmem:[#allocation2 + $0x2c0] sm:$0xff]
        %v3765 = vld [vmem:[#allocation2 + $0x2c8] sm:$0xff]
        %v3766 = vld [vmem:[#allocation2 + $0x2d0] sm:$0xff]
        %v3767 = vld [vmem:[#allocation2 + $0x2d8] sm:$0xff]
        %v3768 = vld [vmem:[#allocation2 + $0x2e0] sm:$0xff]
        %v3769 = vld [vmem:[#allocation2 + $0x2e8] sm:$0xff]
        %v3770 = vld [vmem:[#allocation2 + $0x2f0] sm:$0xff]
        %v3771 = vld [vmem:[#allocation2 + $0x2f8] sm:$0xff]
        %v3772 = vld [vmem:[#allocation2 + $0x300] sm:$0xff]
        %v3773 = vld [vmem:[#allocation2 + $0x308] sm:$0xff]
        %v3774 = vld [vmem:[#allocation2 + $0x310] sm:$0xff]
        %v3775 = vld [vmem:[#allocation2 + $0x318] sm:$0xff]
        %v3776 = vld [vmem:[#allocation2 + $0x320] sm:$0xff]
        %v3777 = vld [vmem:[#allocation2 + $0x328] sm:$0xff]
        %v3778 = vld [vmem:[#allocation2 + $0x330] sm:$0xff]
        %v3779 = vld [vmem:[#allocation2 + $0x338] sm:$0xff]
        %v3780 = vld [vmem:[#allocation2 + $0x340] sm:$0xff]
        %v3781 = vld [vmem:[#allocation2 + $0x348] sm:$0xff]
        %v3782 = vld [vmem:[#allocation2 + $0x350] sm:$0xff]
        %v3783 = vld [vmem:[#allocation2 + $0x358] sm:$0xff]
        %v3784 = vld [vmem:[#allocation2 + $0x360] sm:$0xff]
        %v3785 = vld [vmem:[#allocation2 + $0x368] sm:$0xff]
        %v3786 = vld [vmem:[#allocation2 + $0x370] sm:$0xff]
        %v3787 = vld [vmem:[#allocation2 + $0x378] sm:$0xff]
        %v3788 = vld [vmem:[#allocation2 + $0x380] sm:$0xff]
        %v3789 = vld [vmem:[#allocation2 + $0x388] sm:$0xff]
        %v3790 = vld [vmem:[#allocation2 + $0x390] sm:$0xff]
        %v3791 = vld [vmem:[#allocation2 + $0x398] sm:$0xff]
        %v3792 = vld [vmem:[#allocation2 + $0x3a0] sm:$0xff]
        %v3793 = vld [vmem:[#allocation2 + $0x3a8] sm:$0xff]
        %v3794 = vld [vmem:[#allocation2 + $0x3b0] sm:$0xff]
        %v3795 = vld [vmem:[#allocation2 + $0x3b8] sm:$0xff]
        %v3796 = vld [vmem:[#allocation2 + $0x3c0] sm:$0xff]
        %v3797 = vld [vmem:[#allocation2 + $0x3c8] sm:$0xff]
        %v3798 = vld [vmem:[#allocation2 + $0x3d0] sm:$0xff]
        %v3799 = vld [vmem:[#allocation2 + $0x3d8] sm:$0xff]
        %v3800 = vld [vmem:[#allocation2 + $0x3e0] sm:$0xff]
        %v3801 = vld [vmem:[#allocation2 + $0x3e8] sm:$0xff]
        %v3802 = vld [vmem:[#allocation2 + $0x3f0] sm:$0xff]
        %v3803 = vld [vmem:[#allocation2 + $0x3f8] sm:$0xff]
        %v3804 = vld [vmem:[#allocation2 + $0x400] sm:$0xff]
        %v3805 = vld [vmem:[#allocation2 + $0x408] sm:$0xff]
        %v3806 = vld [vmem:[#allocation2 + $0x410] sm:$0xff]
        %v3807 = vld [vmem:[#allocation2 + $0x418] sm:$0xff]
        %v3808 = vld [vmem:[#allocation2 + $0x420] sm:$0xff]
        %v3809 = vld [vmem:[#allocation2 + $0x428] sm:$0xff]
        %v3810 = vld [vmem:[#allocation2 + $0x430] sm:$0xff]
        %v3811 = vld [vmem:[#allocation2 + $0x438] sm:$0xff]
        %v3812 = vld [vmem:[#allocation2 + $0x440] sm:$0xff]
        %v3813 = vld [vmem:[#allocation2 + $0x448] sm:$0xff]
        %v3814 = vld [vmem:[#allocation2 + $0x450] sm:$0xff]
        %v3815 = vld [vmem:[#allocation2 + $0x458] sm:$0xff]
        %v3816 = vld [vmem:[#allocation2 + $0x460] sm:$0xff]
        %v3817 = vld [vmem:[#allocation2 + $0x468] sm:$0xff]
        %v3818 = vld [vmem:[#allocation2 + $0x470] sm:$0xff]
        %v3819 = vld [vmem:[#allocation2 + $0x478] sm:$0xff]
        %v3820 = vld [vmem:[#allocation2 + $0x480] sm:$0xff]
        %v3821 = vld [vmem:[#allocation2 + $0x488] sm:$0xff]
        %v3822 = vld [vmem:[#allocation2 + $0x490] sm:$0xff]
        %v3823 = vld [vmem:[#allocation2 + $0x498] sm:$0xff]
        %v3824 = vld [vmem:[#allocation2 + $0x4a0] sm:$0xff]
        %v3825 = vld [vmem:[#allocation2 + $0x4a8] sm:$0xff]
        %v3826 = vld [vmem:[#allocation2 + $0x4b0] sm:$0xff]
        %v3827 = vld [vmem:[#allocation2 + $0x4b8] sm:$0xff]
        %v3828 = vld [vmem:[#allocation2 + $0x4c0] sm:$0xff]
        %v3829 = vld [vmem:[#allocation2 + $0x4c8] sm:$0xff]
        %v3830 = vld [vmem:[#allocation2 + $0x4d0] sm:$0xff]
        %v3831 = vld [vmem:[#allocation2 + $0x4d8] sm:$0xff]
        %v3832 = vld [vmem:[#allocation2 + $0x4e0] sm:$0xff]
        %v3833 = vld [vmem:[#allocation2 + $0x4e8] sm:$0xff]
        %v3834 = vld [vmem:[#allocation2 + $0x4f0] sm:$0xff]
        %v3835 = vld [vmem:[#allocation2 + $0x4f8] sm:$0xff]
        %v3836 = vld [vmem:[#allocation2 + $0x500] sm:$0xff]
        %v3837 = vld [vmem:[#allocation2 + $0x508] sm:$0xff]
        %v3838 = vld [vmem:[#allocation2 + $0x510] sm:$0xff]
        %v3839 = vld [vmem:[#allocation2 + $0x518] sm:$0xff]
        %v3840 = vld [vmem:[#allocation2 + $0x520] sm:$0xff]
        %v3841 = vld [vmem:[#allocation2 + $0x528] sm:$0xff]
        %v3842 = vld [vmem:[#allocation2 + $0x530] sm:$0xff]
        %v3843 = vld [vmem:[#allocation2 + $0x538] sm:$0xff]
        %v3844 = vld [vmem:[#allocation2 + $0x540] sm:$0xff]
        %v3845 = vld [vmem:[#allocation2 + $0x548] sm:$0xff]
        %v3846 = vld [vmem:[#allocation2 + $0x550] sm:$0xff]
        %v3847 = vld [vmem:[#allocation2 + $0x558] sm:$0xff]
        %v3848 = vld [vmem:[#allocation2 + $0x560] sm:$0xff]
        %v3849 = vld [vmem:[#allocation2 + $0x568] sm:$0xff]
        %v3850 = vld [vmem:[#allocation2 + $0x570] sm:$0xff]
        %v3851 = vld [vmem:[#allocation2 + $0x578] sm:$0xff]
        %v3852 = vld [vmem:[#allocation2 + $0x580] sm:$0xff]
        %v3853 = vld [vmem:[#allocation2 + $0x588] sm:$0xff]
        %v3854 = vld [vmem:[#allocation2 + $0x590] sm:$0xff]
        %v3855 = vld [vmem:[#allocation2 + $0x598] sm:$0xff]
        %v3856 = vld [vmem:[#allocation2 + $0x5a0] sm:$0xff]
        %v3857 = vld [vmem:[#allocation2 + $0x5a8] sm:$0xff]
        %v3858 = vld [vmem:[#allocation2 + $0x5b0] sm:$0xff]
        %v3859 = vld [vmem:[#allocation2 + $0x5b8] sm:$0xff]
        %v3860 = vld [vmem:[#allocation2 + $0x5c0] sm:$0xff]
        %v3861 = vld [vmem:[#allocation2 + $0x5c8] sm:$0xff]
        %v3862 = vld [vmem:[#allocation2 + $0x5d0] sm:$0xff]
        %v3863 = vld [vmem:[#allocation2 + $0x5d8] sm:$0xff]
        %v3864 = vld [vmem:[#allocation2 + $0x5e0] sm:$0xff]
        %v3865 = vld [vmem:[#allocation2 + $0x5e8] sm:$0xff]
        %v3866 = vld [vmem:[#allocation2 + $0x5f0] sm:$0xff]
        %v3867 = vld [vmem:[#allocation2 + $0x5f8] sm:$0xff]
        %v3868 = vld [vmem:[#allocation2 + $0x600] sm:$0xff]
        %v3869 = vld [vmem:[#allocation2 + $0x608] sm:$0xff]
        %v3870 = vld [vmem:[#allocation2 + $0x610] sm:$0xff]
        %v3871 = vld [vmem:[#allocation2 + $0x618] sm:$0xff]
        %v3872 = vld [vmem:[#allocation2 + $0x620] sm:$0xff]
        %v3873 = vld [vmem:[#allocation2 + $0x628] sm:$0xff]
        %v3874 = vld [vmem:[#allocation2 + $0x630] sm:$0xff]
        %v3875 = vld [vmem:[#allocation2 + $0x638] sm:$0xff]
        %v3876 = vld [vmem:[#allocation2 + $0x640] sm:$0xff]
        %v3877 = vld [vmem:[#allocation2 + $0x648] sm:$0xff]
        %v3878 = vld [vmem:[#allocation2 + $0x650] sm:$0xff]
        %v3879 = vld [vmem:[#allocation2 + $0x658] sm:$0xff]
        %v3880 = vld [vmem:[#allocation2 + $0x660] sm:$0xff]
        %v3881 = vld [vmem:[#allocation2 + $0x668] sm:$0xff]
        %v3882 = vld [vmem:[#allocation2 + $0x670] sm:$0xff]
        %v3883 = vld [vmem:[#allocation2 + $0x678] sm:$0xff]
        %v3884 = vld [vmem:[#allocation2 + $0x680] sm:$0xff]
        %v3885 = vld [vmem:[#allocation2 + $0x688] sm:$0xff]
        %v3886 = vld [vmem:[#allocation2 + $0x690] sm:$0xff]
        %v3887 = vld [vmem:[#allocation2 + $0x698] sm:$0xff]
        %v3888 = vld [vmem:[#allocation2 + $0x6a0] sm:$0xff]
        %v3889 = vld [vmem:[#allocation2 + $0x6a8] sm:$0xff]
        %v3890 = vld [vmem:[#allocation2 + $0x6b0] sm:$0xff]
        %v3891 = vld [vmem:[#allocation2 + $0x6b8] sm:$0xff]
        %v3892 = vld [vmem:[#allocation2 + $0x6c0] sm:$0xff]
        %v3893 = vld [vmem:[#allocation2 + $0x6c8] sm:$0xff]
        %v3894 = vld [vmem:[#allocation2 + $0x6d0] sm:$0xff]
        %v3895 = vld [vmem:[#allocation2 + $0x6d8] sm:$0xff]
        %v3896 = vld [vmem:[#allocation2 + $0x6e0] sm:$0xff]
        %v3897 = vld [vmem:[#allocation2 + $0x6e8] sm:$0xff]
        %v3898 = vld [vmem:[#allocation2 + $0x6f0] sm:$0xff]
        %v3899 = vld [vmem:[#allocation2 + $0x6f8] sm:$0xff]
        %v3900 = vld [vmem:[#allocation2 + $0x700] sm:$0xff]
        %v3901 = vld [vmem:[#allocation2 + $0x708] sm:$0xff]
        %v3902 = vld [vmem:[#allocation2 + $0x710] sm:$0xff]
        %v3903 = vld [vmem:[#allocation2 + $0x718] sm:$0xff]
        %v3904 = vld [vmem:[#allocation2 + $0x720] sm:$0xff]
        %v3905 = vld [vmem:[#allocation2 + $0x728] sm:$0xff]
        %v3906 = vld [vmem:[#allocation2 + $0x730] sm:$0xff]
        %v3907 = vld [vmem:[#allocation2 + $0x738] sm:$0xff]
        %v3908 = vld [vmem:[#allocation2 + $0x740] sm:$0xff]
        %v3909 = vld [vmem:[#allocation2 + $0x748] sm:$0xff]
        %v3910 = vld [vmem:[#allocation2 + $0x750] sm:$0xff]
        %v3911 = vld [vmem:[#allocation2 + $0x758] sm:$0xff]
        %v3912 = vld [vmem:[#allocation2 + $0x760] sm:$0xff]
        %v3913 = vld [vmem:[#allocation2 + $0x768] sm:$0xff]
        %v3914 = vld [vmem:[#allocation2 + $0x770] sm:$0xff]
        %v3915 = vld [vmem:[#allocation2 + $0x778] sm:$0xff]
        %v3916 = vld [vmem:[#allocation2 + $0x780] sm:$0xff]
        %v3917 = vld [vmem:[#allocation2 + $0x788] sm:$0xff]
        %v3918 = vld [vmem:[#allocation2 + $0x790] sm:$0xff]
        %v3919 = vld [vmem:[#allocation2 + $0x798] sm:$0xff]
        %v3920 = vld [vmem:[#allocation2 + $0x7a0] sm:$0xff]
        %v3921 = vld [vmem:[#allocation2 + $0x7a8] sm:$0xff]
        %v3922 = vld [vmem:[#allocation2 + $0x7b0] sm:$0xff]
        %v3923 = vld [vmem:[#allocation2 + $0x7b8] sm:$0xff]
        %v3924 = vld [vmem:[#allocation2 + $0x7c0] sm:$0xff]
        %v3925 = vld [vmem:[#allocation2 + $0x7c8] sm:$0xff]
        %v3926 = vld [vmem:[#allocation2 + $0x7d0] sm:$0xff]
        %v3927 = vld [vmem:[#allocation2 + $0x7d8] sm:$0xff]
        %v3928 = vld [vmem:[#allocation2 + $0x7e0] sm:$0xff]
        %v3929 = vld [vmem:[#allocation2 + $0x7e8] sm:$0xff]
        %v3930 = vld [vmem:[#allocation2 + $0x7f0] sm:$0xff]
        %v3931 = vld [vmem:[#allocation2 + $0x7f8] sm:$0xff]
        %v3932 = vld [vmem:[#allocation2 + $0x800] sm:$0xff]
        %v3933 = vld [vmem:[#allocation2 + $0x808] sm:$0xff]
        %v3934 = vld [vmem:[#allocation2 + $0x810] sm:$0xff]
        %v3935 = vld [vmem:[#allocation2 + $0x818] sm:$0xff]
        %v3936 = vld [vmem:[#allocation2 + $0x820] sm:$0xff]
        %v3937 = vld [vmem:[#allocation2 + $0x828] sm:$0xff]
        %v3938 = vld [vmem:[#allocation2 + $0x830] sm:$0xff]
        %v3939 = vld [vmem:[#allocation2 + $0x838] sm:$0xff]
        %v3940 = vld [vmem:[#allocation2 + $0x840] sm:$0xff]
        %v3941 = vld [vmem:[#allocation2 + $0x848] sm:$0xff]
        %v3942 = vld [vmem:[#allocation2 + $0x850] sm:$0xff]
        %v3943 = vld [vmem:[#allocation2 + $0x858] sm:$0xff]
        %v3944 = vld [vmem:[#allocation2 + $0x860] sm:$0xff]
        %v3945 = vld [vmem:[#allocation2 + $0x868] sm:$0xff]
        %v3946 = vld [vmem:[#allocation2 + $0x870] sm:$0xff]
        %v3947 = vld [vmem:[#allocation2 + $0x878] sm:$0xff]
        %v3948 = vld [vmem:[#allocation2 + $0x880] sm:$0xff]
        %v3949 = vld [vmem:[#allocation2 + $0x888] sm:$0xff]
        %v3950 = vld [vmem:[#allocation2 + $0x890] sm:$0xff]
        %v3951 = vld [vmem:[#allocation2 + $0x898] sm:$0xff]
        %v3952 = vld [vmem:[#allocation2 + $0x8a0] sm:$0xff]
        %v3953 = vld [vmem:[#allocation2 + $0x8a8] sm:$0xff]
        %v3954 = vld [vmem:[#allocation2 + $0x8b0] sm:$0xff]
        %v3955 = vld [vmem:[#allocation2 + $0x8b8] sm:$0xff]
        %v3956 = vld [vmem:[#allocation2 + $0x8c0] sm:$0xff]
        %v3957 = vld [vmem:[#allocation2 + $0x8c8] sm:$0xff]
        %v3958 = vld [vmem:[#allocation2 + $0x8d0] sm:$0xff]
        %v3959 = vld [vmem:[#allocation2 + $0x8d8] sm:$0xff]
        %v3960 = vld [vmem:[#allocation2 + $0x8e0] sm:$0xff]
        %v3961 = vld [vmem:[#allocation2 + $0x8e8] sm:$0xff]
        %v3962 = vld [vmem:[#allocation2 + $0x8f0] sm:$0xff]
        %v3963 = vld [vmem:[#allocation2 + $0x8f8] sm:$0xff]
        %v3964 = vld [vmem:[#allocation2 + $0x900] sm:$0xff]
        %v3965 = vld [vmem:[#allocation2 + $0x908] sm:$0xff]
        %v3966 = vld [vmem:[#allocation2 + $0x910] sm:$0xff]
        %v3967 = vld [vmem:[#allocation2 + $0x918] sm:$0xff]
        %v3968 = vld [vmem:[#allocation2 + $0x920] sm:$0xff]
        %v3969 = vld [vmem:[#allocation2 + $0x928] sm:$0xff]
        %v3970 = vld [vmem:[#allocation2 + $0x930] sm:$0xff]
        %v3971 = vld [vmem:[#allocation2 + $0x938] sm:$0xff]
        %v3972 = vld [vmem:[#allocation2 + $0x940] sm:$0xff]
        %v3973 = vld [vmem:[#allocation2 + $0x948] sm:$0xff]
        %v3974 = vld [vmem:[#allocation2 + $0x950] sm:$0xff]
        %v3975 = vld [vmem:[#allocation2 + $0x958] sm:$0xff]
        %v3976 = vld [vmem:[#allocation2 + $0x960] sm:$0xff]
        %v3977 = vld [vmem:[#allocation2 + $0x968] sm:$0xff]
        %v3978 = vld [vmem:[#allocation2 + $0x970] sm:$0xff]
        %v3979 = vld [vmem:[#allocation2 + $0x978] sm:$0xff]
        %v3980 = vld [vmem:[#allocation2 + $0x980] sm:$0xff]
        %v3981 = vld [vmem:[#allocation2 + $0x988] sm:$0xff]
        %v3982 = vld [vmem:[#allocation2 + $0x990] sm:$0xff]
        %v3983 = vld [vmem:[#allocation2 + $0x998] sm:$0xff]
        %v3984 = vld [vmem:[#allocation2 + $0x9a0] sm:$0xff]
        %v3985 = vld [vmem:[#allocation2 + $0x9a8] sm:$0xff]
        %v3986 = vld [vmem:[#allocation2 + $0x9b0] sm:$0xff]
        %v3987 = vld [vmem:[#allocation2 + $0x9b8] sm:$0xff]
        %v3988 = vld [vmem:[#allocation2 + $0x9c0] sm:$0xff]
        %v3989 = vld [vmem:[#allocation2 + $0x9c8] sm:$0xff]
        %v3990 = vld [vmem:[#allocation2 + $0x9d0] sm:$0xff]
        %v3991 = vld [vmem:[#allocation2 + $0x9d8] sm:$0xff]
        %v3992 = vld [vmem:[#allocation2 + $0x9e0] sm:$0xff]
        %v3993 = vld [vmem:[#allocation2 + $0x9e8] sm:$0xff]
        %v3994 = vld [vmem:[#allocation2 + $0x9f0] sm:$0xff]
        %v3995 = vld [vmem:[#allocation2 + $0x9f8] sm:$0xff]
        %v3996 = vld [vmem:[#allocation2 + $0xa00] sm:$0xff]
        %v3997 = vld [vmem:[#allocation2 + $0xa08] sm:$0xff]
        %v3998 = vld [vmem:[#allocation2 + $0xa10] sm:$0xff]
        %v3999 = vld [vmem:[#allocation2 + $0xa18] sm:$0xff]
        %v4000 = vld [vmem:[#allocation2 + $0xa20] sm:$0xff]
        %v4001 = vld [vmem:[#allocation2 + $0xa28] sm:$0xff]
        %v4002 = vld [vmem:[#allocation2 + $0xa30] sm:$0xff]
        %v4003 = vld [vmem:[#allocation2 + $0xa38] sm:$0xff]
        %v4004 = vld [vmem:[#allocation2 + $0xa40] sm:$0xff]
        %v4005 = vld [vmem:[#allocation2 + $0xa48] sm:$0xff]
        %v4006 = vld [vmem:[#allocation2 + $0xa50] sm:$0xff]
        %v4007 = vld [vmem:[#allocation2 + $0xa58] sm:$0xff]
        %v4008 = vld [vmem:[#allocation2 + $0xa60] sm:$0xff]
        %v4009 = vld [vmem:[#allocation2 + $0xa68] sm:$0xff]
        %v4010 = vld [vmem:[#allocation2 + $0xa70] sm:$0xff]
        %v4011 = vld [vmem:[#allocation2 + $0xa78] sm:$0xff]
        %v4012 = vld [vmem:[#allocation2 + $0xa80] sm:$0xff]
        %v4013 = vld [vmem:[#allocation2 + $0xa88] sm:$0xff]
        %v4014 = vld [vmem:[#allocation2 + $0xa90] sm:$0xff]
        %v4015 = vld [vmem:[#allocation2 + $0xa98] sm:$0xff]
        %v4016 = vld [vmem:[#allocation2 + $0xaa0] sm:$0xff]
        %v4017 = vld [vmem:[#allocation2 + $0xaa8] sm:$0xff]
        %v4018 = vld [vmem:[#allocation2 + $0xab0] sm:$0xff]
        %v4019 = vld [vmem:[#allocation2 + $0xab8] sm:$0xff]
        %v4020 = vld [vmem:[#allocation2 + $0xac0] sm:$0xff]
        %v4021 = vld [vmem:[#allocation2 + $0xac8] sm:$0xff]
        %v4022 = vld [vmem:[#allocation2 + $0xad0] sm:$0xff]
        %v4023 = vld [vmem:[#allocation2 + $0xad8] sm:$0xff]
        %v4024 = vld [vmem:[#allocation2 + $0xae0] sm:$0xff]
        %v4025 = vld [vmem:[#allocation2 + $0xae8] sm:$0xff]
        %v4026 = vld [vmem:[#allocation2 + $0xaf0] sm:$0xff]
        %v4027 = vld [vmem:[#allocation2 + $0xaf8] sm:$0xff]
        %v4028 = vld [vmem:[#allocation2 + $0xb00] sm:$0xff]
        %v4029 = vld [vmem:[#allocation2 + $0xb08] sm:$0xff]
        %v4030 = vld [vmem:[#allocation2 + $0xb10] sm:$0xff]
        %v4031 = vld [vmem:[#allocation2 + $0xb18] sm:$0xff]
        %v4032 = vld [vmem:[#allocation2 + $0xb20] sm:$0xff]
        %v4033 = vld [vmem:[#allocation2 + $0xb28] sm:$0xff]
        %v4034 = vld [vmem:[#allocation2 + $0xb30] sm:$0xff]
        %v4035 = vld [vmem:[#allocation2 + $0xb38] sm:$0xff]
        %v4036 = vld [vmem:[#allocation2 + $0xb40] sm:$0xff]
        %v4037 = vld [vmem:[#allocation2 + $0xb48] sm:$0xff]
        %v4038 = vld [vmem:[#allocation2 + $0xb50] sm:$0xff]
        %v4039 = vld [vmem:[#allocation2 + $0xb58] sm:$0xff]
        %v4040 = vld [vmem:[#allocation2 + $0xb60] sm:$0xff]
        %v4041 = vld [vmem:[#allocation2 + $0xb68] sm:$0xff]
        %v4042 = vld [vmem:[#allocation2 + $0xb70] sm:$0xff]
        %v4043 = vld [vmem:[#allocation2 + $0xb78] sm:$0xff]
        %v4044 = vld [vmem:[#allocation2 + $0xb80] sm:$0xff]
        %v4045 = vld [vmem:[#allocation2 + $0xb88] sm:$0xff]
        %v4046 = vld [vmem:[#allocation2 + $0xb90] sm:$0xff]
        %v4047 = vld [vmem:[#allocation2 + $0xb98] sm:$0xff]
        %v4048 = vld [vmem:[#allocation2 + $0xba0] sm:$0xff]
        %v4049 = vld [vmem:[#allocation2 + $0xba8] sm:$0xff]
        %v4050 = vld [vmem:[#allocation2 + $0xbb0] sm:$0xff]
        %v4051 = vld [vmem:[#allocation2 + $0xbb8] sm:$0xff]
        %v4052 = vld [vmem:[#allocation2 + $0xbc0] sm:$0xff]
        %v4053 = vld [vmem:[#allocation2 + $0xbc8] sm:$0xff]
        %v4054 = vld [vmem:[#allocation2 + $0xbd0] sm:$0xff]
        %v4055 = vld [vmem:[#allocation2 + $0xbd8] sm:$0xff]
        %v4056 = vld [vmem:[#allocation2 + $0xbe0] sm:$0xff]
        %v4057 = vld [vmem:[#allocation2 + $0xbe8] sm:$0xff]
        %v4058 = vld [vmem:[#allocation2 + $0xbf0] sm:$0xff]
        %v4059 = vld [vmem:[#allocation2 + $0xbf8] sm:$0xff]
        %v4060 = vld [vmem:[#allocation2 + $0xc00] sm:$0xff]
        %v4061 = vld [vmem:[#allocation2 + $0xc08] sm:$0xff]
        %v4062 = vld [vmem:[#allocation2 + $0xc10] sm:$0xff]
        %v4063 = vld [vmem:[#allocation2 + $0xc18] sm:$0xff]
        %v4064 = vld [vmem:[#allocation2 + $0xc20] sm:$0xff]
        %v4065 = vld [vmem:[#allocation2 + $0xc28] sm:$0xff]
        %v4066 = vld [vmem:[#allocation2 + $0xc30] sm:$0xff]
        %v4067 = vld [vmem:[#allocation2 + $0xc38] sm:$0xff]
        %v4068 = vld [vmem:[#allocation2 + $0xc40] sm:$0xff]
        %v4069 = vld [vmem:[#allocation2 + $0xc48] sm:$0xff]
        %v4070 = vld [vmem:[#allocation2 + $0xc50] sm:$0xff]
        %v4071 = vld [vmem:[#allocation2 + $0xc58] sm:$0xff]
        %v4072 = vld [vmem:[#allocation2 + $0xc60] sm:$0xff]
        %v4073 = vld [vmem:[#allocation2 + $0xc68] sm:$0xff]
        %v4074 = vld [vmem:[#allocation2 + $0xc70] sm:$0xff]
        %v4075 = vld [vmem:[#allocation2 + $0xc78] sm:$0xff]
        %v4076 = vld [vmem:[#allocation2 + $0xc80] sm:$0xff]
        %v4077 = vld [vmem:[#allocation2 + $0xc88] sm:$0xff]
        %v4078 = vld [vmem:[#allocation2 + $0xc90] sm:$0xff]
        %v4079 = vld [vmem:[#allocation2 + $0xc98] sm:$0xff]
        %v4080 = vld [vmem:[#allocation2 + $0xca0] sm:$0xff]
        %v4081 = vld [vmem:[#allocation2 + $0xca8] sm:$0xff]
        %v4082 = vld [vmem:[#allocation2 + $0xcb0] sm:$0xff]
        %v4083 = vld [vmem:[#allocation2 + $0xcb8] sm:$0xff]
        %v4084 = vld [vmem:[#allocation2 + $0xcc0] sm:$0xff]
        %v4085 = vld [vmem:[#allocation2 + $0xcc8] sm:$0xff]
        %v4086 = vld [vmem:[#allocation2 + $0xcd0] sm:$0xff]
        %v4087 = vld [vmem:[#allocation2 + $0xcd8] sm:$0xff]
        %v4088 = vld [vmem:[#allocation2 + $0xce0] sm:$0xff]
        %v4089 = vld [vmem:[#allocation2 + $0xce8] sm:$0xff]
        %v4090 = vld [vmem:[#allocation2 + $0xcf0] sm:$0xff]
        %v4091 = vld [vmem:[#allocation2 + $0xcf8] sm:$0xff]
        %v4092 = vld [vmem:[#allocation2 + $0xd00] sm:$0xff]
        %v4093 = vld [vmem:[#allocation2 + $0xd08] sm:$0xff]
        %v4094 = vld [vmem:[#allocation2 + $0xd10] sm:$0xff]
        %v4095 = vld [vmem:[#allocation2 + $0xd18] sm:$0xff]
        %v4096 = vld [vmem:[#allocation2 + $0xd20] sm:$0xff]
        %v4097 = vld [vmem:[#allocation2 + $0xd28] sm:$0xff]
        %v4098 = vld [vmem:[#allocation2 + $0xd30] sm:$0xff]
        %v4099 = vld [vmem:[#allocation2 + $0xd38] sm:$0xff]
        %v4100 = vld [vmem:[#allocation2 + $0xd40] sm:$0xff]
        %v4101 = vld [vmem:[#allocation2 + $0xd48] sm:$0xff]
        %v4102 = vld [vmem:[#allocation2 + $0xd50] sm:$0xff]
        %v4103 = vld [vmem:[#allocation2 + $0xd58] sm:$0xff]
        %v4104 = vld [vmem:[#allocation2 + $0xd60] sm:$0xff]
        %v4105 = vld [vmem:[#allocation2 + $0xd68] sm:$0xff]
        %v4106 = vld [vmem:[#allocation2 + $0xd70] sm:$0xff]
        %v4107 = vld [vmem:[#allocation2 + $0xd78] sm:$0xff]
        %v4108 = vld [vmem:[#allocation2 + $0xd80] sm:$0xff]
        %v4109 = vld [vmem:[#allocation2 + $0xd88] sm:$0xff]
        %v4110 = vld [vmem:[#allocation2 + $0xd90] sm:$0xff]
        %v4111 = vld [vmem:[#allocation2 + $0xd98] sm:$0xff]
        %v4112 = vld [vmem:[#allocation2 + $0xda0] sm:$0xff]
        %v4113 = vld [vmem:[#allocation2 + $0xda8] sm:$0xff]
        %v4114 = vld [vmem:[#allocation2 + $0xdb0] sm:$0xff]
        %v4115 = vld [vmem:[#allocation2 + $0xdb8] sm:$0xff]
        %v4116 = vld [vmem:[#allocation2 + $0xdc0] sm:$0xff]
        %v4117 = vld [vmem:[#allocation2 + $0xdc8] sm:$0xff]
        %v4118 = vld [vmem:[#allocation2 + $0xdd0] sm:$0xff]
        %v4119 = vld [vmem:[#allocation2 + $0xdd8] sm:$0xff]
        %v4120 = vld [vmem:[#allocation2 + $0xde0] sm:$0xff]
        %v4121 = vld [vmem:[#allocation2 + $0xde8] sm:$0xff]
        %v4122 = vld [vmem:[#allocation2 + $0xdf0] sm:$0xff]
        %v4123 = vld [vmem:[#allocation2 + $0xdf8] sm:$0xff]
        %v4124 = vld [vmem:[#allocation2 + $0xe00] sm:$0xff]
        %v4125 = vld [vmem:[#allocation2 + $0xe08] sm:$0xff]
        %v4126 = vld [vmem:[#allocation2 + $0xe10] sm:$0xff]
        %v4127 = vld [vmem:[#allocation2 + $0xe18] sm:$0xff]
        %v4128 = vld [vmem:[#allocation2 + $0xe20] sm:$0xff]
        %v4129 = vld [vmem:[#allocation2 + $0xe28] sm:$0xff]
        %v4130 = vld [vmem:[#allocation2 + $0xe30] sm:$0xff]
        %v4131 = vld [vmem:[#allocation2 + $0xe38] sm:$0xff]
        %v4132 = vld [vmem:[#allocation2 + $0xe40] sm:$0xff]
        %v4133 = vld [vmem:[#allocation2 + $0xe48] sm:$0xff]
        %v4134 = vld [vmem:[#allocation2 + $0xe50] sm:$0xff]
        %v4135 = vld [vmem:[#allocation2 + $0xe58] sm:$0xff]
        %v4136 = vld [vmem:[#allocation2 + $0xe60] sm:$0xff]
        %v4137 = vld [vmem:[#allocation2 + $0xe68] sm:$0xff]
        %v4138 = vld [vmem:[#allocation2 + $0xe70] sm:$0xff]
        %v4139 = vld [vmem:[#allocation2 + $0xe78] sm:$0xff]
        %v4140 = vld [vmem:[#allocation2 + $0xe80] sm:$0xff]
        %v4141 = vld [vmem:[#allocation2 + $0xe88] sm:$0xff]
        %v4142 = vld [vmem:[#allocation2 + $0xe90] sm:$0xff]
        %v4143 = vld [vmem:[#allocation2 + $0xe98] sm:$0xff]
        %v4144 = vld [vmem:[#allocation2 + $0xea0] sm:$0xff]
        %v4145 = vld [vmem:[#allocation2 + $0xea8] sm:$0xff]
        %v4146 = vld [vmem:[#allocation2 + $0xeb0] sm:$0xff]
        %v4147 = vld [vmem:[#allocation2 + $0xeb8] sm:$0xff]
        %v4148 = vld [vmem:[#allocation2 + $0xec0] sm:$0xff]
        %v4149 = vld [vmem:[#allocation2 + $0xec8] sm:$0xff]
        %v4150 = vld [vmem:[#allocation2 + $0xed0] sm:$0xff]
        %v4151 = vld [vmem:[#allocation2 + $0xed8] sm:$0xff]
        %v4152 = vld [vmem:[#allocation2 + $0xee0] sm:$0xff]
        %v4153 = vld [vmem:[#allocation2 + $0xee8] sm:$0xff]
        %v4154 = vld [vmem:[#allocation2 + $0xef0] sm:$0xff]
        %v4155 = vld [vmem:[#allocation2 + $0xef8] sm:$0xff]
        %v4156 = vld [vmem:[#allocation2 + $0xf00] sm:$0xff]
        %v4157 = vld [vmem:[#allocation2 + $0xf08] sm:$0xff]
        %v4158 = vld [vmem:[#allocation2 + $0xf10] sm:$0xff]
        %v4159 = vld [vmem:[#allocation2 + $0xf18] sm:$0xff]
        %v4160 = vld [vmem:[#allocation2 + $0xf20] sm:$0xff]
        %v4161 = vld [vmem:[#allocation2 + $0xf28] sm:$0xff]
        %v4162 = vld [vmem:[#allocation2 + $0xf30] sm:$0xff]
        %v4163 = vld [vmem:[#allocation2 + $0xf38] sm:$0xff]
        %v4164 = vld [vmem:[#allocation2 + $0xf40] sm:$0xff]
        %v4165 = vld [vmem:[#allocation2 + $0xf48] sm:$0xff]
        %v4166 = vld [vmem:[#allocation2 + $0xf50] sm:$0xff]
        %v4167 = vld [vmem:[#allocation2 + $0xf58] sm:$0xff]
        %v4168 = vld [vmem:[#allocation2 + $0xf60] sm:$0xff]
        %v4169 = vld [vmem:[#allocation2 + $0xf68] sm:$0xff]
        %v4170 = vld [vmem:[#allocation2 + $0xf70] sm:$0xff]
        %v4171 = vld [vmem:[#allocation2 + $0xf78] sm:$0xff]
        %v4172 = vld [vmem:[#allocation2 + $0xf80] sm:$0xff]
        %v4173 = vld [vmem:[#allocation2 + $0xf88] sm:$0xff]
        %v4174 = vld [vmem:[#allocation2 + $0xf90] sm:$0xff]
        %v4175 = vld [vmem:[#allocation2 + $0xf98] sm:$0xff]
        %v4176 = vld [vmem:[#allocation2 + $0xfa0] sm:$0xff]
        %v4177 = vld [vmem:[#allocation2 + $0xfa8] sm:$0xff]
        %v4178 = vld [vmem:[#allocation2 + $0xfb0] sm:$0xff]
        %v4179 = vld [vmem:[#allocation2 + $0xfb8] sm:$0xff]
        %v4180 = vld [vmem:[#allocation2 + $0xfc0] sm:$0xff]
        %v4181 = vld [vmem:[#allocation2 + $0xfc8] sm:$0xff]
        %v4182 = vld [vmem:[#allocation2 + $0xfd0] sm:$0xff]
        %v4183 = vld [vmem:[#allocation2 + $0xfd8] sm:$0xff]
        %v4184 = vld [vmem:[#allocation2 + $0xfe0] sm:$0xff]
        %v4185 = vld [vmem:[#allocation2 + $0xfe8] sm:$0xff]
        %v4186 = vld [vmem:[#allocation2 + $0xff0] sm:$0xff]
        %v4187 = vld [vmem:[#allocation2 + $0xff8] sm:$0xff]
        %v4188 = vld [vmem:[#allocation2 + $0x1000] sm:$0xff]
        %v4189 = vld [vmem:[#allocation2 + $0x1008] sm:$0xff]
        %v4190 = vld [vmem:[#allocation2 + $0x1010] sm:$0xff]
        %v4191 = vld [vmem:[#allocation2 + $0x1018] sm:$0xff]
        %v4192 = vld [vmem:[#allocation2 + $0x1020] sm:$0xff]
        %v4193 = vld [vmem:[#allocation2 + $0x1028] sm:$0xff]
        %v4194 = vld [vmem:[#allocation2 + $0x1030] sm:$0xff]
        %v4195 = vld [vmem:[#allocation2 + $0x1038] sm:$0xff]
        %v4196 = vld [vmem:[#allocation2 + $0x1040] sm:$0xff]
        %v4197 = vld [vmem:[#allocation2 + $0x1048] sm:$0xff]
        %v4198 = vld [vmem:[#allocation2 + $0x1050] sm:$0xff]
        %v4199 = vld [vmem:[#allocation2 + $0x1058] sm:$0xff]
        %v4200 = vld [vmem:[#allocation2 + $0x1060] sm:$0xff]
        %v4201 = vld [vmem:[#allocation2 + $0x1068] sm:$0xff]
        %v4202 = vld [vmem:[#allocation2 + $0x1070] sm:$0xff]
        %v4203 = vld [vmem:[#allocation2 + $0x1078] sm:$0xff]
        %v4204 = vld [vmem:[#allocation2 + $0x1080] sm:$0xff]
        %v4205 = vld [vmem:[#allocation2 + $0x1088] sm:$0xff]
        %v4206 = vld [vmem:[#allocation2 + $0x1090] sm:$0xff]
        %v4207 = vld [vmem:[#allocation2 + $0x1098] sm:$0xff]
        %v4208 = vld [vmem:[#allocation2 + $0x10a0] sm:$0xff]
        %v4209 = vld [vmem:[#allocation2 + $0x10a8] sm:$0xff]
        %v4210 = vld [vmem:[#allocation2 + $0x10b0] sm:$0xff]
        %v4211 = vld [vmem:[#allocation2 + $0x10b8] sm:$0xff]
        %v4212 = vld [vmem:[#allocation2 + $0x10c0] sm:$0xff]
        %v4213 = vld [vmem:[#allocation2 + $0x10c8] sm:$0xff]
        %v4214 = vld [vmem:[#allocation2 + $0x10d0] sm:$0xff]
        %v4215 = vld [vmem:[#allocation2 + $0x10d8] sm:$0xff]
        %v4216 = vld [vmem:[#allocation2 + $0x10e0] sm:$0xff]
        %v4217 = vld [vmem:[#allocation2 + $0x10e8] sm:$0xff]
        %v4218 = vld [vmem:[#allocation2 + $0x10f0] sm:$0xff]
        %v4219 = vld [vmem:[#allocation2 + $0x10f8] sm:$0xff]
        %v4220 = vld [vmem:[#allocation2 + $0x1100] sm:$0xff]
        %v4221 = vld [vmem:[#allocation2 + $0x1108] sm:$0xff]
        %v4222 = vld [vmem:[#allocation2 + $0x1110] sm:$0xff]
        %v4223 = vld [vmem:[#allocation2 + $0x1118] sm:$0xff]
        %v4224 = vld [vmem:[#allocation2 + $0x1120] sm:$0xff]
        %v4225 = vld [vmem:[#allocation2 + $0x1128] sm:$0xff]
        %v4226 = vld [vmem:[#allocation2 + $0x1130] sm:$0xff]
        %v4227 = vld [vmem:[#allocation2 + $0x1138] sm:$0xff]
        %v4228 = vld [vmem:[#allocation2 + $0x1140] sm:$0xff]
        %v4229 = vld [vmem:[#allocation2 + $0x1148] sm:$0xff]
        %v4230 = vld [vmem:[#allocation2 + $0x1150] sm:$0xff]
        %v4231 = vld [vmem:[#allocation2 + $0x1158] sm:$0xff]
        %v4232 = vld [vmem:[#allocation2 + $0x1160] sm:$0xff]
        %v4233 = vld [vmem:[#allocation2 + $0x1168] sm:$0xff]
        %v4234 = vld [vmem:[#allocation2 + $0x1170] sm:$0xff]
        %v4235 = vld [vmem:[#allocation2 + $0x1178] sm:$0xff]
        %v4236 = vld [vmem:[#allocation2 + $0x1180] sm:$0xff]
        %v4237 = vld [vmem:[#allocation2 + $0x1188] sm:$0xff]
        %v4238 = vld [vmem:[#allocation2 + $0x1190] sm:$0xff]
        %v4239 = vld [vmem:[#allocation2 + $0x1198] sm:$0xff]
        %v4240 = vld [vmem:[#allocation2 + $0x11a0] sm:$0xff]
        %v4241 = vld [vmem:[#allocation2 + $0x11a8] sm:$0xff]
        %v4242 = vld [vmem:[#allocation2 + $0x11b0] sm:$0xff]
        %v4243 = vld [vmem:[#allocation2 + $0x11b8] sm:$0xff]
        %v4244 = vld [vmem:[#allocation2 + $0x11c0] sm:$0xff]
        %v4245 = vld [vmem:[#allocation2 + $0x11c8] sm:$0xff]
        %v4246 = vld [vmem:[#allocation2 + $0x11d0] sm:$0xff]
        %v4247 = vld [vmem:[#allocation2 + $0x11d8] sm:$0xff]
        %v4248 = vld [vmem:[#allocation2 + $0x11e0] sm:$0xff]
        %v4249 = vld [vmem:[#allocation2 + $0x11e8] sm:$0xff]
        %v4250 = vld [vmem:[#allocation2 + $0x11f0] sm:$0xff]
        %v4251 = vld [vmem:[#allocation2 + $0x11f8] sm:$0xff]
        %v4252 = vld [vmem:[%s11] sm:$0x7]
        %v4254 = vperm.slane %v4252, 0
        %v4255 = vperm.slane %v4252, 1
        %v4256 = vperm.slane %v4252, 2
        %4260 = vmatpush.msra.mxu0 %v3721
        %4261 = vmatpush.msra.mxu0 %v3718
        %4262 = vmatpush.msra.mxu0 %v3715
        %4263 = vmatpush.msra.mxu0 %v3712
        %4264 = vmatpush.msra.mxu0 %v3709
        %4265 = vmatpush.msra.mxu0 %v3706
        %4266 = vmatpush.msra.mxu0 %v3703
        %4267 = vmatpush.msra.mxu0 %v3700
        %4268 = vmatpush.msra.mxu0 %v3697
        %4269 = vmatpush.msra.mxu0 %v3694
        %4270 = vmatpush.msra.mxu0 %v3691
        %4271 = vmatpush.msra.mxu0 %v3688
        %4272 = vmatpush.msra.mxu0 %v3685
        %4273 = vmatpush.msra.mxu0 %v3682
        %4274 = vmatpush.msra.mxu0 %v3679
        %4275 = vmatpush.msra.mxu0 %v3676
        %4276 = vmatmul.f32.gmra.mxu0 %v3664
        %v4277 = vpop.f32.mrf.mxu0
        %v4278 = vadd.f32 %v4254, %v4277
        %4279 = vdwg.mxu0
        %4280 = vmatpush.msra.mxu0 %v3769
        %4281 = vmatpush.msra.mxu0 %v3766
        %4282 = vmatpush.msra.mxu0 %v3763
        %4283 = vmatpush.msra.mxu0 %v3760
        %4284 = vmatpush.msra.mxu0 %v3757
        %4285 = vmatpush.msra.mxu0 %v3754
        %4286 = vmatpush.msra.mxu0 %v3751
        %4287 = vmatpush.msra.mxu0 %v3748
        %4288 = vmatpush.msra.mxu0 %v3745
        %4289 = vmatpush.msra.mxu0 %v3742
        %4290 = vmatpush.msra.mxu0 %v3739
        %4291 = vmatpush.msra.mxu0 %v3736
        %4292 = vmatpush.msra.mxu0 %v3733
        %4293 = vmatpush.msra.mxu0 %v3730
        %4294 = vmatpush.msra.mxu0 %v3727
        %4295 = vmatpush.msra.mxu0 %v3724
        %4296 = vmatmul.f32.gmra.mxu0 %v3665
        %v4297 = vpop.f32.mrf.mxu0
        %v4298 = vadd.f32 %v4278, %v4297
        %4299 = vdwg.mxu0
        %4300 = vmatpush.msra.mxu0 %v3817
        %4301 = vmatpush.msra.mxu0 %v3814
        %4302 = vmatpush.msra.mxu0 %v3811
        %4303 = vmatpush.msra.mxu0 %v3808
        %4304 = vmatpush.msra.mxu0 %v3805
        %4305 = vmatpush.msra.mxu0 %v3802
        %4306 = vmatpush.msra.mxu0 %v3799
        %4307 = vmatpush.msra.mxu0 %v3796
        %4308 = vmatpush.msra.mxu0 %v3793
        %4309 = vmatpush.msra.mxu0 %v3790
        %4310 = vmatpush.msra.mxu0 %v3787
        %4311 = vmatpush.msra.mxu0 %v3784
        %4312 = vmatpush.msra.mxu0 %v3781
        %4313 = vmatpush.msra.mxu0 %v3778
        %4314 = vmatpush.msra.mxu0 %v3775
        %4315 = vmatpush.msra.mxu0 %v3772
        %4316 = vmatmul.f32.gmra.mxu0 %v3666
        %v4317 = vpop.f32.mrf.mxu0
        %v4318 = vadd.f32 %v4298, %v4317
        %4319 = vdwg.mxu0
        %4320 = vmatpush.msra.mxu0 %v3865
        %4321 = vmatpush.msra.mxu0 %v3862
        %4322 = vmatpush.msra.mxu0 %v3859
        %4323 = vmatpush.msra.mxu0 %v3856
        %4324 = vmatpush.msra.mxu0 %v3853
        %4325 = vmatpush.msra.mxu0 %v3850
        %4326 = vmatpush.msra.mxu0 %v3847
        %4327 = vmatpush.msra.mxu0 %v3844
        %4328 = vmatpush.msra.mxu0 %v3841
        %4329 = vmatpush.msra.mxu0 %v3838
        %4330 = vmatpush.msra.mxu0 %v3835
        %4331 = vmatpush.msra.mxu0 %v3832
        %4332 = vmatpush.msra.mxu0 %v3829
        %4333 = vmatpush.msra.mxu0 %v3826
        %4334 = vmatpush.msra.mxu0 %v3823
        %4335 = vmatpush.msra.mxu0 %v3820
        %4336 = vmatmul.f32.gmra.mxu0 %v3667
        %v4337 = vpop.f32.mrf.mxu0
        %v4338 = vadd.f32 %v4318, %v4337
        %4339 = vdwg.mxu0
        %4340 = vmatpush.msra.mxu0 %v3913
        %4341 = vmatpush.msra.mxu0 %v3910
        %4342 = vmatpush.msra.mxu0 %v3907
        %4343 = vmatpush.msra.mxu0 %v3904
        %4344 = vmatpush.msra.mxu0 %v3901
        %4345 = vmatpush.msra.mxu0 %v3898
        %4346 = vmatpush.msra.mxu0 %v3895
        %4347 = vmatpush.msra.mxu0 %v3892
        %4348 = vmatpush.msra.mxu0 %v3889
        %4349 = vmatpush.msra.mxu0 %v3886
        %4350 = vmatpush.msra.mxu0 %v3883
        %4351 = vmatpush.msra.mxu0 %v3880
        %4352 = vmatpush.msra.mxu0 %v3877
        %4353 = vmatpush.msra.mxu0 %v3874
        %4354 = vmatpush.msra.mxu0 %v3871
        %4355 = vmatpush.msra.mxu0 %v3868
        %4356 = vmatmul.f32.gmra.mxu0 %v3668
        %v4357 = vpop.f32.mrf.mxu0
        %v4358 = vadd.f32 %v4338, %v4357
        %4359 = vdwg.mxu0
        %4360 = vmatpush.msra.mxu0 %v3961
        %4361 = vmatpush.msra.mxu0 %v3958
        %4362 = vmatpush.msra.mxu0 %v3955
        %4363 = vmatpush.msra.mxu0 %v3952
        %4364 = vmatpush.msra.mxu0 %v3949
        %4365 = vmatpush.msra.mxu0 %v3946
        %4366 = vmatpush.msra.mxu0 %v3943
        %4367 = vmatpush.msra.mxu0 %v3940
        %4368 = vmatpush.msra.mxu0 %v3937
        %4369 = vmatpush.msra.mxu0 %v3934
        %4370 = vmatpush.msra.mxu0 %v3931
        %4371 = vmatpush.msra.mxu0 %v3928
        %4372 = vmatpush.msra.mxu0 %v3925
        %4373 = vmatpush.msra.mxu0 %v3922
        %4374 = vmatpush.msra.mxu0 %v3919
        %4375 = vmatpush.msra.mxu0 %v3916
        %4376 = vmatmul.f32.gmra.mxu0 %v3669
        %v4377 = vpop.f32.mrf.mxu0
        %v4378 = vadd.f32 %v4358, %v4377
        %4379 = vdwg.mxu0
        %4380 = vmatpush.msra.mxu0 %v4009
        %4381 = vmatpush.msra.mxu0 %v4006
        %4382 = vmatpush.msra.mxu0 %v4003
        %4383 = vmatpush.msra.mxu0 %v4000
        %4384 = vmatpush.msra.mxu0 %v3997
        %4385 = vmatpush.msra.mxu0 %v3994
        %4386 = vmatpush.msra.mxu0 %v3991
        %4387 = vmatpush.msra.mxu0 %v3988
        %4388 = vmatpush.msra.mxu0 %v3985
        %4389 = vmatpush.msra.mxu0 %v3982
        %4390 = vmatpush.msra.mxu0 %v3979
        %4391 = vmatpush.msra.mxu0 %v3976
        %4392 = vmatpush.msra.mxu0 %v3973
        %4393 = vmatpush.msra.mxu0 %v3970
        %4394 = vmatpush.msra.mxu0 %v3967
        %4395 = vmatpush.msra.mxu0 %v3964
        %4396 = vmatmul.f32.gmra.mxu0 %v3670
        %v4397 = vpop.f32.mrf.mxu0
        %v4398 = vadd.f32 %v4378, %v4397
        %4399 = vdwg.mxu0
        %4400 = vmatpush.msra.mxu0 %v4057
        %4401 = vmatpush.msra.mxu0 %v4054
        %4402 = vmatpush.msra.mxu0 %v4051
        %4403 = vmatpush.msra.mxu0 %v4048
        %4404 = vmatpush.msra.mxu0 %v4045
        %4405 = vmatpush.msra.mxu0 %v4042
        %4406 = vmatpush.msra.mxu0 %v4039
        %4407 = vmatpush.msra.mxu0 %v4036
        %4408 = vmatpush.msra.mxu0 %v4033
        %4409 = vmatpush.msra.mxu0 %v4030
        %4410 = vmatpush.msra.mxu0 %v4027
        %4411 = vmatpush.msra.mxu0 %v4024
        %4412 = vmatpush.msra.mxu0 %v4021
        %4413 = vmatpush.msra.mxu0 %v4018
        %4414 = vmatpush.msra.mxu0 %v4015
        %4415 = vmatpush.msra.mxu0 %v4012
        %4416 = vmatmul.f32.gmra.mxu0 %v3671
        %v4417 = vpop.f32.mrf.mxu0
        %v4418 = vadd.f32 %v4398, %v4417
        %4419 = vdwg.mxu0
        %4420 = vmatpush.msra.mxu0 %v4105
        %4421 = vmatpush.msra.mxu0 %v4102
        %4422 = vmatpush.msra.mxu0 %v4099
        %4423 = vmatpush.msra.mxu0 %v4096
        %4424 = vmatpush.msra.mxu0 %v4093
        %4425 = vmatpush.msra.mxu0 %v4090
        %4426 = vmatpush.msra.mxu0 %v4087
        %4427 = vmatpush.msra.mxu0 %v4084
        %4428 = vmatpush.msra.mxu0 %v4081
        %4429 = vmatpush.msra.mxu0 %v4078
        %4430 = vmatpush.msra.mxu0 %v4075
        %4431 = vmatpush.msra.mxu0 %v4072
        %4432 = vmatpush.msra.mxu0 %v4069
        %4433 = vmatpush.msra.mxu0 %v4066
        %4434 = vmatpush.msra.mxu0 %v4063
        %4435 = vmatpush.msra.mxu0 %v4060
        %4436 = vmatmul.f32.gmra.mxu0 %v3672
        %v4437 = vpop.f32.mrf.mxu0
        %v4438 = vadd.f32 %v4418, %v4437
        %4439 = vdwg.mxu0
        %4440 = vmatpush.msra.mxu0 %v4153
        %4441 = vmatpush.msra.mxu0 %v4150
        %4442 = vmatpush.msra.mxu0 %v4147
        %4443 = vmatpush.msra.mxu0 %v4144
        %4444 = vmatpush.msra.mxu0 %v4141
        %4445 = vmatpush.msra.mxu0 %v4138
        %4446 = vmatpush.msra.mxu0 %v4135
        %4447 = vmatpush.msra.mxu0 %v4132
        %4448 = vmatpush.msra.mxu0 %v4129
        %4449 = vmatpush.msra.mxu0 %v4126
        %4450 = vmatpush.msra.mxu0 %v4123
        %4451 = vmatpush.msra.mxu0 %v4120
        %4452 = vmatpush.msra.mxu0 %v4117
        %4453 = vmatpush.msra.mxu0 %v4114
        %4454 = vmatpush.msra.mxu0 %v4111
        %4455 = vmatpush.msra.mxu0 %v4108
        %4456 = vmatmul.f32.gmra.mxu0 %v3673
        %v4457 = vpop.f32.mrf.mxu0
        %v4458 = vadd.f32 %v4438, %v4457
        %4459 = vdwg.mxu0
        %4460 = vmatpush.msra.mxu0 %v4201
        %4461 = vmatpush.msra.mxu0 %v4198
        %4462 = vmatpush.msra.mxu0 %v4195
        %4463 = vmatpush.msra.mxu0 %v4192
        %4464 = vmatpush.msra.mxu0 %v4189
        %4465 = vmatpush.msra.mxu0 %v4186
        %4466 = vmatpush.msra.mxu0 %v4183
        %4467 = vmatpush.msra.mxu0 %v4180
        %4468 = vmatpush.msra.mxu0 %v4177
        %4469 = vmatpush.msra.mxu0 %v4174
        %4470 = vmatpush.msra.mxu0 %v4171
        %4471 = vmatpush.msra.mxu0 %v4168
        %4472 = vmatpush.msra.mxu0 %v4165
        %4473 = vmatpush.msra.mxu0 %v4162
        %4474 = vmatpush.msra.mxu0 %v4159
        %4475 = vmatpush.msra.mxu0 %v4156
        %4476 = vmatmul.f32.gmra.mxu0 %v3674
        %v4477 = vpop.f32.mrf.mxu0
        %v4478 = vadd.f32 %v4458, %v4477
        %4479 = vdwg.mxu0
        %4480 = vmatpush.msra.mxu0 %v4249
        %4481 = vmatpush.msra.mxu0 %v4246
        %4482 = vmatpush.msra.mxu0 %v4243
        %4483 = vmatpush.msra.mxu0 %v4240
        %4484 = vmatpush.msra.mxu0 %v4237
        %4485 = vmatpush.msra.mxu0 %v4234
        %4486 = vmatpush.msra.mxu0 %v4231
        %4487 = vmatpush.msra.mxu0 %v4228
        %4488 = vmatpush.msra.mxu0 %v4225
        %4489 = vmatpush.msra.mxu0 %v4222
        %4490 = vmatpush.msra.mxu0 %v4219
        %4491 = vmatpush.msra.mxu0 %v4216
        %4492 = vmatpush.msra.mxu0 %v4213
        %4493 = vmatpush.msra.mxu0 %v4210
        %4494 = vmatpush.msra.mxu0 %v4207
        %4495 = vmatpush.msra.mxu0 %v4204
        %4496 = vmatmul.f32.gmra.mxu0 %v3675
        %v4497 = vpop.f32.mrf.mxu0
        %v4498 = vadd.f32 %v4478, %v4497
        %4499 = vdwg.mxu0
        %4500 = vmatpush.msra.mxu0 %v3722
        %4501 = vmatpush.msra.mxu0 %v3719
        %4502 = vmatpush.msra.mxu0 %v3716
        %4503 = vmatpush.msra.mxu0 %v3713
        %4504 = vmatpush.msra.mxu0 %v3710
        %4505 = vmatpush.msra.mxu0 %v3707
        %4506 = vmatpush.msra.mxu0 %v3704
        %4507 = vmatpush.msra.mxu0 %v3701
        %4508 = vmatpush.msra.mxu0 %v3698
        %4509 = vmatpush.msra.mxu0 %v3695
        %4510 = vmatpush.msra.mxu0 %v3692
        %4511 = vmatpush.msra.mxu0 %v3689
        %4512 = vmatpush.msra.mxu0 %v3686
        %4513 = vmatpush.msra.mxu0 %v3683
        %4514 = vmatpush.msra.mxu0 %v3680
        %4515 = vmatpush.msra.mxu0 %v3677
        %4516 = vmatmul.f32.gmra.mxu0 %v3664
        %v4517 = vpop.f32.mrf.mxu0
        %v4518 = vadd.f32 %v4255, %v4517
        %4519 = vdwg.mxu0
        %4520 = vmatpush.msra.mxu0 %v3770
        %4521 = vmatpush.msra.mxu0 %v3767
        %4522 = vmatpush.msra.mxu0 %v3764
        %4523 = vmatpush.msra.mxu0 %v3761
        %4524 = vmatpush.msra.mxu0 %v3758
        %4525 = vmatpush.msra.mxu0 %v3755
        %4526 = vmatpush.msra.mxu0 %v3752
        %4527 = vmatpush.msra.mxu0 %v3749
        %4528 = vmatpush.msra.mxu0 %v3746
        %4529 = vmatpush.msra.mxu0 %v3743
        %4530 = vmatpush.msra.mxu0 %v3740
        %4531 = vmatpush.msra.mxu0 %v3737
        %4532 = vmatpush.msra.mxu0 %v3734
        %4533 = vmatpush.msra.mxu0 %v3731
        %4534 = vmatpush.msra.mxu0 %v3728
        %4535 = vmatpush.msra.mxu0 %v3725
        %4536 = vmatmul.f32.gmra.mxu0 %v3665
        %v4537 = vpop.f32.mrf.mxu0
        %v4538 = vadd.f32 %v4518, %v4537
        %4539 = vdwg.mxu0
        %4540 = vmatpush.msra.mxu0 %v3818
        %4541 = vmatpush.msra.mxu0 %v3815
        %4542 = vmatpush.msra.mxu0 %v3812
        %4543 = vmatpush.msra.mxu0 %v3809
        %4544 = vmatpush.msra.mxu0 %v3806
        %4545 = vmatpush.msra.mxu0 %v3803
        %4546 = vmatpush.msra.mxu0 %v3800
        %4547 = vmatpush.msra.mxu0 %v3797
        %4548 = vmatpush.msra.mxu0 %v3794
        %4549 = vmatpush.msra.mxu0 %v3791
        %4550 = vmatpush.msra.mxu0 %v3788
        %4551 = vmatpush.msra.mxu0 %v3785
        %4552 = vmatpush.msra.mxu0 %v3782
        %4553 = vmatpush.msra.mxu0 %v3779
        %4554 = vmatpush.msra.mxu0 %v3776
        %4555 = vmatpush.msra.mxu0 %v3773
        %4556 = vmatmul.f32.gmra.mxu0 %v3666
        %v4557 = vpop.f32.mrf.mxu0
        %v4558 = vadd.f32 %v4538, %v4557
        %4559 = vdwg.mxu0
        %4560 = vmatpush.msra.mxu0 %v3866
        %4561 = vmatpush.msra.mxu0 %v3863
        %4562 = vmatpush.msra.mxu0 %v3860
        %4563 = vmatpush.msra.mxu0 %v3857
        %4564 = vmatpush.msra.mxu0 %v3854
        %4565 = vmatpush.msra.mxu0 %v3851
        %4566 = vmatpush.msra.mxu0 %v3848
        %4567 = vmatpush.msra.mxu0 %v3845
        %4568 = vmatpush.msra.mxu0 %v3842
        %4569 = vmatpush.msra.mxu0 %v3839
        %4570 = vmatpush.msra.mxu0 %v3836
        %4571 = vmatpush.msra.mxu0 %v3833
        %4572 = vmatpush.msra.mxu0 %v3830
        %4573 = vmatpush.msra.mxu0 %v3827
        %4574 = vmatpush.msra.mxu0 %v3824
        %4575 = vmatpush.msra.mxu0 %v3821
        %4576 = vmatmul.f32.gmra.mxu0 %v3667
        %v4577 = vpop.f32.mrf.mxu0
        %v4578 = vadd.f32 %v4558, %v4577
        %4579 = vdwg.mxu0
        %4580 = vmatpush.msra.mxu0 %v3914
        %4581 = vmatpush.msra.mxu0 %v3911
        %4582 = vmatpush.msra.mxu0 %v3908
        %4583 = vmatpush.msra.mxu0 %v3905
        %4584 = vmatpush.msra.mxu0 %v3902
        %4585 = vmatpush.msra.mxu0 %v3899
        %4586 = vmatpush.msra.mxu0 %v3896
        %4587 = vmatpush.msra.mxu0 %v3893
        %4588 = vmatpush.msra.mxu0 %v3890
        %4589 = vmatpush.msra.mxu0 %v3887
        %4590 = vmatpush.msra.mxu0 %v3884
        %4591 = vmatpush.msra.mxu0 %v3881
        %4592 = vmatpush.msra.mxu0 %v3878
        %4593 = vmatpush.msra.mxu0 %v3875
        %4594 = vmatpush.msra.mxu0 %v3872
        %4595 = vmatpush.msra.mxu0 %v3869
        %4596 = vmatmul.f32.gmra.mxu0 %v3668
        %v4597 = vpop.f32.mrf.mxu0
        %v4598 = vadd.f32 %v4578, %v4597
        %4599 = vdwg.mxu0
        %4600 = vmatpush.msra.mxu0 %v3962
        %4601 = vmatpush.msra.mxu0 %v3959
        %4602 = vmatpush.msra.mxu0 %v3956
        %4603 = vmatpush.msra.mxu0 %v3953
        %4604 = vmatpush.msra.mxu0 %v3950
        %4605 = vmatpush.msra.mxu0 %v3947
        %4606 = vmatpush.msra.mxu0 %v3944
        %4607 = vmatpush.msra.mxu0 %v3941
        %4608 = vmatpush.msra.mxu0 %v3938
        %4609 = vmatpush.msra.mxu0 %v3935
        %4610 = vmatpush.msra.mxu0 %v3932
        %4611 = vmatpush.msra.mxu0 %v3929
        %4612 = vmatpush.msra.mxu0 %v3926
        %4613 = vmatpush.msra.mxu0 %v3923
        %4614 = vmatpush.msra.mxu0 %v3920
        %4615 = vmatpush.msra.mxu0 %v3917
        %4616 = vmatmul.f32.gmra.mxu0 %v3669
        %v4617 = vpop.f32.mrf.mxu0
        %v4618 = vadd.f32 %v4598, %v4617
        %4619 = vdwg.mxu0
        %4620 = vmatpush.msra.mxu0 %v4010
        %4621 = vmatpush.msra.mxu0 %v4007
        %4622 = vmatpush.msra.mxu0 %v4004
        %4623 = vmatpush.msra.mxu0 %v4001
        %4624 = vmatpush.msra.mxu0 %v3998
        %4625 = vmatpush.msra.mxu0 %v3995
        %4626 = vmatpush.msra.mxu0 %v3992
        %4627 = vmatpush.msra.mxu0 %v3989
        %4628 = vmatpush.msra.mxu0 %v3986
        %4629 = vmatpush.msra.mxu0 %v3983
        %4630 = vmatpush.msra.mxu0 %v3980
        %4631 = vmatpush.msra.mxu0 %v3977
        %4632 = vmatpush.msra.mxu0 %v3974
        %4633 = vmatpush.msra.mxu0 %v3971
        %4634 = vmatpush.msra.mxu0 %v3968
        %4635 = vmatpush.msra.mxu0 %v3965
        %4636 = vmatmul.f32.gmra.mxu0 %v3670
        %v4637 = vpop.f32.mrf.mxu0
        %v4638 = vadd.f32 %v4618, %v4637
        %4639 = vdwg.mxu0
        %4640 = vmatpush.msra.mxu0 %v4058
        %4641 = vmatpush.msra.mxu0 %v4055
        %4642 = vmatpush.msra.mxu0 %v4052
        %4643 = vmatpush.msra.mxu0 %v4049
        %4644 = vmatpush.msra.mxu0 %v4046
        %4645 = vmatpush.msra.mxu0 %v4043
        %4646 = vmatpush.msra.mxu0 %v4040
        %4647 = vmatpush.msra.mxu0 %v4037
        %4648 = vmatpush.msra.mxu0 %v4034
        %4649 = vmatpush.msra.mxu0 %v4031
        %4650 = vmatpush.msra.mxu0 %v4028
        %4651 = vmatpush.msra.mxu0 %v4025
        %4652 = vmatpush.msra.mxu0 %v4022
        %4653 = vmatpush.msra.mxu0 %v4019
        %4654 = vmatpush.msra.mxu0 %v4016
        %4655 = vmatpush.msra.mxu0 %v4013
        %4656 = vmatmul.f32.gmra.mxu0 %v3671
        %v4657 = vpop.f32.mrf.mxu0
        %v4658 = vadd.f32 %v4638, %v4657
        %4659 = vdwg.mxu0
        %4660 = vmatpush.msra.mxu0 %v4106
        %4661 = vmatpush.msra.mxu0 %v4103
        %4662 = vmatpush.msra.mxu0 %v4100
        %4663 = vmatpush.msra.mxu0 %v4097
        %4664 = vmatpush.msra.mxu0 %v4094
        %4665 = vmatpush.msra.mxu0 %v4091
        %4666 = vmatpush.msra.mxu0 %v4088
        %4667 = vmatpush.msra.mxu0 %v4085
        %4668 = vmatpush.msra.mxu0 %v4082
        %4669 = vmatpush.msra.mxu0 %v4079
        %4670 = vmatpush.msra.mxu0 %v4076
        %4671 = vmatpush.msra.mxu0 %v4073
        %4672 = vmatpush.msra.mxu0 %v4070
        %4673 = vmatpush.msra.mxu0 %v4067
        %4674 = vmatpush.msra.mxu0 %v4064
        %4675 = vmatpush.msra.mxu0 %v4061
        %4676 = vmatmul.f32.gmra.mxu0 %v3672
        %v4677 = vpop.f32.mrf.mxu0
        %v4678 = vadd.f32 %v4658, %v4677
        %4679 = vdwg.mxu0
        %4680 = vmatpush.msra.mxu0 %v4154
        %4681 = vmatpush.msra.mxu0 %v4151
        %4682 = vmatpush.msra.mxu0 %v4148
        %4683 = vmatpush.msra.mxu0 %v4145
        %4684 = vmatpush.msra.mxu0 %v4142
        %4685 = vmatpush.msra.mxu0 %v4139
        %4686 = vmatpush.msra.mxu0 %v4136
        %4687 = vmatpush.msra.mxu0 %v4133
        %4688 = vmatpush.msra.mxu0 %v4130
        %4689 = vmatpush.msra.mxu0 %v4127
        %4690 = vmatpush.msra.mxu0 %v4124
        %4691 = vmatpush.msra.mxu0 %v4121
        %4692 = vmatpush.msra.mxu0 %v4118
        %4693 = vmatpush.msra.mxu0 %v4115
        %4694 = vmatpush.msra.mxu0 %v4112
        %4695 = vmatpush.msra.mxu0 %v4109
        %4696 = vmatmul.f32.gmra.mxu0 %v3673
        %v4697 = vpop.f32.mrf.mxu0
        %v4698 = vadd.f32 %v4678, %v4697
        %4699 = vdwg.mxu0
        %4700 = vmatpush.msra.mxu0 %v4202
        %4701 = vmatpush.msra.mxu0 %v4199
        %4702 = vmatpush.msra.mxu0 %v4196
        %4703 = vmatpush.msra.mxu0 %v4193
        %4704 = vmatpush.msra.mxu0 %v4190
        %4705 = vmatpush.msra.mxu0 %v4187
        %4706 = vmatpush.msra.mxu0 %v4184
        %4707 = vmatpush.msra.mxu0 %v4181
        %4708 = vmatpush.msra.mxu0 %v4178
        %4709 = vmatpush.msra.mxu0 %v4175
        %4710 = vmatpush.msra.mxu0 %v4172
        %4711 = vmatpush.msra.mxu0 %v4169
        %4712 = vmatpush.msra.mxu0 %v4166
        %4713 = vmatpush.msra.mxu0 %v4163
        %4714 = vmatpush.msra.mxu0 %v4160
        %4715 = vmatpush.msra.mxu0 %v4157
        %4716 = vmatmul.f32.gmra.mxu0 %v3674
        %v4717 = vpop.f32.mrf.mxu0
        %v4718 = vadd.f32 %v4698, %v4717
        %4719 = vdwg.mxu0
        %4720 = vmatpush.msra.mxu0 %v4250
        %4721 = vmatpush.msra.mxu0 %v4247
        %4722 = vmatpush.msra.mxu0 %v4244
        %4723 = vmatpush.msra.mxu0 %v4241
        %4724 = vmatpush.msra.mxu0 %v4238
        %4725 = vmatpush.msra.mxu0 %v4235
        %4726 = vmatpush.msra.mxu0 %v4232
        %4727 = vmatpush.msra.mxu0 %v4229
        %4728 = vmatpush.msra.mxu0 %v4226
        %4729 = vmatpush.msra.mxu0 %v4223
        %4730 = vmatpush.msra.mxu0 %v4220
        %4731 = vmatpush.msra.mxu0 %v4217
        %4732 = vmatpush.msra.mxu0 %v4214
        %4733 = vmatpush.msra.mxu0 %v4211
        %4734 = vmatpush.msra.mxu0 %v4208
        %4735 = vmatpush.msra.mxu0 %v4205
        %4736 = vmatmul.f32.gmra.mxu0 %v3675
        %v4737 = vpop.f32.mrf.mxu0
        %v4738 = vadd.f32 %v4718, %v4737
        %4739 = vdwg.mxu0
        %4740 = vmatpush.msra.mxu0 %v3723
        %4741 = vmatpush.msra.mxu0 %v3720
        %4742 = vmatpush.msra.mxu0 %v3717
        %4743 = vmatpush.msra.mxu0 %v3714
        %4744 = vmatpush.msra.mxu0 %v3711
        %4745 = vmatpush.msra.mxu0 %v3708
        %4746 = vmatpush.msra.mxu0 %v3705
        %4747 = vmatpush.msra.mxu0 %v3702
        %4748 = vmatpush.msra.mxu0 %v3699
        %4749 = vmatpush.msra.mxu0 %v3696
        %4750 = vmatpush.msra.mxu0 %v3693
        %4751 = vmatpush.msra.mxu0 %v3690
        %4752 = vmatpush.msra.mxu0 %v3687
        %4753 = vmatpush.msra.mxu0 %v3684
        %4754 = vmatpush.msra.mxu0 %v3681
        %4755 = vmatpush.msra.mxu0 %v3678
        %4756 = vmatmul.f32.gmra.mxu0 %v3664
        %v4757 = vpop.f32.mrf.mxu0
        %v4758 = vadd.f32 %v4256, %v4757
        %4759 = vdwg.mxu0
        %4760 = vmatpush.msra.mxu0 %v3771
        %4761 = vmatpush.msra.mxu0 %v3768
        %4762 = vmatpush.msra.mxu0 %v3765
        %4763 = vmatpush.msra.mxu0 %v3762
        %4764 = vmatpush.msra.mxu0 %v3759
        %4765 = vmatpush.msra.mxu0 %v3756
        %4766 = vmatpush.msra.mxu0 %v3753
        %4767 = vmatpush.msra.mxu0 %v3750
        %4768 = vmatpush.msra.mxu0 %v3747
        %4769 = vmatpush.msra.mxu0 %v3744
        %4770 = vmatpush.msra.mxu0 %v3741
        %4771 = vmatpush.msra.mxu0 %v3738
        %4772 = vmatpush.msra.mxu0 %v3735
        %4773 = vmatpush.msra.mxu0 %v3732
        %4774 = vmatpush.msra.mxu0 %v3729
        %4775 = vmatpush.msra.mxu0 %v3726
        %4776 = vmatmul.f32.gmra.mxu0 %v3665
        %v4777 = vpop.f32.mrf.mxu0
        %v4778 = vadd.f32 %v4758, %v4777
        %4779 = vdwg.mxu0
        %4780 = vmatpush.msra.mxu0 %v3819
        %4781 = vmatpush.msra.mxu0 %v3816
        %4782 = vmatpush.msra.mxu0 %v3813
        %4783 = vmatpush.msra.mxu0 %v3810
        %4784 = vmatpush.msra.mxu0 %v3807
        %4785 = vmatpush.msra.mxu0 %v3804
        %4786 = vmatpush.msra.mxu0 %v3801
        %4787 = vmatpush.msra.mxu0 %v3798
        %4788 = vmatpush.msra.mxu0 %v3795
        %4789 = vmatpush.msra.mxu0 %v3792
        %4790 = vmatpush.msra.mxu0 %v3789
        %4791 = vmatpush.msra.mxu0 %v3786
        %4792 = vmatpush.msra.mxu0 %v3783
        %4793 = vmatpush.msra.mxu0 %v3780
        %4794 = vmatpush.msra.mxu0 %v3777
        %4795 = vmatpush.msra.mxu0 %v3774
        %4796 = vmatmul.f32.gmra.mxu0 %v3666
        %v4797 = vpop.f32.mrf.mxu0
        %v4798 = vadd.f32 %v4778, %v4797
        %4799 = vdwg.mxu0
        %4800 = vmatpush.msra.mxu0 %v3867
        %4801 = vmatpush.msra.mxu0 %v3864
        %4802 = vmatpush.msra.mxu0 %v3861
        %4803 = vmatpush.msra.mxu0 %v3858
        %4804 = vmatpush.msra.mxu0 %v3855
        %4805 = vmatpush.msra.mxu0 %v3852
        %4806 = vmatpush.msra.mxu0 %v3849
        %4807 = vmatpush.msra.mxu0 %v3846
        %4808 = vmatpush.msra.mxu0 %v3843
        %4809 = vmatpush.msra.mxu0 %v3840
        %4810 = vmatpush.msra.mxu0 %v3837
        %4811 = vmatpush.msra.mxu0 %v3834
        %4812 = vmatpush.msra.mxu0 %v3831
        %4813 = vmatpush.msra.mxu0 %v3828
        %4814 = vmatpush.msra.mxu0 %v3825
        %4815 = vmatpush.msra.mxu0 %v3822
        %4816 = vmatmul.f32.gmra.mxu0 %v3667
        %v4817 = vpop.f32.mrf.mxu0
        %v4818 = vadd.f32 %v4798, %v4817
        %4819 = vdwg.mxu0
        %4820 = vmatpush.msra.mxu0 %v3915
        %4821 = vmatpush.msra.mxu0 %v3912
        %4822 = vmatpush.msra.mxu0 %v3909
        %4823 = vmatpush.msra.mxu0 %v3906
        %4824 = vmatpush.msra.mxu0 %v3903
        %4825 = vmatpush.msra.mxu0 %v3900
        %4826 = vmatpush.msra.mxu0 %v3897
        %4827 = vmatpush.msra.mxu0 %v3894
        %4828 = vmatpush.msra.mxu0 %v3891
        %4829 = vmatpush.msra.mxu0 %v3888
        %4830 = vmatpush.msra.mxu0 %v3885
        %4831 = vmatpush.msra.mxu0 %v3882
        %4832 = vmatpush.msra.mxu0 %v3879
        %4833 = vmatpush.msra.mxu0 %v3876
        %4834 = vmatpush.msra.mxu0 %v3873
        %4835 = vmatpush.msra.mxu0 %v3870
        %4836 = vmatmul.f32.gmra.mxu0 %v3668
        %v4837 = vpop.f32.mrf.mxu0
        %v4838 = vadd.f32 %v4818, %v4837
        %4839 = vdwg.mxu0
        %4840 = vmatpush.msra.mxu0 %v3963
        %4841 = vmatpush.msra.mxu0 %v3960
        %4842 = vmatpush.msra.mxu0 %v3957
        %4843 = vmatpush.msra.mxu0 %v3954
        %4844 = vmatpush.msra.mxu0 %v3951
        %4845 = vmatpush.msra.mxu0 %v3948
        %4846 = vmatpush.msra.mxu0 %v3945
        %4847 = vmatpush.msra.mxu0 %v3942
        %4848 = vmatpush.msra.mxu0 %v3939
        %4849 = vmatpush.msra.mxu0 %v3936
        %4850 = vmatpush.msra.mxu0 %v3933
        %4851 = vmatpush.msra.mxu0 %v3930
        %4852 = vmatpush.msra.mxu0 %v3927
        %4853 = vmatpush.msra.mxu0 %v3924
        %4854 = vmatpush.msra.mxu0 %v3921
        %4855 = vmatpush.msra.mxu0 %v3918
        %4856 = vmatmul.f32.gmra.mxu0 %v3669
        %v4857 = vpop.f32.mrf.mxu0
        %v4858 = vadd.f32 %v4838, %v4857
        %4859 = vdwg.mxu0
        %4860 = vmatpush.msra.mxu0 %v4011
        %4861 = vmatpush.msra.mxu0 %v4008
        %4862 = vmatpush.msra.mxu0 %v4005
        %4863 = vmatpush.msra.mxu0 %v4002
        %4864 = vmatpush.msra.mxu0 %v3999
        %4865 = vmatpush.msra.mxu0 %v3996
        %4866 = vmatpush.msra.mxu0 %v3993
        %4867 = vmatpush.msra.mxu0 %v3990
        %4868 = vmatpush.msra.mxu0 %v3987
        %4869 = vmatpush.msra.mxu0 %v3984
        %4870 = vmatpush.msra.mxu0 %v3981
        %4871 = vmatpush.msra.mxu0 %v3978
        %4872 = vmatpush.msra.mxu0 %v3975
        %4873 = vmatpush.msra.mxu0 %v3972
        %4874 = vmatpush.msra.mxu0 %v3969
        %4875 = vmatpush.msra.mxu0 %v3966
        %4876 = vmatmul.f32.gmra.mxu0 %v3670
        %v4877 = vpop.f32.mrf.mxu0
        %v4878 = vadd.f32 %v4858, %v4877
        %4879 = vdwg.mxu0
        %4880 = vmatpush.msra.mxu0 %v4059
        %4881 = vmatpush.msra.mxu0 %v4056
        %4882 = vmatpush.msra.mxu0 %v4053
        %4883 = vmatpush.msra.mxu0 %v4050
        %4884 = vmatpush.msra.mxu0 %v4047
        %4885 = vmatpush.msra.mxu0 %v4044
        %4886 = vmatpush.msra.mxu0 %v4041
        %4887 = vmatpush.msra.mxu0 %v4038
        %4888 = vmatpush.msra.mxu0 %v4035
        %4889 = vmatpush.msra.mxu0 %v4032
        %4890 = vmatpush.msra.mxu0 %v4029
        %4891 = vmatpush.msra.mxu0 %v4026
        %4892 = vmatpush.msra.mxu0 %v4023
        %4893 = vmatpush.msra.mxu0 %v4020
        %4894 = vmatpush.msra.mxu0 %v4017
        %4895 = vmatpush.msra.mxu0 %v4014
        %4896 = vmatmul.f32.gmra.mxu0 %v3671
        %v4897 = vpop.f32.mrf.mxu0
        %v4898 = vadd.f32 %v4878, %v4897
        %4899 = vdwg.mxu0
        %4900 = vmatpush.msra.mxu0 %v4107
        %4901 = vmatpush.msra.mxu0 %v4104
        %4902 = vmatpush.msra.mxu0 %v4101
        %4903 = vmatpush.msra.mxu0 %v4098
        %4904 = vmatpush.msra.mxu0 %v4095
        %4905 = vmatpush.msra.mxu0 %v4092
        %4906 = vmatpush.msra.mxu0 %v4089
        %4907 = vmatpush.msra.mxu0 %v4086
        %4908 = vmatpush.msra.mxu0 %v4083
        %4909 = vmatpush.msra.mxu0 %v4080
        %4910 = vmatpush.msra.mxu0 %v4077
        %4911 = vmatpush.msra.mxu0 %v4074
        %4912 = vmatpush.msra.mxu0 %v4071
        %4913 = vmatpush.msra.mxu0 %v4068
        %4914 = vmatpush.msra.mxu0 %v4065
        %4915 = vmatpush.msra.mxu0 %v4062
        %4916 = vmatmul.f32.gmra.mxu0 %v3672
        %v4917 = vpop.f32.mrf.mxu0
        %v4918 = vadd.f32 %v4898, %v4917
        %4919 = vdwg.mxu0
        %4920 = vmatpush.msra.mxu0 %v4155
        %4921 = vmatpush.msra.mxu0 %v4152
        %4922 = vmatpush.msra.mxu0 %v4149
        %4923 = vmatpush.msra.mxu0 %v4146
        %4924 = vmatpush.msra.mxu0 %v4143
        %4925 = vmatpush.msra.mxu0 %v4140
        %4926 = vmatpush.msra.mxu0 %v4137
        %4927 = vmatpush.msra.mxu0 %v4134
        %4928 = vmatpush.msra.mxu0 %v4131
        %4929 = vmatpush.msra.mxu0 %v4128
        %4930 = vmatpush.msra.mxu0 %v4125
        %4931 = vmatpush.msra.mxu0 %v4122
        %4932 = vmatpush.msra.mxu0 %v4119
        %4933 = vmatpush.msra.mxu0 %v4116
        %4934 = vmatpush.msra.mxu0 %v4113
        %4935 = vmatpush.msra.mxu0 %v4110
        %4936 = vmatmul.f32.gmra.mxu0 %v3673
        %v4937 = vpop.f32.mrf.mxu0
        %v4938 = vadd.f32 %v4918, %v4937
        %4939 = vdwg.mxu0
        %4940 = vmatpush.msra.mxu0 %v4203
        %4941 = vmatpush.msra.mxu0 %v4200
        %4942 = vmatpush.msra.mxu0 %v4197
        %4943 = vmatpush.msra.mxu0 %v4194
        %4944 = vmatpush.msra.mxu0 %v4191
        %4945 = vmatpush.msra.mxu0 %v4188
        %4946 = vmatpush.msra.mxu0 %v4185
        %4947 = vmatpush.msra.mxu0 %v4182
        %4948 = vmatpush.msra.mxu0 %v4179
        %4949 = vmatpush.msra.mxu0 %v4176
        %4950 = vmatpush.msra.mxu0 %v4173
        %4951 = vmatpush.msra.mxu0 %v4170
        %4952 = vmatpush.msra.mxu0 %v4167
        %4953 = vmatpush.msra.mxu0 %v4164
        %4954 = vmatpush.msra.mxu0 %v4161
        %4955 = vmatpush.msra.mxu0 %v4158
        %4956 = vmatmul.f32.gmra.mxu0 %v3674
        %v4957 = vpop.f32.mrf.mxu0
        %v4958 = vadd.f32 %v4938, %v4957
        %4959 = vdwg.mxu0
        %4960 = vmatpush.msra.mxu0 %v4251
        %4961 = vmatpush.msra.mxu0 %v4248
        %4962 = vmatpush.msra.mxu0 %v4245
        %4963 = vmatpush.msra.mxu0 %v4242
        %4964 = vmatpush.msra.mxu0 %v4239
        %4965 = vmatpush.msra.mxu0 %v4236
        %4966 = vmatpush.msra.mxu0 %v4233
        %4967 = vmatpush.msra.mxu0 %v4230
        %4968 = vmatpush.msra.mxu0 %v4227
        %4969 = vmatpush.msra.mxu0 %v4224
        %4970 = vmatpush.msra.mxu0 %v4221
        %4971 = vmatpush.msra.mxu0 %v4218
        %4972 = vmatpush.msra.mxu0 %v4215
        %4973 = vmatpush.msra.mxu0 %v4212
        %4974 = vmatpush.msra.mxu0 %v4209
        %4975 = vmatpush.msra.mxu0 %v4206
        %4976 = vmatmul.f32.gmra.mxu0 %v3675
        %v4977 = vpop.f32.mrf.mxu0
        %v4978 = vadd.f32 %v4958, %v4977
        %4979 = vdwg.mxu0
        %v4980 = vadd.f32 %v2285, %v4498
        %v4981 = vadd.f32 %v2286, %v4738
        %v4982 = vadd.f32 %v2287, %v4978
        %4983 = vst [vmem:[%s423] sm:$0xff] %v4980
        %4984 = vst [vmem:[%s423 + $0x8] sm:$0xff] %v4981
        %4985 = vst [vmem:[%s423 + $0x10] sm:$0xff] %v4982
        %s4986 = sand.u32 %s292, 1
        %s4987 = scalar_lea.sflag [#allocation4], %s4986
        %s4988 = sand.u32 %s292, 1
        %s4989 = smul.addr %s4988, 24
        %s4990 = scalar_lea.vmem [#allocation5], %s4989
        // Predicated region
        $region73: #{block_forward.1} parent=67 // pred_check
          %p4991 = pneg %p302
        $region74: #{block_forward.1} parent=67 // pred_check_branch
          %4993 = sbr.rel (%p4991) target = $region76
        $region75: #{block_forward.1} parent=67 // pred_region
          %4995 = vsyncadd %s4987, 0
          %s4996 = smul.addr %s27, 3
          %s4997 = smul.addr %s4996, 8
          %s4998 = scalar_lea.hbm %s12, %s4997
          %s5000 = sshll.u32 %s4990, 4
          %s5001 = int_to_ptr.vmem [resolvable:$true] %s5000
          %s5002 = sshll.u32 %s4998, 4
          %s5003 = int_to_ptr.hbm [resolvable:$true] %s5002
          %5005 = dma.vmem_to_hbm [thread:$0]  %s5001, 384, %s5003, %s4987
        $region76: #{block_forward.1} parent=67 // pred_fallthru
          _
      $region68: #{block_forward.1} parent=5 // pred_fallthru
        _
      %p5006 = scmp.le.s32.totalorder 2, %s22
      // Predicated region
      $region77: #{block_forward.1} parent=5 // pred_check
        %p5007 = pneg %p5006
      $region78: #{block_forward.1} parent=5 // pred_check_branch
        %5009 = sbr.rel (%p5007) target = $region80
      $region79: #{block_forward.1} parent=5 // pred_region
        %s5010 = ssub.s32 %s22, 2
        // Predicated region
        $region81: #{block_forward.1} parent=79 // pred_check
          %p5011 = pneg %p308
        $region82: #{block_forward.1} parent=79 // pred_check_branch
          %5013 = sbr.rel (%p5011) target = $region84
        $region83: #{block_forward.1} parent=79 // pred_region
          %s5014 = sand.u32 %s293, 1
          %s5015 = scalar_lea.sflag [#allocation4], %s5014
          %s5016 = sand.u32 %s293, 1
          %s5017 = smul.addr %s5016, 24
          %s5018 = scalar_lea.vmem [#allocation5], %s5017
          %5020 = dma.done %s5015, 384
        $region84: #{block_forward.1} parent=79 // pred_fallthru
          _
      $region80: #{block_forward.1} parent=5 // pred_fallthru
        _
    $region6: #{block_forward.1} parent=1 // loop_footer
      %s26 = sadd.s32 1, %s22
    $region7: #{block_forward.1} parent=1 // loop_footer_branch
      %21 = sbr.rel target = $region3
    $region8: #{block_forward.1} parent=1 // loop_exit
      _
    %5021 = vsyncpa [#allocation3], 1
    %s5022 = scalar_lea.sflag [#allocation3], 1
    %5023 = vsyncpa %s5022, 1
    %5024 = vsyncpa [#allocation4], 1
    %s5025 = scalar_lea.sflag [#allocation4], 1
    %5026 = vsyncpa %s5025, 1

</llo_original>
